<compile_context>
chip_gen: v7x
topology: tpu7x:2x2x1
jax: 0.10.0
libtpu: 0.0.40
codegen_flags: <defaults>
</compile_context>

<pallas_src>
import functools

import jax
import jax.numpy as jnp
from jax.experimental import pallas as pl
from jax.experimental.pallas import tpu as pltpu

LANE = 128        # vreg lane width
SUB = 8           # f32 vreg sublane count
MAX_CHUNKS = 32   # max (8,128) chunks per grid step -> 32768 voxels / ~1.7 MiB
NC = 2            # parallel accumulator slabs (maps to both TensorCores on v7x)
N_SWEEPS = 5      # cyclic Jacobi sweeps; 3x3 converges below f32 eps by ~5


def _jacobi_rotate_vals(A, p, q):
    """One vectorized Jacobi rotation annihilating A[p][q] (eigenvalues only).

    Single-divide form:
      t = sign(aqq-app) * 2*apq / (|aqq-app| + sqrt((aqq-app)^2 + 4*apq^2)).
    The divide uses the EUP approximate reciprocal (VALU slot is the bottleneck).
    """
    app, aqq, apq = A[p][p], A[q][q], A[p][q]
    diff = aqq - app
    num = (2.0 * apq) * jnp.where(diff >= 0.0, 1.0, -1.0)
    den = jnp.abs(diff) + jnp.sqrt(diff * diff + 4.0 * (apq * apq))
    # den == 0  =>  apq == 0  =>  num == 0  =>  t == 0 (padded zero voxels too)
    safe_den = jnp.where(den == 0.0, 1.0, den)
    t = num * pl.reciprocal(safe_den, approx=True)
    c = jax.lax.rsqrt(1.0 + t * t)
    s = t * c

    r = 3 - p - q  # the remaining index
    arp, arq = A[r][p], A[r][q]

    newA = [[A[i][j] for j in range(3)] for i in range(3)]
    tapq = t * apq
    newA[p][p] = app - tapq
    newA[q][q] = aqq + tapq
    zero = jnp.zeros_like(apq)
    newA[p][q] = zero
    newA[q][p] = zero
    nrp = c * arp - s * arq
    nrq = s * arp + c * arq
    newA[r][p] = nrp
    newA[p][r] = nrp
    newA[r][q] = nrq
    newA[q][r] = nrq
    return newA


def _eigvals3(a00, a01, a02, a11, a12, a22):
    """Vectorized eigenvalues (ascending) of a symmetric 3x3 matrix."""
    A = [[a00, a01, a02], [a01, a11, a12], [a02, a12, a22]]
    for _ in range(N_SWEEPS):
        for (p, q) in ((0, 1), (0, 2), (1, 2)):
            A = _jacobi_rotate_vals(A, p, q)
    l0, l1, l2 = A[0][0], A[1][1], A[2][2]
    s0 = jnp.minimum(jnp.minimum(l0, l1), l2)
    s2 = jnp.maximum(jnp.maximum(l0, l1), l2)
    s1 = (l0 + l1 + l2) - s0 - s2
    return s0, s1, s2


def _principal_eigvec(a00, a01, a02, a11, a12, a22, s0, s1):
    """Unnormalized eigenvector of the largest eigenvalue + its squared norm.

    Columns of M = (A - s0 I)(A - s1 I) are all parallel to the eigenvector of
    the remaining (largest) eigenvalue; pick the largest-norm column."""
    b00, b11, b22 = a00 - s0, a11 - s0, a22 - s0
    c00, c11, c22 = a00 - s1, a11 - s1, a22 - s1
    p01 = a01 * a01
    p02 = a02 * a02
    p12 = a12 * a12
    # M is symmetric; 6 unique entries.
    m00 = b00 * c00 + p01 + p02
    m11 = p01 + b11 * c11 + p12
    m22 = p02 + p12 + b22 * c22
    m01 = b00 * a01 + a01 * c11 + a02 * a12
    m02 = b00 * a02 + a01 * a12 + a02 * c22
    m12 = a01 * a02 + b11 * a12 + a12 * c22
    # Column squared norms (col j of M).
    q00, q11, q22 = m00 * m00, m11 * m11, m22 * m22
    q01, q02, q12 = m01 * m01, m02 * m02, m12 * m12
    n0 = q00 + q01 + q02
    n1 = q01 + q11 + q12
    n2 = q02 + q12 + q22
    use0 = n0 >= n1
    v0 = jnp.where(use0, m00, m01)
    v1 = jnp.where(use0, m01, m11)
    v2 = jnp.where(use0, m02, m12)
    nb = jnp.where(use0, n0, n1)
    use2 = n2 > nb
    v0 = jnp.where(use2, m02, v0)
    v1 = jnp.where(use2, m12, v1)
    v2 = jnp.where(use2, m22, v2)
    nb = jnp.where(use2, n2, nb)
    return (v0, v1, v2), nb


def av_loss_kernel(n_chunks, x_ref, y_ref, m_ref, oval_ref, odot_ref, ocnt_ref):
    # Grid = (slab/core, batch, tile).  Output block depends only on axis 0, so
    # it stays resident across (batch, tile) and we accumulate directly into it.
    b = pl.program_id(1)
    t = pl.program_id(2)

    @pl.when(jnp.logical_and(b == 0, t == 0))
    def _():
        oval_ref[...] = jnp.zeros_like(oval_ref)
        odot_ref[...] = jnp.zeros_like(odot_ref)
        ocnt_ref[...] = jnp.zeros_like(ocnt_ref)

    def body(j, carry):
        acc_val, acc_dot, acc_cnt = carry
        msk = m_ref[0, j] > 0.0                             # (8,128) bool
        xs = [x_ref[i, j] for i in range(6)]
        ys = [y_ref[i, j] for i in range(6)]

        lx0, lx1, lx2 = _eigvals3(*xs)
        ly0, ly1, ly2 = _eigvals3(*ys)
        vx, nx = _principal_eigvec(*xs, lx0, lx1)
        vy, ny = _principal_eigvec(*ys, ly0, ly1)

        dval = (jnp.abs(lx0 - ly0) + jnp.abs(lx1 - ly1) + jnp.abs(lx2 - ly2))
        dot = vx[0] * vy[0] + vx[1] * vy[1] + vx[2] * vy[2]
        # Separate rsqrts (EUP) keep the dynamic range wide; tiny guard handles
        # the all-zero padded voxels (their contribution is masked anyway).
        inv = (jax.lax.rsqrt(jnp.maximum(nx, 1e-30)) *
               jax.lax.rsqrt(jnp.maximum(ny, 1e-30)))
        absdot = jnp.abs(dot) * inv

        return (acc_val + jnp.where(msk, dval, 0.0),
                acc_dot + jnp.where(msk, absdot, 0.0),
                acc_cnt + jnp.where(msk, 1.0, 0.0))

    zeros = jnp.zeros((SUB, LANE), jnp.float32)
    acc_val, acc_dot, acc_cnt = jax.lax.fori_loop(
        0, n_chunks, body, (zeros, zeros, zeros))

    oval_ref[0] += acc_val
    odot_ref[0] += acc_dot
    ocnt_ref[0] += acc_cnt


@jax.jit
def av_loss(input_data, target, mask):
    """input_data/target: (B, 6, H, W, D); mask: (B, 1, 1, H, W, D)."""
    B, C, H, W, D = input_data.shape
    assert C == 6
    HWD = H * W * D
    chunk_elems = SUB * LANE

    # Adaptive tiling: only pad to the tile granularity actually needed.
    n_chunks_needed = -(-HWD // chunk_elems)
    chunks_per_tile = min(MAX_CHUNKS, n_chunks_needed)
    tiles_needed = -(-n_chunks_needed // chunks_per_tile)
    nc = NC if tiles_needed >= NC else 1
    tiles_per_core = -(-tiles_needed // nc)
    NCH = tiles_per_core * nc * chunks_per_tile   # (8,128) chunks per batch item
    Npad = NCH * chunk_elems

    def pack(x):
        x = x.astype(jnp.float32).reshape(B, 6, HWD)
        x = jnp.pad(x, ((0, 0), (0, 0), (0, Npad - HWD)))
        return x.reshape(B * 6, NCH, SUB, LANE)

    xp = pack(input_data)
    yp = pack(target)
    m = (mask[:, 0, 0].reshape(B, HWD) == 1).astype(jnp.float32)
    mp = jnp.pad(m, ((0, 0), (0, Npad - HWD))).reshape(B, NCH, SUB, LANE)

    kernel = functools.partial(av_loss_kernel, chunks_per_tile)
    out_val, out_dot, out_cnt = pl.pallas_call(
        kernel,
        out_shape=(jax.ShapeDtypeStruct((nc, SUB, LANE), jnp.float32),
                   jax.ShapeDtypeStruct((nc, SUB, LANE), jnp.float32),
                   jax.ShapeDtypeStruct((nc, SUB, LANE), jnp.float32)),
        grid_spec=pltpu.PrefetchScalarGridSpec(
            num_scalar_prefetch=0,
            grid=(nc, B, tiles_per_core),
            in_specs=[
                pl.BlockSpec((6, chunks_per_tile, SUB, LANE),
                             lambda c, b, t: (b, c * tiles_per_core + t, 0, 0)),
                pl.BlockSpec((6, chunks_per_tile, SUB, LANE),
                             lambda c, b, t: (b, c * tiles_per_core + t, 0, 0)),
                pl.BlockSpec((1, chunks_per_tile, SUB, LANE),
                             lambda c, b, t: (b, c * tiles_per_core + t, 0, 0)),
            ],
            out_specs=(
                pl.BlockSpec((1, SUB, LANE), lambda c, b, t: (c, 0, 0)),
                pl.BlockSpec((1, SUB, LANE), lambda c, b, t: (c, 0, 0)),
                pl.BlockSpec((1, SUB, LANE), lambda c, b, t: (c, 0, 0)),
            ),
        ),
        compiler_params=pltpu.CompilerParams(
            dimension_semantics=("parallel", "arbitrary", "arbitrary")),
    )(xp, yp, mp)

    count = jnp.sum(out_cnt)
    # Guard only changes the degenerate all-masked-out case (torch would NaN).
    safe_count = jnp.maximum(count, 1.0)
    val_loss = jnp.sum(out_val) / (3.0 * safe_count)
    vec_loss = 1.0 - jnp.sum(out_dot) / safe_count
    return val_loss, vec_loss


def reference(input_data, target, mask):
    """Pure-JAX reference mirroring the PyTorch forward (uses jnp.linalg.eigh)."""
    def tm(t):
        c = [t[:, i] for i in range(6)]
        row0 = jnp.stack([c[0], c[1], c[2]], axis=-1)
        row1 = jnp.stack([c[1], c[3], c[4]], axis=-1)
        row2 = jnp.stack([c[2], c[4], c[5]], axis=-1)
        return jnp.stack([row0, row1, row2], axis=-2)  # (B,H,W,D,3,3)

    Ai = tm(input_data.astype(jnp.float32))
    At = tm(target.astype(jnp.float32))
    msk = mask[:, 0, 0] == 1
    Ai = Ai[msk]
    At = At[msk]
    wi, vi = jnp.linalg.eigh(Ai)
    wt, vt = jnp.linalg.eigh(At)
    val_loss = jnp.mean(jnp.abs(wi - wt))
    vec_loss = 1.0 - jnp.mean(jnp.abs(jnp.sum(vi[:, :, 2] * vt[:, :, 2], axis=1)))
    return val_loss, vec_loss


if __name__ == "__main__":
    key = jax.random.PRNGKey(0)
    k1, k2, k3 = jax.random.split(key, 3)
    B, H, W, D = 2, 8, 8, 16
    input_data = jax.random.normal(k1, (B, 6, H, W, D), dtype=jnp.float32)
    target = jax.random.normal(k2, (B, 6, H, W, D), dtype=jnp.float32)
    mask = (jax.random.uniform(k3, (B, 1, 1, H, W, D)) < 0.7).astype(jnp.int32)

    # NOTE: principal-eigenvector comparison is only well-defined away from a
    # degenerate largest eigenvalue (same caveat applies to torch.symeig).
    val_loss, vec_loss = av_loss(input_data, target, mask)
    jax.block_until_ready((val_loss, vec_loss))

    ref_val, ref_vec = reference(input_data, target, mask)
    assert abs(float(val_loss) - float(ref_val)) < 2e-3, (val_loss, ref_val)
    assert abs(float(vec_loss) - float(ref_vec)) < 2e-3, (vec_loss, ref_vec)

    print("KERNEL_OK")
</pallas_src>

<mosaic_0001>
module attributes {stable_mosaic.version = 11 : i64} {
  func.func @av_loss_kernel(%arg0: i32, %arg1: i32, %arg2: i32, %arg3: memref<6x1x8x128xf32, #tpu.memory_space<vmem>>, %arg4: memref<6x1x8x128xf32, #tpu.memory_space<vmem>>, %arg5: memref<1x1x8x128xf32, #tpu.memory_space<vmem>>, %arg6: memref<1x8x128xf32, #tpu.memory_space<vmem>>, %arg7: memref<1x8x128xf32, #tpu.memory_space<vmem>>, %arg8: memref<1x8x128xf32, #tpu.memory_space<vmem>>) attributes {dimension_semantics = [#tpu.dimension_semantics<parallel>, #tpu.dimension_semantics<arbitrary>, #tpu.dimension_semantics<arbitrary>], iteration_bounds = array<i64: 1, 2, 1>, scalar_prefetch = 0 : i64, scratch_operands = 0 : i64, tpu.core_type = #tpu.core_type<tc>, window_params = [{transform_indices = @transform_0, window_bounds = array<i64: 6, 1, 8, 128>}, {transform_indices = @transform_1, window_bounds = array<i64: 6, 1, 8, 128>}, {transform_indices = @transform_2, window_bounds = array<i64: 1, 1, 8, 128>}, {transform_indices = @transform_3, window_bounds = array<i64: 1, 8, 128>}, {transform_indices = @transform_4, window_bounds = array<i64: 1, 8, 128>}, {transform_indices = @transform_5, window_bounds = array<i64: 1, 8, 128>}]} {
    %c0_i32 = arith.constant 0 : i32
    %0 = arith.cmpi eq, %arg1, %c0_i32 : i32
    %c0_i32_0 = arith.constant 0 : i32
    %1 = arith.cmpi eq, %arg2, %c0_i32_0 : i32
    %2 = arith.andi %0, %1 : i1
    %3 = arith.extui %2 : i1 to i32
    %c0_i32_1 = arith.constant 0 : i32
    %4 = arith.cmpi ne, %3, %c0_i32_1 : i32
    scf.if %4 {
      %cst_325 = arith.constant 0.000000e+00 : f32
      %1331 = vector.broadcast %cst_325 : f32 to vector<1x8x128xf32>
      %c0_326 = arith.constant 0 : index
      %c0_327 = arith.constant 0 : index
      %c0_328 = arith.constant 0 : index
      %1332 = vector.load %arg6[%c0_326, %c0_327, %c0_328] : memref<1x8x128xf32, #tpu.memory_space<vmem>>, vector<1x8x128xf32>
      tpu.vector_store %arg6[%c0_326, %c0_327, %c0_328], %1331 {strides = array<i32>} : memref<1x8x128xf32, #tpu.memory_space<vmem>>, vector<1x8x128xf32>,
      %cst_329 = arith.constant 0.000000e+00 : f32
      %1333 = vector.broadcast %cst_329 : f32 to vector<1x8x128xf32>
      %c0_330 = arith.constant 0 : index
      %c0_331 = arith.constant 0 : index
      %c0_332 = arith.constant 0 : index
      %1334 = vector.load %arg7[%c0_330, %c0_331, %c0_332] : memref<1x8x128xf32, #tpu.memory_space<vmem>>, vector<1x8x128xf32>
      tpu.vector_store %arg7[%c0_330, %c0_331, %c0_332], %1333 {strides = array<i32>} : memref<1x8x128xf32, #tpu.memory_space<vmem>>, vector<1x8x128xf32>,
      %cst_333 = arith.constant 0.000000e+00 : f32
      %1335 = vector.broadcast %cst_333 : f32 to vector<1x8x128xf32>
      %c0_334 = arith.constant 0 : index
      %c0_335 = arith.constant 0 : index
      %c0_336 = arith.constant 0 : index
      %1336 = vector.load %arg8[%c0_334, %c0_335, %c0_336] : memref<1x8x128xf32, #tpu.memory_space<vmem>>, vector<1x8x128xf32>
      tpu.vector_store %arg8[%c0_334, %c0_335, %c0_336], %1335 {strides = array<i32>} : memref<1x8x128xf32, #tpu.memory_space<vmem>>, vector<1x8x128xf32>,
    } else {
    }
    %cst = arith.constant 0.000000e+00 : f32
    %5 = vector.broadcast %cst : f32 to vector<8x128xf32>
    %c0_i32_2 = arith.constant 0 : i32
    %c0 = arith.constant 0 : index
    %6 = arith.index_cast %c0_i32_2 : i32 to index
    %c0_3 = arith.constant 0 : index
    %c0_4 = arith.constant 0 : index
    %7 = vector.load %arg5[%c0, %6, %c0_3, %c0_4] : memref<1x1x8x128xf32, #tpu.memory_space<vmem>>, vector<1x1x8x128xf32>
    %8 = vector.shape_cast %7 : vector<1x1x8x128xf32> to vector<8x128xf32>
    %cst_5 = arith.constant 0.000000e+00 : f32
    %9 = vector.broadcast %cst_5 : f32 to vector<8x128xf32>
    %10 = arith.cmpf ogt, %8, %9 : vector<8x128xf32>
    %c0_6 = arith.constant 0 : index
    %11 = arith.index_cast %c0_i32_2 : i32 to index
    %c0_7 = arith.constant 0 : index
    %c0_8 = arith.constant 0 : index
    %12 = vector.load %arg3[%c0_6, %11, %c0_7, %c0_8] : memref<6x1x8x128xf32, #tpu.memory_space<vmem>>, vector<1x1x8x128xf32>
    %13 = vector.shape_cast %12 : vector<1x1x8x128xf32> to vector<8x128xf32>
    %c1 = arith.constant 1 : index
    %14 = arith.index_cast %c0_i32_2 : i32 to index
    %c0_9 = arith.constant 0 : index
    %c0_10 = arith.constant 0 : index
    %15 = vector.load %arg3[%c1, %14, %c0_9, %c0_10] : memref<6x1x8x128xf32, #tpu.memory_space<vmem>>, vector<1x1x8x128xf32>
    %16 = vector.shape_cast %15 : vector<1x1x8x128xf32> to vector<8x128xf32>
    %c2 = arith.constant 2 : index
    %17 = arith.index_cast %c0_i32_2 : i32 to index
    %c0_11 = arith.constant 0 : index
    %c0_12 = arith.constant 0 : index
    %18 = vector.load %arg3[%c2, %17, %c0_11, %c0_12] : memref<6x1x8x128xf32, #tpu.memory_space<vmem>>, vector<1x1x8x128xf32>
    %19 = vector.shape_cast %18 : vector<1x1x8x128xf32> to vector<8x128xf32>
    %c3 = arith.constant 3 : index
    %20 = arith.index_cast %c0_i32_2 : i32 to index
    %c0_13 = arith.constant 0 : index
    %c0_14 = arith.constant 0 : index
    %21 = vector.load %arg3[%c3, %20, %c0_13, %c0_14] : memref<6x1x8x128xf32, #tpu.memory_space<vmem>>, vector<1x1x8x128xf32>
    %22 = vector.shape_cast %21 : vector<1x1x8x128xf32> to vector<8x128xf32>
    %c4 = arith.constant 4 : index
    %23 = arith.index_cast %c0_i32_2 : i32 to index
    %c0_15 = arith.constant 0 : index
    %c0_16 = arith.constant 0 : index
    %24 = vector.load %arg3[%c4, %23, %c0_15, %c0_16] : memref<6x1x8x128xf32, #tpu.memory_space<vmem>>, vector<1x1x8x128xf32>
    %25 = vector.shape_cast %24 : vector<1x1x8x128xf32> to vector<8x128xf32>
    %c5 = arith.constant 5 : index
    %26 = arith.index_cast %c0_i32_2 : i32 to index
    %c0_17 = arith.constant 0 : index
    %c0_18 = arith.constant 0 : index
    %27 = vector.load %arg3[%c5, %26, %c0_17, %c0_18] : memref<6x1x8x128xf32, #tpu.memory_space<vmem>>, vector<1x1x8x128xf32>
    %28 = vector.shape_cast %27 : vector<1x1x8x128xf32> to vector<8x128xf32>
    %c0_19 = arith.constant 0 : index
    %29 = arith.index_cast %c0_i32_2 : i32 to index
    %c0_20 = arith.constant 0 : index
    %c0_21 = arith.constant 0 : index
    %30 = vector.load %arg4[%c0_19, %29, %c0_20, %c0_21] : memref<6x1x8x128xf32, #tpu.memory_space<vmem>>, vector<1x1x8x128xf32>
    %31 = vector.shape_cast %30 : vector<1x1x8x128xf32> to vector<8x128xf32>
    %c1_22 = arith.constant 1 : index
    %32 = arith.index_cast %c0_i32_2 : i32 to index
    %c0_23 = arith.constant 0 : index
    %c0_24 = arith.constant 0 : index
    %33 = vector.load %arg4[%c1_22, %32, %c0_23, %c0_24] : memref<6x1x8x128xf32, #tpu.memory_space<vmem>>, vector<1x1x8x128xf32>
    %34 = vector.shape_cast %33 : vector<1x1x8x128xf32> to vector<8x128xf32>
    %c2_25 = arith.constant 2 : index
    %35 = arith.index_cast %c0_i32_2 : i32 to index
    %c0_26 = arith.constant 0 : index
    %c0_27 = arith.constant 0 : index
    %36 = vector.load %arg4[%c2_25, %35, %c0_26, %c0_27] : memref<6x1x8x128xf32, #tpu.memory_space<vmem>>, vector<1x1x8x128xf32>
    %37 = vector.shape_cast %36 : vector<1x1x8x128xf32> to vector<8x128xf32>
    %c3_28 = arith.constant 3 : index
    %38 = arith.index_cast %c0_i32_2 : i32 to index
    %c0_29 = arith.constant 0 : index
    %c0_30 = arith.constant 0 : index
    %39 = vector.load %arg4[%c3_28, %38, %c0_29, %c0_30] : memref<6x1x8x128xf32, #tpu.memory_space<vmem>>, vector<1x1x8x128xf32>
    %40 = vector.shape_cast %39 : vector<1x1x8x128xf32> to vector<8x128xf32>
    %c4_31 = arith.constant 4 : index
    %41 = arith.index_cast %c0_i32_2 : i32 to index
    %c0_32 = arith.constant 0 : index
    %c0_33 = arith.constant 0 : index
    %42 = vector.load %arg4[%c4_31, %41, %c0_32, %c0_33] : memref<6x1x8x128xf32, #tpu.memory_space<vmem>>, vector<1x1x8x128xf32>
    %43 = vector.shape_cast %42 : vector<1x1x8x128xf32> to vector<8x128xf32>
    %c5_34 = arith.constant 5 : index
    %44 = arith.index_cast %c0_i32_2 : i32 to index
    %c0_35 = arith.constant 0 : index
    %c0_36 = arith.constant 0 : index
    %45 = vector.load %arg4[%c5_34, %44, %c0_35, %c0_36] : memref<6x1x8x128xf32, #tpu.memory_space<vmem>>, vector<1x1x8x128xf32>
    %46 = vector.shape_cast %45 : vector<1x1x8x128xf32> to vector<8x128xf32>
    %47 = arith.subf %22, %13 : vector<8x128xf32>
    %cst_37 = arith.constant 2.000000e+00 : f32
    %48 = vector.broadcast %cst_37 : f32 to vector<8x128xf32>
    %49 = arith.mulf %48, %16 : vector<8x128xf32>
    %cst_38 = arith.constant 0.000000e+00 : f32
    %50 = vector.broadcast %cst_38 : f32 to vector<8x128xf32>
    %51 = arith.cmpf oge, %47, %50 : vector<8x128xf32>
    %cst_39 = arith.constant 1.000000e+00 : f32
    %cst_40 = arith.constant -1.000000e+00 : f32
    %52 = vector.broadcast %cst_39 : f32 to vector<8x128xf32>
    %53 = vector.broadcast %cst_40 : f32 to vector<8x128xf32>
    %54 = arith.select %51, %52, %53 : vector<8x128xi1>, vector<8x128xf32>
    %55 = arith.mulf %49, %54 : vector<8x128xf32>
    %56 = math.absf %47 : vector<8x128xf32>
    %57 = arith.mulf %47, %47 : vector<8x128xf32>
    %58 = arith.mulf %16, %16 : vector<8x128xf32>
    %cst_41 = arith.constant 4.000000e+00 : f32
    %59 = vector.broadcast %cst_41 : f32 to vector<8x128xf32>
    %60 = arith.mulf %59, %58 : vector<8x128xf32>
    %61 = arith.addf %57, %60 : vector<8x128xf32>
    %62 = math.sqrt %61 : vector<8x128xf32>
    %63 = arith.addf %56, %62 : vector<8x128xf32>
    %cst_42 = arith.constant 0.000000e+00 : f32
    %64 = vector.broadcast %cst_42 : f32 to vector<8x128xf32>
    %65 = arith.cmpf oeq, %63, %64 : vector<8x128xf32>
    %cst_43 = arith.constant 1.000000e+00 : f32
    %66 = vector.broadcast %cst_43 : f32 to vector<8x128xf32>
    %67 = arith.select %65, %66, %63 : vector<8x128xi1>, vector<8x128xf32>
    %68 = tpu.reciprocal %67 {approx = true} : vector<8x128xf32> -> vector<8x128xf32>
    %69 = arith.mulf %55, %68 : vector<8x128xf32>
    %70 = arith.mulf %69, %69 : vector<8x128xf32>
    %cst_44 = arith.constant 1.000000e+00 : f32
    %71 = vector.broadcast %cst_44 : f32 to vector<8x128xf32>
    %72 = arith.addf %71, %70 : vector<8x128xf32>
    %73 = math.rsqrt %72 : vector<8x128xf32>
    %74 = arith.mulf %69, %73 : vector<8x128xf32>
    %75 = arith.mulf %69, %16 : vector<8x128xf32>
    %76 = arith.subf %13, %75 : vector<8x128xf32>
    %77 = arith.addf %22, %75 : vector<8x128xf32>
    %cst_45 = arith.constant 0.000000e+00 : f32
    %78 = vector.broadcast %cst_45 : f32 to vector<8x128xf32>
    %79 = arith.mulf %73, %19 : vector<8x128xf32>
    %80 = arith.mulf %74, %25 : vector<8x128xf32>
    %81 = arith.subf %79, %80 : vector<8x128xf32>
    %82 = arith.mulf %74, %19 : vector<8x128xf32>
    %83 = arith.mulf %73, %25 : vector<8x128xf32>
    %84 = arith.addf %82, %83 : vector<8x128xf32>
    %85 = arith.subf %28, %76 : vector<8x128xf32>
    %cst_46 = arith.constant 2.000000e+00 : f32
    %86 = vector.broadcast %cst_46 : f32 to vector<8x128xf32>
    %87 = arith.mulf %86, %81 : vector<8x128xf32>
    %cst_47 = arith.constant 0.000000e+00 : f32
    %88 = vector.broadcast %cst_47 : f32 to vector<8x128xf32>
    %89 = arith.cmpf oge, %85, %88 : vector<8x128xf32>
    %cst_48 = arith.constant 1.000000e+00 : f32
    %cst_49 = arith.constant -1.000000e+00 : f32
    %90 = vector.broadcast %cst_48 : f32 to vector<8x128xf32>
    %91 = vector.broadcast %cst_49 : f32 to vector<8x128xf32>
    %92 = arith.select %89, %90, %91 : vector<8x128xi1>, vector<8x128xf32>
    %93 = arith.mulf %87, %92 : vector<8x128xf32>
    %94 = math.absf %85 : vector<8x128xf32>
    %95 = arith.mulf %85, %85 : vector<8x128xf32>
    %96 = arith.mulf %81, %81 : vector<8x128xf32>
    %cst_50 = arith.constant 4.000000e+00 : f32
    %97 = vector.broadcast %cst_50 : f32 to vector<8x128xf32>
    %98 = arith.mulf %97, %96 : vector<8x128xf32>
    %99 = arith.addf %95, %98 : vector<8x128xf32>
    %100 = math.sqrt %99 : vector<8x128xf32>
    %101 = arith.addf %94, %100 : vector<8x128xf32>
    %cst_51 = arith.constant 0.000000e+00 : f32
    %102 = vector.broadcast %cst_51 : f32 to vector<8x128xf32>
    %103 = arith.cmpf oeq, %101, %102 : vector<8x128xf32>
    %cst_52 = arith.constant 1.000000e+00 : f32
    %104 = vector.broadcast %cst_52 : f32 to vector<8x128xf32>
    %105 = arith.select %103, %104, %101 : vector<8x128xi1>, vector<8x128xf32>
    %106 = tpu.reciprocal %105 {approx = true} : vector<8x128xf32> -> vector<8x128xf32>
    %107 = arith.mulf %93, %106 : vector<8x128xf32>
    %108 = arith.mulf %107, %107 : vector<8x128xf32>
    %cst_53 = arith.constant 1.000000e+00 : f32
    %109 = vector.broadcast %cst_53 : f32 to vector<8x128xf32>
    %110 = arith.addf %109, %108 : vector<8x128xf32>
    %111 = math.rsqrt %110 : vector<8x128xf32>
    %112 = arith.mulf %107, %111 : vector<8x128xf32>
    %113 = arith.mulf %107, %81 : vector<8x128xf32>
    %114 = arith.subf %76, %113 : vector<8x128xf32>
    %115 = arith.addf %28, %113 : vector<8x128xf32>
    %cst_54 = arith.constant 0.000000e+00 : f32
    %116 = vector.broadcast %cst_54 : f32 to vector<8x128xf32>
    %117 = arith.mulf %111, %78 : vector<8x128xf32>
    %118 = arith.mulf %112, %84 : vector<8x128xf32>
    %119 = arith.subf %117, %118 : vector<8x128xf32>
    %120 = arith.mulf %112, %78 : vector<8x128xf32>
    %121 = arith.mulf %111, %84 : vector<8x128xf32>
    %122 = arith.addf %120, %121 : vector<8x128xf32>
    %123 = arith.subf %115, %77 : vector<8x128xf32>
    %cst_55 = arith.constant 2.000000e+00 : f32
    %124 = vector.broadcast %cst_55 : f32 to vector<8x128xf32>
    %125 = arith.mulf %124, %122 : vector<8x128xf32>
    %cst_56 = arith.constant 0.000000e+00 : f32
    %126 = vector.broadcast %cst_56 : f32 to vector<8x128xf32>
    %127 = arith.cmpf oge, %123, %126 : vector<8x128xf32>
    %cst_57 = arith.constant 1.000000e+00 : f32
    %cst_58 = arith.constant -1.000000e+00 : f32
    %128 = vector.broadcast %cst_57 : f32 to vector<8x128xf32>
    %129 = vector.broadcast %cst_58 : f32 to vector<8x128xf32>
    %130 = arith.select %127, %128, %129 : vector<8x128xi1>, vector<8x128xf32>
    %131 = arith.mulf %125, %130 : vector<8x128xf32>
    %132 = math.absf %123 : vector<8x128xf32>
    %133 = arith.mulf %123, %123 : vector<8x128xf32>
    %134 = arith.mulf %122, %122 : vector<8x128xf32>
    %cst_59 = arith.constant 4.000000e+00 : f32
    %135 = vector.broadcast %cst_59 : f32 to vector<8x128xf32>
    %136 = arith.mulf %135, %134 : vector<8x128xf32>
    %137 = arith.addf %133, %136 : vector<8x128xf32>
    %138 = math.sqrt %137 : vector<8x128xf32>
    %139 = arith.addf %132, %138 : vector<8x128xf32>
    %cst_60 = arith.constant 0.000000e+00 : f32
    %140 = vector.broadcast %cst_60 : f32 to vector<8x128xf32>
    %141 = arith.cmpf oeq, %139, %140 : vector<8x128xf32>
    %cst_61 = arith.constant 1.000000e+00 : f32
    %142 = vector.broadcast %cst_61 : f32 to vector<8x128xf32>
    %143 = arith.select %141, %142, %139 : vector<8x128xi1>, vector<8x128xf32>
    %144 = tpu.reciprocal %143 {approx = true} : vector<8x128xf32> -> vector<8x128xf32>
    %145 = arith.mulf %131, %144 : vector<8x128xf32>
    %146 = arith.mulf %145, %145 : vector<8x128xf32>
    %cst_62 = arith.constant 1.000000e+00 : f32
    %147 = vector.broadcast %cst_62 : f32 to vector<8x128xf32>
    %148 = arith.addf %147, %146 : vector<8x128xf32>
    %149 = math.rsqrt %148 : vector<8x128xf32>
    %150 = arith.mulf %145, %149 : vector<8x128xf32>
    %151 = arith.mulf %145, %122 : vector<8x128xf32>
    %152 = arith.subf %77, %151 : vector<8x128xf32>
    %153 = arith.addf %115, %151 : vector<8x128xf32>
    %cst_63 = arith.constant 0.000000e+00 : f32
    %154 = vector.broadcast %cst_63 : f32 to vector<8x128xf32>
    %155 = arith.mulf %149, %119 : vector<8x128xf32>
    %156 = arith.mulf %150, %116 : vector<8x128xf32>
    %157 = arith.subf %155, %156 : vector<8x128xf32>
    %158 = arith.mulf %150, %119 : vector<8x128xf32>
    %159 = arith.mulf %149, %116 : vector<8x128xf32>
    %160 = arith.addf %158, %159 : vector<8x128xf32>
    %161 = arith.subf %152, %114 : vector<8x128xf32>
    %cst_64 = arith.constant 2.000000e+00 : f32
    %162 = vector.broadcast %cst_64 : f32 to vector<8x128xf32>
    %163 = arith.mulf %162, %157 : vector<8x128xf32>
    %cst_65 = arith.constant 0.000000e+00 : f32
    %164 = vector.broadcast %cst_65 : f32 to vector<8x128xf32>
    %165 = arith.cmpf oge, %161, %164 : vector<8x128xf32>
    %cst_66 = arith.constant 1.000000e+00 : f32
    %cst_67 = arith.constant -1.000000e+00 : f32
    %166 = vector.broadcast %cst_66 : f32 to vector<8x128xf32>
    %167 = vector.broadcast %cst_67 : f32 to vector<8x128xf32>
    %168 = arith.select %165, %166, %167 : vector<8x128xi1>, vector<8x128xf32>
    %169 = arith.mulf %163, %168 : vector<8x128xf32>
    %170 = math.absf %161 : vector<8x128xf32>
    %171 = arith.mulf %161, %161 : vector<8x128xf32>
    %172 = arith.mulf %157, %157 : vector<8x128xf32>
    %cst_68 = arith.constant 4.000000e+00 : f32
    %173 = vector.broadcast %cst_68 : f32 to vector<8x128xf32>
    %174 = arith.mulf %173, %172 : vector<8x128xf32>
    %175 = arith.addf %171, %174 : vector<8x128xf32>
    %176 = math.sqrt %175 : vector<8x128xf32>
    %177 = arith.addf %170, %176 : vector<8x128xf32>
    %cst_69 = arith.constant 0.000000e+00 : f32
    %178 = vector.broadcast %cst_69 : f32 to vector<8x128xf32>
    %179 = arith.cmpf oeq, %177, %178 : vector<8x128xf32>
    %cst_70 = arith.constant 1.000000e+00 : f32
    %180 = vector.broadcast %cst_70 : f32 to vector<8x128xf32>
    %181 = arith.select %179, %180, %177 : vector<8x128xi1>, vector<8x128xf32>
    %182 = tpu.reciprocal %181 {approx = true} : vector<8x128xf32> -> vector<8x128xf32>
    %183 = arith.mulf %169, %182 : vector<8x128xf32>
    %184 = arith.mulf %183, %183 : vector<8x128xf32>
    %cst_71 = arith.constant 1.000000e+00 : f32
    %185 = vector.broadcast %cst_71 : f32 to vector<8x128xf32>
    %186 = arith.addf %185, %184 : vector<8x128xf32>
    %187 = math.rsqrt %186 : vector<8x128xf32>
    %188 = arith.mulf %183, %187 : vector<8x128xf32>
    %189 = arith.mulf %183, %157 : vector<8x128xf32>
    %190 = arith.subf %114, %189 : vector<8x128xf32>
    %191 = arith.addf %152, %189 : vector<8x128xf32>
    %cst_72 = arith.constant 0.000000e+00 : f32
    %192 = vector.broadcast %cst_72 : f32 to vector<8x128xf32>
    %193 = arith.mulf %187, %160 : vector<8x128xf32>
    %194 = arith.mulf %188, %154 : vector<8x128xf32>
    %195 = arith.subf %193, %194 : vector<8x128xf32>
    %196 = arith.mulf %188, %160 : vector<8x128xf32>
    %197 = arith.mulf %187, %154 : vector<8x128xf32>
    %198 = arith.addf %196, %197 : vector<8x128xf32>
    %199 = arith.subf %153, %190 : vector<8x128xf32>
    %cst_73 = arith.constant 2.000000e+00 : f32
    %200 = vector.broadcast %cst_73 : f32 to vector<8x128xf32>
    %201 = arith.mulf %200, %195 : vector<8x128xf32>
    %cst_74 = arith.constant 0.000000e+00 : f32
    %202 = vector.broadcast %cst_74 : f32 to vector<8x128xf32>
    %203 = arith.cmpf oge, %199, %202 : vector<8x128xf32>
    %cst_75 = arith.constant 1.000000e+00 : f32
    %cst_76 = arith.constant -1.000000e+00 : f32
    %204 = vector.broadcast %cst_75 : f32 to vector<8x128xf32>
    %205 = vector.broadcast %cst_76 : f32 to vector<8x128xf32>
    %206 = arith.select %203, %204, %205 : vector<8x128xi1>, vector<8x128xf32>
    %207 = arith.mulf %201, %206 : vector<8x128xf32>
    %208 = math.absf %199 : vector<8x128xf32>
    %209 = arith.mulf %199, %199 : vector<8x128xf32>
    %210 = arith.mulf %195, %195 : vector<8x128xf32>
    %cst_77 = arith.constant 4.000000e+00 : f32
    %211 = vector.broadcast %cst_77 : f32 to vector<8x128xf32>
    %212 = arith.mulf %211, %210 : vector<8x128xf32>
    %213 = arith.addf %209, %212 : vector<8x128xf32>
    %214 = math.sqrt %213 : vector<8x128xf32>
    %215 = arith.addf %208, %214 : vector<8x128xf32>
    %cst_78 = arith.constant 0.000000e+00 : f32
    %216 = vector.broadcast %cst_78 : f32 to vector<8x128xf32>
    %217 = arith.cmpf oeq, %215, %216 : vector<8x128xf32>
    %cst_79 = arith.constant 1.000000e+00 : f32
    %218 = vector.broadcast %cst_79 : f32 to vector<8x128xf32>
    %219 = arith.select %217, %218, %215 : vector<8x128xi1>, vector<8x128xf32>
    %220 = tpu.reciprocal %219 {approx = true} : vector<8x128xf32> -> vector<8x128xf32>
    %221 = arith.mulf %207, %220 : vector<8x128xf32>
    %222 = arith.mulf %221, %221 : vector<8x128xf32>
    %cst_80 = arith.constant 1.000000e+00 : f32
    %223 = vector.broadcast %cst_80 : f32 to vector<8x128xf32>
    %224 = arith.addf %223, %222 : vector<8x128xf32>
    %225 = math.rsqrt %224 : vector<8x128xf32>
    %226 = arith.mulf %221, %225 : vector<8x128xf32>
    %227 = arith.mulf %221, %195 : vector<8x128xf32>
    %228 = arith.subf %190, %227 : vector<8x128xf32>
    %229 = arith.addf %153, %227 : vector<8x128xf32>
    %cst_81 = arith.constant 0.000000e+00 : f32
    %230 = vector.broadcast %cst_81 : f32 to vector<8x128xf32>
    %231 = arith.mulf %225, %192 : vector<8x128xf32>
    %232 = arith.mulf %226, %198 : vector<8x128xf32>
    %233 = arith.subf %231, %232 : vector<8x128xf32>
    %234 = arith.mulf %226, %192 : vector<8x128xf32>
    %235 = arith.mulf %225, %198 : vector<8x128xf32>
    %236 = arith.addf %234, %235 : vector<8x128xf32>
    %237 = arith.subf %229, %191 : vector<8x128xf32>
    %cst_82 = arith.constant 2.000000e+00 : f32
    %238 = vector.broadcast %cst_82 : f32 to vector<8x128xf32>
    %239 = arith.mulf %238, %236 : vector<8x128xf32>
    %cst_83 = arith.constant 0.000000e+00 : f32
    %240 = vector.broadcast %cst_83 : f32 to vector<8x128xf32>
    %241 = arith.cmpf oge, %237, %240 : vector<8x128xf32>
    %cst_84 = arith.constant 1.000000e+00 : f32
    %cst_85 = arith.constant -1.000000e+00 : f32
    %242 = vector.broadcast %cst_84 : f32 to vector<8x128xf32>
    %243 = vector.broadcast %cst_85 : f32 to vector<8x128xf32>
    %244 = arith.select %241, %242, %243 : vector<8x128xi1>, vector<8x128xf32>
    %245 = arith.mulf %239, %244 : vector<8x128xf32>
    %246 = math.absf %237 : vector<8x128xf32>
    %247 = arith.mulf %237, %237 : vector<8x128xf32>
    %248 = arith.mulf %236, %236 : vector<8x128xf32>
    %cst_86 = arith.constant 4.000000e+00 : f32
    %249 = vector.broadcast %cst_86 : f32 to vector<8x128xf32>
    %250 = arith.mulf %249, %248 : vector<8x128xf32>
    %251 = arith.addf %247, %250 : vector<8x128xf32>
    %252 = math.sqrt %251 : vector<8x128xf32>
    %253 = arith.addf %246, %252 : vector<8x128xf32>
    %cst_87 = arith.constant 0.000000e+00 : f32
    %254 = vector.broadcast %cst_87 : f32 to vector<8x128xf32>
    %255 = arith.cmpf oeq, %253, %254 : vector<8x128xf32>
    %cst_88 = arith.constant 1.000000e+00 : f32
    %256 = vector.broadcast %cst_88 : f32 to vector<8x128xf32>
    %257 = arith.select %255, %256, %253 : vector<8x128xi1>, vector<8x128xf32>
    %258 = tpu.reciprocal %257 {approx = true} : vector<8x128xf32> -> vector<8x128xf32>
    %259 = arith.mulf %245, %258 : vector<8x128xf32>
    %260 = arith.mulf %259, %259 : vector<8x128xf32>
    %cst_89 = arith.constant 1.000000e+00 : f32
    %261 = vector.broadcast %cst_89 : f32 to vector<8x128xf32>
    %262 = arith.addf %261, %260 : vector<8x128xf32>
    %263 = math.rsqrt %262 : vector<8x128xf32>
    %264 = arith.mulf %259, %263 : vector<8x128xf32>
    %265 = arith.mulf %259, %236 : vector<8x128xf32>
    %266 = arith.subf %191, %265 : vector<8x128xf32>
    %267 = arith.addf %229, %265 : vector<8x128xf32>
    %cst_90 = arith.constant 0.000000e+00 : f32
    %268 = vector.broadcast %cst_90 : f32 to vector<8x128xf32>
    %269 = arith.mulf %263, %233 : vector<8x128xf32>
    %270 = arith.mulf %264, %230 : vector<8x128xf32>
    %271 = arith.subf %269, %270 : vector<8x128xf32>
    %272 = arith.mulf %264, %233 : vector<8x128xf32>
    %273 = arith.mulf %263, %230 : vector<8x128xf32>
    %274 = arith.addf %272, %273 : vector<8x128xf32>
    %275 = arith.subf %266, %228 : vector<8x128xf32>
    %cst_91 = arith.constant 2.000000e+00 : f32
    %276 = vector.broadcast %cst_91 : f32 to vector<8x128xf32>
    %277 = arith.mulf %276, %271 : vector<8x128xf32>
    %cst_92 = arith.constant 0.000000e+00 : f32
    %278 = vector.broadcast %cst_92 : f32 to vector<8x128xf32>
    %279 = arith.cmpf oge, %275, %278 : vector<8x128xf32>
    %cst_93 = arith.constant 1.000000e+00 : f32
    %cst_94 = arith.constant -1.000000e+00 : f32
    %280 = vector.broadcast %cst_93 : f32 to vector<8x128xf32>
    %281 = vector.broadcast %cst_94 : f32 to vector<8x128xf32>
    %282 = arith.select %279, %280, %281 : vector<8x128xi1>, vector<8x128xf32>
    %283 = arith.mulf %277, %282 : vector<8x128xf32>
    %284 = math.absf %275 : vector<8x128xf32>
    %285 = arith.mulf %275, %275 : vector<8x128xf32>
    %286 = arith.mulf %271, %271 : vector<8x128xf32>
    %cst_95 = arith.constant 4.000000e+00 : f32
    %287 = vector.broadcast %cst_95 : f32 to vector<8x128xf32>
    %288 = arith.mulf %287, %286 : vector<8x128xf32>
    %289 = arith.addf %285, %288 : vector<8x128xf32>
    %290 = math.sqrt %289 : vector<8x128xf32>
    %291 = arith.addf %284, %290 : vector<8x128xf32>
    %cst_96 = arith.constant 0.000000e+00 : f32
    %292 = vector.broadcast %cst_96 : f32 to vector<8x128xf32>
    %293 = arith.cmpf oeq, %291, %292 : vector<8x128xf32>
    %cst_97 = arith.constant 1.000000e+00 : f32
    %294 = vector.broadcast %cst_97 : f32 to vector<8x128xf32>
    %295 = arith.select %293, %294, %291 : vector<8x128xi1>, vector<8x128xf32>
    %296 = tpu.reciprocal %295 {approx = true} : vector<8x128xf32> -> vector<8x128xf32>
    %297 = arith.mulf %283, %296 : vector<8x128xf32>
    %298 = arith.mulf %297, %297 : vector<8x128xf32>
    %cst_98 = arith.constant 1.000000e+00 : f32
    %299 = vector.broadcast %cst_98 : f32 to vector<8x128xf32>
    %300 = arith.addf %299, %298 : vector<8x128xf32>
    %301 = math.rsqrt %300 : vector<8x128xf32>
    %302 = arith.mulf %297, %301 : vector<8x128xf32>
    %303 = arith.mulf %297, %271 : vector<8x128xf32>
    %304 = arith.subf %228, %303 : vector<8x128xf32>
    %305 = arith.addf %266, %303 : vector<8x128xf32>
    %cst_99 = arith.constant 0.000000e+00 : f32
    %306 = vector.broadcast %cst_99 : f32 to vector<8x128xf32>
    %307 = arith.mulf %301, %274 : vector<8x128xf32>
    %308 = arith.mulf %302, %268 : vector<8x128xf32>
    %309 = arith.subf %307, %308 : vector<8x128xf32>
    %310 = arith.mulf %302, %274 : vector<8x128xf32>
    %311 = arith.mulf %301, %268 : vector<8x128xf32>
    %312 = arith.addf %310, %311 : vector<8x128xf32>
    %313 = arith.subf %267, %304 : vector<8x128xf32>
    %cst_100 = arith.constant 2.000000e+00 : f32
    %314 = vector.broadcast %cst_100 : f32 to vector<8x128xf32>
    %315 = arith.mulf %314, %309 : vector<8x128xf32>
    %cst_101 = arith.constant 0.000000e+00 : f32
    %316 = vector.broadcast %cst_101 : f32 to vector<8x128xf32>
    %317 = arith.cmpf oge, %313, %316 : vector<8x128xf32>
    %cst_102 = arith.constant 1.000000e+00 : f32
    %cst_103 = arith.constant -1.000000e+00 : f32
    %318 = vector.broadcast %cst_102 : f32 to vector<8x128xf32>
    %319 = vector.broadcast %cst_103 : f32 to vector<8x128xf32>
    %320 = arith.select %317, %318, %319 : vector<8x128xi1>, vector<8x128xf32>
    %321 = arith.mulf %315, %320 : vector<8x128xf32>
    %322 = math.absf %313 : vector<8x128xf32>
    %323 = arith.mulf %313, %313 : vector<8x128xf32>
    %324 = arith.mulf %309, %309 : vector<8x128xf32>
    %cst_104 = arith.constant 4.000000e+00 : f32
    %325 = vector.broadcast %cst_104 : f32 to vector<8x128xf32>
    %326 = arith.mulf %325, %324 : vector<8x128xf32>
    %327 = arith.addf %323, %326 : vector<8x128xf32>
    %328 = math.sqrt %327 : vector<8x128xf32>
    %329 = arith.addf %322, %328 : vector<8x128xf32>
    %cst_105 = arith.constant 0.000000e+00 : f32
    %330 = vector.broadcast %cst_105 : f32 to vector<8x128xf32>
    %331 = arith.cmpf oeq, %329, %330 : vector<8x128xf32>
    %cst_106 = arith.constant 1.000000e+00 : f32
    %332 = vector.broadcast %cst_106 : f32 to vector<8x128xf32>
    %333 = arith.select %331, %332, %329 : vector<8x128xi1>, vector<8x128xf32>
    %334 = tpu.reciprocal %333 {approx = true} : vector<8x128xf32> -> vector<8x128xf32>
    %335 = arith.mulf %321, %334 : vector<8x128xf32>
    %336 = arith.mulf %335, %335 : vector<8x128xf32>
    %cst_107 = arith.constant 1.000000e+00 : f32
    %337 = vector.broadcast %cst_107 : f32 to vector<8x128xf32>
    %338 = arith.addf %337, %336 : vector<8x128xf32>
    %339 = math.rsqrt %338 : vector<8x128xf32>
    %340 = arith.mulf %335, %339 : vector<8x128xf32>
    %341 = arith.mulf %335, %309 : vector<8x128xf32>
    %342 = arith.subf %304, %341 : vector<8x128xf32>
    %343 = arith.addf %267, %341 : vector<8x128xf32>
    %cst_108 = arith.constant 0.000000e+00 : f32
    %344 = vector.broadcast %cst_108 : f32 to vector<8x128xf32>
    %345 = arith.mulf %339, %306 : vector<8x128xf32>
    %346 = arith.mulf %340, %312 : vector<8x128xf32>
    %347 = arith.subf %345, %346 : vector<8x128xf32>
    %348 = arith.mulf %340, %306 : vector<8x128xf32>
    %349 = arith.mulf %339, %312 : vector<8x128xf32>
    %350 = arith.addf %348, %349 : vector<8x128xf32>
    %351 = arith.subf %343, %305 : vector<8x128xf32>
    %cst_109 = arith.constant 2.000000e+00 : f32
    %352 = vector.broadcast %cst_109 : f32 to vector<8x128xf32>
    %353 = arith.mulf %352, %350 : vector<8x128xf32>
    %cst_110 = arith.constant 0.000000e+00 : f32
    %354 = vector.broadcast %cst_110 : f32 to vector<8x128xf32>
    %355 = arith.cmpf oge, %351, %354 : vector<8x128xf32>
    %cst_111 = arith.constant 1.000000e+00 : f32
    %cst_112 = arith.constant -1.000000e+00 : f32
    %356 = vector.broadcast %cst_111 : f32 to vector<8x128xf32>
    %357 = vector.broadcast %cst_112 : f32 to vector<8x128xf32>
    %358 = arith.select %355, %356, %357 : vector<8x128xi1>, vector<8x128xf32>
    %359 = arith.mulf %353, %358 : vector<8x128xf32>
    %360 = math.absf %351 : vector<8x128xf32>
    %361 = arith.mulf %351, %351 : vector<8x128xf32>
    %362 = arith.mulf %350, %350 : vector<8x128xf32>
    %cst_113 = arith.constant 4.000000e+00 : f32
    %363 = vector.broadcast %cst_113 : f32 to vector<8x128xf32>
    %364 = arith.mulf %363, %362 : vector<8x128xf32>
    %365 = arith.addf %361, %364 : vector<8x128xf32>
    %366 = math.sqrt %365 : vector<8x128xf32>
    %367 = arith.addf %360, %366 : vector<8x128xf32>
    %cst_114 = arith.constant 0.000000e+00 : f32
    %368 = vector.broadcast %cst_114 : f32 to vector<8x128xf32>
    %369 = arith.cmpf oeq, %367, %368 : vector<8x128xf32>
    %cst_115 = arith.constant 1.000000e+00 : f32
    %370 = vector.broadcast %cst_115 : f32 to vector<8x128xf32>
    %371 = arith.select %369, %370, %367 : vector<8x128xi1>, vector<8x128xf32>
    %372 = tpu.reciprocal %371 {approx = true} : vector<8x128xf32> -> vector<8x128xf32>
    %373 = arith.mulf %359, %372 : vector<8x128xf32>
    %374 = arith.mulf %373, %373 : vector<8x128xf32>
    %cst_116 = arith.constant 1.000000e+00 : f32
    %375 = vector.broadcast %cst_116 : f32 to vector<8x128xf32>
    %376 = arith.addf %375, %374 : vector<8x128xf32>
    %377 = math.rsqrt %376 : vector<8x128xf32>
    %378 = arith.mulf %373, %377 : vector<8x128xf32>
    %379 = arith.mulf %373, %350 : vector<8x128xf32>
    %380 = arith.subf %305, %379 : vector<8x128xf32>
    %381 = arith.addf %343, %379 : vector<8x128xf32>
    %cst_117 = arith.constant 0.000000e+00 : f32
    %382 = vector.broadcast %cst_117 : f32 to vector<8x128xf32>
    %383 = arith.mulf %377, %347 : vector<8x128xf32>
    %384 = arith.mulf %378, %344 : vector<8x128xf32>
    %385 = arith.subf %383, %384 : vector<8x128xf32>
    %386 = arith.mulf %378, %347 : vector<8x128xf32>
    %387 = arith.mulf %377, %344 : vector<8x128xf32>
    %388 = arith.addf %386, %387 : vector<8x128xf32>
    %389 = arith.subf %380, %342 : vector<8x128xf32>
    %cst_118 = arith.constant 2.000000e+00 : f32
    %390 = vector.broadcast %cst_118 : f32 to vector<8x128xf32>
    %391 = arith.mulf %390, %385 : vector<8x128xf32>
    %cst_119 = arith.constant 0.000000e+00 : f32
    %392 = vector.broadcast %cst_119 : f32 to vector<8x128xf32>
    %393 = arith.cmpf oge, %389, %392 : vector<8x128xf32>
    %cst_120 = arith.constant 1.000000e+00 : f32
    %cst_121 = arith.constant -1.000000e+00 : f32
    %394 = vector.broadcast %cst_120 : f32 to vector<8x128xf32>
    %395 = vector.broadcast %cst_121 : f32 to vector<8x128xf32>
    %396 = arith.select %393, %394, %395 : vector<8x128xi1>, vector<8x128xf32>
    %397 = arith.mulf %391, %396 : vector<8x128xf32>
    %398 = math.absf %389 : vector<8x128xf32>
    %399 = arith.mulf %389, %389 : vector<8x128xf32>
    %400 = arith.mulf %385, %385 : vector<8x128xf32>
    %cst_122 = arith.constant 4.000000e+00 : f32
    %401 = vector.broadcast %cst_122 : f32 to vector<8x128xf32>
    %402 = arith.mulf %401, %400 : vector<8x128xf32>
    %403 = arith.addf %399, %402 : vector<8x128xf32>
    %404 = math.sqrt %403 : vector<8x128xf32>
    %405 = arith.addf %398, %404 : vector<8x128xf32>
    %cst_123 = arith.constant 0.000000e+00 : f32
    %406 = vector.broadcast %cst_123 : f32 to vector<8x128xf32>
    %407 = arith.cmpf oeq, %405, %406 : vector<8x128xf32>
    %cst_124 = arith.constant 1.000000e+00 : f32
    %408 = vector.broadcast %cst_124 : f32 to vector<8x128xf32>
    %409 = arith.select %407, %408, %405 : vector<8x128xi1>, vector<8x128xf32>
    %410 = tpu.reciprocal %409 {approx = true} : vector<8x128xf32> -> vector<8x128xf32>
    %411 = arith.mulf %397, %410 : vector<8x128xf32>
    %412 = arith.mulf %411, %411 : vector<8x128xf32>
    %cst_125 = arith.constant 1.000000e+00 : f32
    %413 = vector.broadcast %cst_125 : f32 to vector<8x128xf32>
    %414 = arith.addf %413, %412 : vector<8x128xf32>
    %415 = math.rsqrt %414 : vector<8x128xf32>
    %416 = arith.mulf %411, %415 : vector<8x128xf32>
    %417 = arith.mulf %411, %385 : vector<8x128xf32>
    %418 = arith.subf %342, %417 : vector<8x128xf32>
    %419 = arith.addf %380, %417 : vector<8x128xf32>
    %cst_126 = arith.constant 0.000000e+00 : f32
    %420 = vector.broadcast %cst_126 : f32 to vector<8x128xf32>
    %421 = arith.mulf %415, %388 : vector<8x128xf32>
    %422 = arith.mulf %416, %382 : vector<8x128xf32>
    %423 = arith.subf %421, %422 : vector<8x128xf32>
    %424 = arith.mulf %416, %388 : vector<8x128xf32>
    %425 = arith.mulf %415, %382 : vector<8x128xf32>
    %426 = arith.addf %424, %425 : vector<8x128xf32>
    %427 = arith.subf %381, %418 : vector<8x128xf32>
    %cst_127 = arith.constant 2.000000e+00 : f32
    %428 = vector.broadcast %cst_127 : f32 to vector<8x128xf32>
    %429 = arith.mulf %428, %423 : vector<8x128xf32>
    %cst_128 = arith.constant 0.000000e+00 : f32
    %430 = vector.broadcast %cst_128 : f32 to vector<8x128xf32>
    %431 = arith.cmpf oge, %427, %430 : vector<8x128xf32>
    %cst_129 = arith.constant 1.000000e+00 : f32
    %cst_130 = arith.constant -1.000000e+00 : f32
    %432 = vector.broadcast %cst_129 : f32 to vector<8x128xf32>
    %433 = vector.broadcast %cst_130 : f32 to vector<8x128xf32>
    %434 = arith.select %431, %432, %433 : vector<8x128xi1>, vector<8x128xf32>
    %435 = arith.mulf %429, %434 : vector<8x128xf32>
    %436 = math.absf %427 : vector<8x128xf32>
    %437 = arith.mulf %427, %427 : vector<8x128xf32>
    %438 = arith.mulf %423, %423 : vector<8x128xf32>
    %cst_131 = arith.constant 4.000000e+00 : f32
    %439 = vector.broadcast %cst_131 : f32 to vector<8x128xf32>
    %440 = arith.mulf %439, %438 : vector<8x128xf32>
    %441 = arith.addf %437, %440 : vector<8x128xf32>
    %442 = math.sqrt %441 : vector<8x128xf32>
    %443 = arith.addf %436, %442 : vector<8x128xf32>
    %cst_132 = arith.constant 0.000000e+00 : f32
    %444 = vector.broadcast %cst_132 : f32 to vector<8x128xf32>
    %445 = arith.cmpf oeq, %443, %444 : vector<8x128xf32>
    %cst_133 = arith.constant 1.000000e+00 : f32
    %446 = vector.broadcast %cst_133 : f32 to vector<8x128xf32>
    %447 = arith.select %445, %446, %443 : vector<8x128xi1>, vector<8x128xf32>
    %448 = tpu.reciprocal %447 {approx = true} : vector<8x128xf32> -> vector<8x128xf32>
    %449 = arith.mulf %435, %448 : vector<8x128xf32>
    %450 = arith.mulf %449, %449 : vector<8x128xf32>
    %cst_134 = arith.constant 1.000000e+00 : f32
    %451 = vector.broadcast %cst_134 : f32 to vector<8x128xf32>
    %452 = arith.addf %451, %450 : vector<8x128xf32>
    %453 = math.rsqrt %452 : vector<8x128xf32>
    %454 = arith.mulf %449, %453 : vector<8x128xf32>
    %455 = arith.mulf %449, %423 : vector<8x128xf32>
    %456 = arith.subf %418, %455 : vector<8x128xf32>
    %457 = arith.addf %381, %455 : vector<8x128xf32>
    %cst_135 = arith.constant 0.000000e+00 : f32
    %458 = vector.broadcast %cst_135 : f32 to vector<8x128xf32>
    %459 = arith.mulf %453, %420 : vector<8x128xf32>
    %460 = arith.mulf %454, %426 : vector<8x128xf32>
    %461 = arith.subf %459, %460 : vector<8x128xf32>
    %462 = arith.mulf %454, %420 : vector<8x128xf32>
    %463 = arith.mulf %453, %426 : vector<8x128xf32>
    %464 = arith.addf %462, %463 : vector<8x128xf32>
    %465 = arith.subf %457, %419 : vector<8x128xf32>
    %cst_136 = arith.constant 2.000000e+00 : f32
    %466 = vector.broadcast %cst_136 : f32 to vector<8x128xf32>
    %467 = arith.mulf %466, %464 : vector<8x128xf32>
    %cst_137 = arith.constant 0.000000e+00 : f32
    %468 = vector.broadcast %cst_137 : f32 to vector<8x128xf32>
    %469 = arith.cmpf oge, %465, %468 : vector<8x128xf32>
    %cst_138 = arith.constant 1.000000e+00 : f32
    %cst_139 = arith.constant -1.000000e+00 : f32
    %470 = vector.broadcast %cst_138 : f32 to vector<8x128xf32>
    %471 = vector.broadcast %cst_139 : f32 to vector<8x128xf32>
    %472 = arith.select %469, %470, %471 : vector<8x128xi1>, vector<8x128xf32>
    %473 = arith.mulf %467, %472 : vector<8x128xf32>
    %474 = math.absf %465 : vector<8x128xf32>
    %475 = arith.mulf %465, %465 : vector<8x128xf32>
    %476 = arith.mulf %464, %464 : vector<8x128xf32>
    %cst_140 = arith.constant 4.000000e+00 : f32
    %477 = vector.broadcast %cst_140 : f32 to vector<8x128xf32>
    %478 = arith.mulf %477, %476 : vector<8x128xf32>
    %479 = arith.addf %475, %478 : vector<8x128xf32>
    %480 = math.sqrt %479 : vector<8x128xf32>
    %481 = arith.addf %474, %480 : vector<8x128xf32>
    %cst_141 = arith.constant 0.000000e+00 : f32
    %482 = vector.broadcast %cst_141 : f32 to vector<8x128xf32>
    %483 = arith.cmpf oeq, %481, %482 : vector<8x128xf32>
    %cst_142 = arith.constant 1.000000e+00 : f32
    %484 = vector.broadcast %cst_142 : f32 to vector<8x128xf32>
    %485 = arith.select %483, %484, %481 : vector<8x128xi1>, vector<8x128xf32>
    %486 = tpu.reciprocal %485 {approx = true} : vector<8x128xf32> -> vector<8x128xf32>
    %487 = arith.mulf %473, %486 : vector<8x128xf32>
    %488 = arith.mulf %487, %487 : vector<8x128xf32>
    %cst_143 = arith.constant 1.000000e+00 : f32
    %489 = vector.broadcast %cst_143 : f32 to vector<8x128xf32>
    %490 = arith.addf %489, %488 : vector<8x128xf32>
    %491 = math.rsqrt %490 : vector<8x128xf32>
    %492 = arith.mulf %487, %491 : vector<8x128xf32>
    %493 = arith.mulf %487, %464 : vector<8x128xf32>
    %494 = arith.subf %419, %493 : vector<8x128xf32>
    %495 = arith.addf %457, %493 : vector<8x128xf32>
    %cst_144 = arith.constant 0.000000e+00 : f32
    %496 = vector.broadcast %cst_144 : f32 to vector<8x128xf32>
    %497 = arith.mulf %491, %461 : vector<8x128xf32>
    %498 = arith.mulf %492, %458 : vector<8x128xf32>
    %499 = arith.subf %497, %498 : vector<8x128xf32>
    %500 = arith.mulf %492, %461 : vector<8x128xf32>
    %501 = arith.mulf %491, %458 : vector<8x128xf32>
    %502 = arith.addf %500, %501 : vector<8x128xf32>
    %503 = arith.subf %494, %456 : vector<8x128xf32>
    %cst_145 = arith.constant 2.000000e+00 : f32
    %504 = vector.broadcast %cst_145 : f32 to vector<8x128xf32>
    %505 = arith.mulf %504, %499 : vector<8x128xf32>
    %cst_146 = arith.constant 0.000000e+00 : f32
    %506 = vector.broadcast %cst_146 : f32 to vector<8x128xf32>
    %507 = arith.cmpf oge, %503, %506 : vector<8x128xf32>
    %cst_147 = arith.constant 1.000000e+00 : f32
    %cst_148 = arith.constant -1.000000e+00 : f32
    %508 = vector.broadcast %cst_147 : f32 to vector<8x128xf32>
    %509 = vector.broadcast %cst_148 : f32 to vector<8x128xf32>
    %510 = arith.select %507, %508, %509 : vector<8x128xi1>, vector<8x128xf32>
    %511 = arith.mulf %505, %510 : vector<8x128xf32>
    %512 = math.absf %503 : vector<8x128xf32>
    %513 = arith.mulf %503, %503 : vector<8x128xf32>
    %514 = arith.mulf %499, %499 : vector<8x128xf32>
    %cst_149 = arith.constant 4.000000e+00 : f32
    %515 = vector.broadcast %cst_149 : f32 to vector<8x128xf32>
    %516 = arith.mulf %515, %514 : vector<8x128xf32>
    %517 = arith.addf %513, %516 : vector<8x128xf32>
    %518 = math.sqrt %517 : vector<8x128xf32>
    %519 = arith.addf %512, %518 : vector<8x128xf32>
    %cst_150 = arith.constant 0.000000e+00 : f32
    %520 = vector.broadcast %cst_150 : f32 to vector<8x128xf32>
    %521 = arith.cmpf oeq, %519, %520 : vector<8x128xf32>
    %cst_151 = arith.constant 1.000000e+00 : f32
    %522 = vector.broadcast %cst_151 : f32 to vector<8x128xf32>
    %523 = arith.select %521, %522, %519 : vector<8x128xi1>, vector<8x128xf32>
    %524 = tpu.reciprocal %523 {approx = true} : vector<8x128xf32> -> vector<8x128xf32>
    %525 = arith.mulf %511, %524 : vector<8x128xf32>
    %526 = arith.mulf %525, %525 : vector<8x128xf32>
    %cst_152 = arith.constant 1.000000e+00 : f32
    %527 = vector.broadcast %cst_152 : f32 to vector<8x128xf32>
    %528 = arith.addf %527, %526 : vector<8x128xf32>
    %529 = math.rsqrt %528 : vector<8x128xf32>
    %530 = arith.mulf %525, %529 : vector<8x128xf32>
    %531 = arith.mulf %525, %499 : vector<8x128xf32>
    %532 = arith.subf %456, %531 : vector<8x128xf32>
    %533 = arith.addf %494, %531 : vector<8x128xf32>
    %cst_153 = arith.constant 0.000000e+00 : f32
    %534 = vector.broadcast %cst_153 : f32 to vector<8x128xf32>
    %535 = arith.mulf %529, %502 : vector<8x128xf32>
    %536 = arith.mulf %530, %496 : vector<8x128xf32>
    %537 = arith.subf %535, %536 : vector<8x128xf32>
    %538 = arith.mulf %530, %502 : vector<8x128xf32>
    %539 = arith.mulf %529, %496 : vector<8x128xf32>
    %540 = arith.addf %538, %539 : vector<8x128xf32>
    %541 = arith.subf %495, %532 : vector<8x128xf32>
    %cst_154 = arith.constant 2.000000e+00 : f32
    %542 = vector.broadcast %cst_154 : f32 to vector<8x128xf32>
    %543 = arith.mulf %542, %537 : vector<8x128xf32>
    %cst_155 = arith.constant 0.000000e+00 : f32
    %544 = vector.broadcast %cst_155 : f32 to vector<8x128xf32>
    %545 = arith.cmpf oge, %541, %544 : vector<8x128xf32>
    %cst_156 = arith.constant 1.000000e+00 : f32
    %cst_157 = arith.constant -1.000000e+00 : f32
    %546 = vector.broadcast %cst_156 : f32 to vector<8x128xf32>
    %547 = vector.broadcast %cst_157 : f32 to vector<8x128xf32>
    %548 = arith.select %545, %546, %547 : vector<8x128xi1>, vector<8x128xf32>
    %549 = arith.mulf %543, %548 : vector<8x128xf32>
    %550 = math.absf %541 : vector<8x128xf32>
    %551 = arith.mulf %541, %541 : vector<8x128xf32>
    %552 = arith.mulf %537, %537 : vector<8x128xf32>
    %cst_158 = arith.constant 4.000000e+00 : f32
    %553 = vector.broadcast %cst_158 : f32 to vector<8x128xf32>
    %554 = arith.mulf %553, %552 : vector<8x128xf32>
    %555 = arith.addf %551, %554 : vector<8x128xf32>
    %556 = math.sqrt %555 : vector<8x128xf32>
    %557 = arith.addf %550, %556 : vector<8x128xf32>
    %cst_159 = arith.constant 0.000000e+00 : f32
    %558 = vector.broadcast %cst_159 : f32 to vector<8x128xf32>
    %559 = arith.cmpf oeq, %557, %558 : vector<8x128xf32>
    %cst_160 = arith.constant 1.000000e+00 : f32
    %560 = vector.broadcast %cst_160 : f32 to vector<8x128xf32>
    %561 = arith.select %559, %560, %557 : vector<8x128xi1>, vector<8x128xf32>
    %562 = tpu.reciprocal %561 {approx = true} : vector<8x128xf32> -> vector<8x128xf32>
    %563 = arith.mulf %549, %562 : vector<8x128xf32>
    %564 = arith.mulf %563, %563 : vector<8x128xf32>
    %cst_161 = arith.constant 1.000000e+00 : f32
    %565 = vector.broadcast %cst_161 : f32 to vector<8x128xf32>
    %566 = arith.addf %565, %564 : vector<8x128xf32>
    %567 = math.rsqrt %566 : vector<8x128xf32>
    %568 = arith.mulf %563, %567 : vector<8x128xf32>
    %569 = arith.mulf %563, %537 : vector<8x128xf32>
    %570 = arith.subf %532, %569 : vector<8x128xf32>
    %571 = arith.addf %495, %569 : vector<8x128xf32>
    %572 = arith.mulf %568, %534 : vector<8x128xf32>
    %573 = arith.mulf %567, %540 : vector<8x128xf32>
    %574 = arith.addf %572, %573 : vector<8x128xf32>
    %575 = arith.subf %571, %533 : vector<8x128xf32>
    %cst_162 = arith.constant 2.000000e+00 : f32
    %576 = vector.broadcast %cst_162 : f32 to vector<8x128xf32>
    %577 = arith.mulf %576, %574 : vector<8x128xf32>
    %cst_163 = arith.constant 0.000000e+00 : f32
    %578 = vector.broadcast %cst_163 : f32 to vector<8x128xf32>
    %579 = arith.cmpf oge, %575, %578 : vector<8x128xf32>
    %cst_164 = arith.constant 1.000000e+00 : f32
    %cst_165 = arith.constant -1.000000e+00 : f32
    %580 = vector.broadcast %cst_164 : f32 to vector<8x128xf32>
    %581 = vector.broadcast %cst_165 : f32 to vector<8x128xf32>
    %582 = arith.select %579, %580, %581 : vector<8x128xi1>, vector<8x128xf32>
    %583 = arith.mulf %577, %582 : vector<8x128xf32>
    %584 = math.absf %575 : vector<8x128xf32>
    %585 = arith.mulf %575, %575 : vector<8x128xf32>
    %586 = arith.mulf %574, %574 : vector<8x128xf32>
    %cst_166 = arith.constant 4.000000e+00 : f32
    %587 = vector.broadcast %cst_166 : f32 to vector<8x128xf32>
    %588 = arith.mulf %587, %586 : vector<8x128xf32>
    %589 = arith.addf %585, %588 : vector<8x128xf32>
    %590 = math.sqrt %589 : vector<8x128xf32>
    %591 = arith.addf %584, %590 : vector<8x128xf32>
    %cst_167 = arith.constant 0.000000e+00 : f32
    %592 = vector.broadcast %cst_167 : f32 to vector<8x128xf32>
    %593 = arith.cmpf oeq, %591, %592 : vector<8x128xf32>
    %cst_168 = arith.constant 1.000000e+00 : f32
    %594 = vector.broadcast %cst_168 : f32 to vector<8x128xf32>
    %595 = arith.select %593, %594, %591 : vector<8x128xi1>, vector<8x128xf32>
    %596 = tpu.reciprocal %595 {approx = true} : vector<8x128xf32> -> vector<8x128xf32>
    %597 = arith.mulf %583, %596 : vector<8x128xf32>
    %598 = arith.mulf %597, %574 : vector<8x128xf32>
    %599 = arith.subf %533, %598 : vector<8x128xf32>
    %600 = arith.addf %571, %598 : vector<8x128xf32>
    %601 = arith.minimumf %570, %599 : vector<8x128xf32>
    %602 = arith.minimumf %601, %600 : vector<8x128xf32>
    %603 = arith.maximumf %570, %599 : vector<8x128xf32>
    %604 = arith.maximumf %603, %600 : vector<8x128xf32>
    %605 = arith.addf %570, %599 : vector<8x128xf32>
    %606 = arith.addf %605, %600 : vector<8x128xf32>
    %607 = arith.subf %606, %602 : vector<8x128xf32>
    %608 = arith.subf %607, %604 : vector<8x128xf32>
    %609 = arith.subf %40, %31 : vector<8x128xf32>
    %cst_169 = arith.constant 2.000000e+00 : f32
    %610 = vector.broadcast %cst_169 : f32 to vector<8x128xf32>
    %611 = arith.mulf %610, %34 : vector<8x128xf32>
    %cst_170 = arith.constant 0.000000e+00 : f32
    %612 = vector.broadcast %cst_170 : f32 to vector<8x128xf32>
    %613 = arith.cmpf oge, %609, %612 : vector<8x128xf32>
    %cst_171 = arith.constant 1.000000e+00 : f32
    %cst_172 = arith.constant -1.000000e+00 : f32
    %614 = vector.broadcast %cst_171 : f32 to vector<8x128xf32>
    %615 = vector.broadcast %cst_172 : f32 to vector<8x128xf32>
    %616 = arith.select %613, %614, %615 : vector<8x128xi1>, vector<8x128xf32>
    %617 = arith.mulf %611, %616 : vector<8x128xf32>
    %618 = math.absf %609 : vector<8x128xf32>
    %619 = arith.mulf %609, %609 : vector<8x128xf32>
    %620 = arith.mulf %34, %34 : vector<8x128xf32>
    %cst_173 = arith.constant 4.000000e+00 : f32
    %621 = vector.broadcast %cst_173 : f32 to vector<8x128xf32>
    %622 = arith.mulf %621, %620 : vector<8x128xf32>
    %623 = arith.addf %619, %622 : vector<8x128xf32>
    %624 = math.sqrt %623 : vector<8x128xf32>
    %625 = arith.addf %618, %624 : vector<8x128xf32>
    %cst_174 = arith.constant 0.000000e+00 : f32
    %626 = vector.broadcast %cst_174 : f32 to vector<8x128xf32>
    %627 = arith.cmpf oeq, %625, %626 : vector<8x128xf32>
    %cst_175 = arith.constant 1.000000e+00 : f32
    %628 = vector.broadcast %cst_175 : f32 to vector<8x128xf32>
    %629 = arith.select %627, %628, %625 : vector<8x128xi1>, vector<8x128xf32>
    %630 = tpu.reciprocal %629 {approx = true} : vector<8x128xf32> -> vector<8x128xf32>
    %631 = arith.mulf %617, %630 : vector<8x128xf32>
    %632 = arith.mulf %631, %631 : vector<8x128xf32>
    %cst_176 = arith.constant 1.000000e+00 : f32
    %633 = vector.broadcast %cst_176 : f32 to vector<8x128xf32>
    %634 = arith.addf %633, %632 : vector<8x128xf32>
    %635 = math.rsqrt %634 : vector<8x128xf32>
    %636 = arith.mulf %631, %635 : vector<8x128xf32>
    %637 = arith.mulf %631, %34 : vector<8x128xf32>
    %638 = arith.subf %31, %637 : vector<8x128xf32>
    %639 = arith.addf %40, %637 : vector<8x128xf32>
    %cst_177 = arith.constant 0.000000e+00 : f32
    %640 = vector.broadcast %cst_177 : f32 to vector<8x128xf32>
    %641 = arith.mulf %635, %37 : vector<8x128xf32>
    %642 = arith.mulf %636, %43 : vector<8x128xf32>
    %643 = arith.subf %641, %642 : vector<8x128xf32>
    %644 = arith.mulf %636, %37 : vector<8x128xf32>
    %645 = arith.mulf %635, %43 : vector<8x128xf32>
    %646 = arith.addf %644, %645 : vector<8x128xf32>
    %647 = arith.subf %46, %638 : vector<8x128xf32>
    %cst_178 = arith.constant 2.000000e+00 : f32
    %648 = vector.broadcast %cst_178 : f32 to vector<8x128xf32>
    %649 = arith.mulf %648, %643 : vector<8x128xf32>
    %cst_179 = arith.constant 0.000000e+00 : f32
    %650 = vector.broadcast %cst_179 : f32 to vector<8x128xf32>
    %651 = arith.cmpf oge, %647, %650 : vector<8x128xf32>
    %cst_180 = arith.constant 1.000000e+00 : f32
    %cst_181 = arith.constant -1.000000e+00 : f32
    %652 = vector.broadcast %cst_180 : f32 to vector<8x128xf32>
    %653 = vector.broadcast %cst_181 : f32 to vector<8x128xf32>
    %654 = arith.select %651, %652, %653 : vector<8x128xi1>, vector<8x128xf32>
    %655 = arith.mulf %649, %654 : vector<8x128xf32>
    %656 = math.absf %647 : vector<8x128xf32>
    %657 = arith.mulf %647, %647 : vector<8x128xf32>
    %658 = arith.mulf %643, %643 : vector<8x128xf32>
    %cst_182 = arith.constant 4.000000e+00 : f32
    %659 = vector.broadcast %cst_182 : f32 to vector<8x128xf32>
    %660 = arith.mulf %659, %658 : vector<8x128xf32>
    %661 = arith.addf %657, %660 : vector<8x128xf32>
    %662 = math.sqrt %661 : vector<8x128xf32>
    %663 = arith.addf %656, %662 : vector<8x128xf32>
    %cst_183 = arith.constant 0.000000e+00 : f32
    %664 = vector.broadcast %cst_183 : f32 to vector<8x128xf32>
    %665 = arith.cmpf oeq, %663, %664 : vector<8x128xf32>
    %cst_184 = arith.constant 1.000000e+00 : f32
    %666 = vector.broadcast %cst_184 : f32 to vector<8x128xf32>
    %667 = arith.select %665, %666, %663 : vector<8x128xi1>, vector<8x128xf32>
    %668 = tpu.reciprocal %667 {approx = true} : vector<8x128xf32> -> vector<8x128xf32>
    %669 = arith.mulf %655, %668 : vector<8x128xf32>
    %670 = arith.mulf %669, %669 : vector<8x128xf32>
    %cst_185 = arith.constant 1.000000e+00 : f32
    %671 = vector.broadcast %cst_185 : f32 to vector<8x128xf32>
    %672 = arith.addf %671, %670 : vector<8x128xf32>
    %673 = math.rsqrt %672 : vector<8x128xf32>
    %674 = arith.mulf %669, %673 : vector<8x128xf32>
    %675 = arith.mulf %669, %643 : vector<8x128xf32>
    %676 = arith.subf %638, %675 : vector<8x128xf32>
    %677 = arith.addf %46, %675 : vector<8x128xf32>
    %cst_186 = arith.constant 0.000000e+00 : f32
    %678 = vector.broadcast %cst_186 : f32 to vector<8x128xf32>
    %679 = arith.mulf %673, %640 : vector<8x128xf32>
    %680 = arith.mulf %674, %646 : vector<8x128xf32>
    %681 = arith.subf %679, %680 : vector<8x128xf32>
    %682 = arith.mulf %674, %640 : vector<8x128xf32>
    %683 = arith.mulf %673, %646 : vector<8x128xf32>
    %684 = arith.addf %682, %683 : vector<8x128xf32>
    %685 = arith.subf %677, %639 : vector<8x128xf32>
    %cst_187 = arith.constant 2.000000e+00 : f32
    %686 = vector.broadcast %cst_187 : f32 to vector<8x128xf32>
    %687 = arith.mulf %686, %684 : vector<8x128xf32>
    %cst_188 = arith.constant 0.000000e+00 : f32
    %688 = vector.broadcast %cst_188 : f32 to vector<8x128xf32>
    %689 = arith.cmpf oge, %685, %688 : vector<8x128xf32>
    %cst_189 = arith.constant 1.000000e+00 : f32
    %cst_190 = arith.constant -1.000000e+00 : f32
    %690 = vector.broadcast %cst_189 : f32 to vector<8x128xf32>
    %691 = vector.broadcast %cst_190 : f32 to vector<8x128xf32>
    %692 = arith.select %689, %690, %691 : vector<8x128xi1>, vector<8x128xf32>
    %693 = arith.mulf %687, %692 : vector<8x128xf32>
    %694 = math.absf %685 : vector<8x128xf32>
    %695 = arith.mulf %685, %685 : vector<8x128xf32>
    %696 = arith.mulf %684, %684 : vector<8x128xf32>
    %cst_191 = arith.constant 4.000000e+00 : f32
    %697 = vector.broadcast %cst_191 : f32 to vector<8x128xf32>
    %698 = arith.mulf %697, %696 : vector<8x128xf32>
    %699 = arith.addf %695, %698 : vector<8x128xf32>
    %700 = math.sqrt %699 : vector<8x128xf32>
    %701 = arith.addf %694, %700 : vector<8x128xf32>
    %cst_192 = arith.constant 0.000000e+00 : f32
    %702 = vector.broadcast %cst_192 : f32 to vector<8x128xf32>
    %703 = arith.cmpf oeq, %701, %702 : vector<8x128xf32>
    %cst_193 = arith.constant 1.000000e+00 : f32
    %704 = vector.broadcast %cst_193 : f32 to vector<8x128xf32>
    %705 = arith.select %703, %704, %701 : vector<8x128xi1>, vector<8x128xf32>
    %706 = tpu.reciprocal %705 {approx = true} : vector<8x128xf32> -> vector<8x128xf32>
    %707 = arith.mulf %693, %706 : vector<8x128xf32>
    %708 = arith.mulf %707, %707 : vector<8x128xf32>
    %cst_194 = arith.constant 1.000000e+00 : f32
    %709 = vector.broadcast %cst_194 : f32 to vector<8x128xf32>
    %710 = arith.addf %709, %708 : vector<8x128xf32>
    %711 = math.rsqrt %710 : vector<8x128xf32>
    %712 = arith.mulf %707, %711 : vector<8x128xf32>
    %713 = arith.mulf %707, %684 : vector<8x128xf32>
    %714 = arith.subf %639, %713 : vector<8x128xf32>
    %715 = arith.addf %677, %713 : vector<8x128xf32>
    %cst_195 = arith.constant 0.000000e+00 : f32
    %716 = vector.broadcast %cst_195 : f32 to vector<8x128xf32>
    %717 = arith.mulf %711, %681 : vector<8x128xf32>
    %718 = arith.mulf %712, %678 : vector<8x128xf32>
    %719 = arith.subf %717, %718 : vector<8x128xf32>
    %720 = arith.mulf %712, %681 : vector<8x128xf32>
    %721 = arith.mulf %711, %678 : vector<8x128xf32>
    %722 = arith.addf %720, %721 : vector<8x128xf32>
    %723 = arith.subf %714, %676 : vector<8x128xf32>
    %cst_196 = arith.constant 2.000000e+00 : f32
    %724 = vector.broadcast %cst_196 : f32 to vector<8x128xf32>
    %725 = arith.mulf %724, %719 : vector<8x128xf32>
    %cst_197 = arith.constant 0.000000e+00 : f32
    %726 = vector.broadcast %cst_197 : f32 to vector<8x128xf32>
    %727 = arith.cmpf oge, %723, %726 : vector<8x128xf32>
    %cst_198 = arith.constant 1.000000e+00 : f32
    %cst_199 = arith.constant -1.000000e+00 : f32
    %728 = vector.broadcast %cst_198 : f32 to vector<8x128xf32>
    %729 = vector.broadcast %cst_199 : f32 to vector<8x128xf32>
    %730 = arith.select %727, %728, %729 : vector<8x128xi1>, vector<8x128xf32>
    %731 = arith.mulf %725, %730 : vector<8x128xf32>
    %732 = math.absf %723 : vector<8x128xf32>
    %733 = arith.mulf %723, %723 : vector<8x128xf32>
    %734 = arith.mulf %719, %719 : vector<8x128xf32>
    %cst_200 = arith.constant 4.000000e+00 : f32
    %735 = vector.broadcast %cst_200 : f32 to vector<8x128xf32>
    %736 = arith.mulf %735, %734 : vector<8x128xf32>
    %737 = arith.addf %733, %736 : vector<8x128xf32>
    %738 = math.sqrt %737 : vector<8x128xf32>
    %739 = arith.addf %732, %738 : vector<8x128xf32>
    %cst_201 = arith.constant 0.000000e+00 : f32
    %740 = vector.broadcast %cst_201 : f32 to vector<8x128xf32>
    %741 = arith.cmpf oeq, %739, %740 : vector<8x128xf32>
    %cst_202 = arith.constant 1.000000e+00 : f32
    %742 = vector.broadcast %cst_202 : f32 to vector<8x128xf32>
    %743 = arith.select %741, %742, %739 : vector<8x128xi1>, vector<8x128xf32>
    %744 = tpu.reciprocal %743 {approx = true} : vector<8x128xf32> -> vector<8x128xf32>
    %745 = arith.mulf %731, %744 : vector<8x128xf32>
    %746 = arith.mulf %745, %745 : vector<8x128xf32>
    %cst_203 = arith.constant 1.000000e+00 : f32
    %747 = vector.broadcast %cst_203 : f32 to vector<8x128xf32>
    %748 = arith.addf %747, %746 : vector<8x128xf32>
    %749 = math.rsqrt %748 : vector<8x128xf32>
    %750 = arith.mulf %745, %749 : vector<8x128xf32>
    %751 = arith.mulf %745, %719 : vector<8x128xf32>
    %752 = arith.subf %676, %751 : vector<8x128xf32>
    %753 = arith.addf %714, %751 : vector<8x128xf32>
    %cst_204 = arith.constant 0.000000e+00 : f32
    %754 = vector.broadcast %cst_204 : f32 to vector<8x128xf32>
    %755 = arith.mulf %749, %722 : vector<8x128xf32>
    %756 = arith.mulf %750, %716 : vector<8x128xf32>
    %757 = arith.subf %755, %756 : vector<8x128xf32>
    %758 = arith.mulf %750, %722 : vector<8x128xf32>
    %759 = arith.mulf %749, %716 : vector<8x128xf32>
    %760 = arith.addf %758, %759 : vector<8x128xf32>
    %761 = arith.subf %715, %752 : vector<8x128xf32>
    %cst_205 = arith.constant 2.000000e+00 : f32
    %762 = vector.broadcast %cst_205 : f32 to vector<8x128xf32>
    %763 = arith.mulf %762, %757 : vector<8x128xf32>
    %cst_206 = arith.constant 0.000000e+00 : f32
    %764 = vector.broadcast %cst_206 : f32 to vector<8x128xf32>
    %765 = arith.cmpf oge, %761, %764 : vector<8x128xf32>
    %cst_207 = arith.constant 1.000000e+00 : f32
    %cst_208 = arith.constant -1.000000e+00 : f32
    %766 = vector.broadcast %cst_207 : f32 to vector<8x128xf32>
    %767 = vector.broadcast %cst_208 : f32 to vector<8x128xf32>
    %768 = arith.select %765, %766, %767 : vector<8x128xi1>, vector<8x128xf32>
    %769 = arith.mulf %763, %768 : vector<8x128xf32>
    %770 = math.absf %761 : vector<8x128xf32>
    %771 = arith.mulf %761, %761 : vector<8x128xf32>
    %772 = arith.mulf %757, %757 : vector<8x128xf32>
    %cst_209 = arith.constant 4.000000e+00 : f32
    %773 = vector.broadcast %cst_209 : f32 to vector<8x128xf32>
    %774 = arith.mulf %773, %772 : vector<8x128xf32>
    %775 = arith.addf %771, %774 : vector<8x128xf32>
    %776 = math.sqrt %775 : vector<8x128xf32>
    %777 = arith.addf %770, %776 : vector<8x128xf32>
    %cst_210 = arith.constant 0.000000e+00 : f32
    %778 = vector.broadcast %cst_210 : f32 to vector<8x128xf32>
    %779 = arith.cmpf oeq, %777, %778 : vector<8x128xf32>
    %cst_211 = arith.constant 1.000000e+00 : f32
    %780 = vector.broadcast %cst_211 : f32 to vector<8x128xf32>
    %781 = arith.select %779, %780, %777 : vector<8x128xi1>, vector<8x128xf32>
    %782 = tpu.reciprocal %781 {approx = true} : vector<8x128xf32> -> vector<8x128xf32>
    %783 = arith.mulf %769, %782 : vector<8x128xf32>
    %784 = arith.mulf %783, %783 : vector<8x128xf32>
    %cst_212 = arith.constant 1.000000e+00 : f32
    %785 = vector.broadcast %cst_212 : f32 to vector<8x128xf32>
    %786 = arith.addf %785, %784 : vector<8x128xf32>
    %787 = math.rsqrt %786 : vector<8x128xf32>
    %788 = arith.mulf %783, %787 : vector<8x128xf32>
    %789 = arith.mulf %783, %757 : vector<8x128xf32>
    %790 = arith.subf %752, %789 : vector<8x128xf32>
    %791 = arith.addf %715, %789 : vector<8x128xf32>
    %cst_213 = arith.constant 0.000000e+00 : f32
    %792 = vector.broadcast %cst_213 : f32 to vector<8x128xf32>
    %793 = arith.mulf %787, %754 : vector<8x128xf32>
    %794 = arith.mulf %788, %760 : vector<8x128xf32>
    %795 = arith.subf %793, %794 : vector<8x128xf32>
    %796 = arith.mulf %788, %754 : vector<8x128xf32>
    %797 = arith.mulf %787, %760 : vector<8x128xf32>
    %798 = arith.addf %796, %797 : vector<8x128xf32>
    %799 = arith.subf %791, %753 : vector<8x128xf32>
    %cst_214 = arith.constant 2.000000e+00 : f32
    %800 = vector.broadcast %cst_214 : f32 to vector<8x128xf32>
    %801 = arith.mulf %800, %798 : vector<8x128xf32>
    %cst_215 = arith.constant 0.000000e+00 : f32
    %802 = vector.broadcast %cst_215 : f32 to vector<8x128xf32>
    %803 = arith.cmpf oge, %799, %802 : vector<8x128xf32>
    %cst_216 = arith.constant 1.000000e+00 : f32
    %cst_217 = arith.constant -1.000000e+00 : f32
    %804 = vector.broadcast %cst_216 : f32 to vector<8x128xf32>
    %805 = vector.broadcast %cst_217 : f32 to vector<8x128xf32>
    %806 = arith.select %803, %804, %805 : vector<8x128xi1>, vector<8x128xf32>
    %807 = arith.mulf %801, %806 : vector<8x128xf32>
    %808 = math.absf %799 : vector<8x128xf32>
    %809 = arith.mulf %799, %799 : vector<8x128xf32>
    %810 = arith.mulf %798, %798 : vector<8x128xf32>
    %cst_218 = arith.constant 4.000000e+00 : f32
    %811 = vector.broadcast %cst_218 : f32 to vector<8x128xf32>
    %812 = arith.mulf %811, %810 : vector<8x128xf32>
    %813 = arith.addf %809, %812 : vector<8x128xf32>
    %814 = math.sqrt %813 : vector<8x128xf32>
    %815 = arith.addf %808, %814 : vector<8x128xf32>
    %cst_219 = arith.constant 0.000000e+00 : f32
    %816 = vector.broadcast %cst_219 : f32 to vector<8x128xf32>
    %817 = arith.cmpf oeq, %815, %816 : vector<8x128xf32>
    %cst_220 = arith.constant 1.000000e+00 : f32
    %818 = vector.broadcast %cst_220 : f32 to vector<8x128xf32>
    %819 = arith.select %817, %818, %815 : vector<8x128xi1>, vector<8x128xf32>
    %820 = tpu.reciprocal %819 {approx = true} : vector<8x128xf32> -> vector<8x128xf32>
    %821 = arith.mulf %807, %820 : vector<8x128xf32>
    %822 = arith.mulf %821, %821 : vector<8x128xf32>
    %cst_221 = arith.constant 1.000000e+00 : f32
    %823 = vector.broadcast %cst_221 : f32 to vector<8x128xf32>
    %824 = arith.addf %823, %822 : vector<8x128xf32>
    %825 = math.rsqrt %824 : vector<8x128xf32>
    %826 = arith.mulf %821, %825 : vector<8x128xf32>
    %827 = arith.mulf %821, %798 : vector<8x128xf32>
    %828 = arith.subf %753, %827 : vector<8x128xf32>
    %829 = arith.addf %791, %827 : vector<8x128xf32>
    %cst_222 = arith.constant 0.000000e+00 : f32
    %830 = vector.broadcast %cst_222 : f32 to vector<8x128xf32>
    %831 = arith.mulf %825, %795 : vector<8x128xf32>
    %832 = arith.mulf %826, %792 : vector<8x128xf32>
    %833 = arith.subf %831, %832 : vector<8x128xf32>
    %834 = arith.mulf %826, %795 : vector<8x128xf32>
    %835 = arith.mulf %825, %792 : vector<8x128xf32>
    %836 = arith.addf %834, %835 : vector<8x128xf32>
    %837 = arith.subf %828, %790 : vector<8x128xf32>
    %cst_223 = arith.constant 2.000000e+00 : f32
    %838 = vector.broadcast %cst_223 : f32 to vector<8x128xf32>
    %839 = arith.mulf %838, %833 : vector<8x128xf32>
    %cst_224 = arith.constant 0.000000e+00 : f32
    %840 = vector.broadcast %cst_224 : f32 to vector<8x128xf32>
    %841 = arith.cmpf oge, %837, %840 : vector<8x128xf32>
    %cst_225 = arith.constant 1.000000e+00 : f32
    %cst_226 = arith.constant -1.000000e+00 : f32
    %842 = vector.broadcast %cst_225 : f32 to vector<8x128xf32>
    %843 = vector.broadcast %cst_226 : f32 to vector<8x128xf32>
    %844 = arith.select %841, %842, %843 : vector<8x128xi1>, vector<8x128xf32>
    %845 = arith.mulf %839, %844 : vector<8x128xf32>
    %846 = math.absf %837 : vector<8x128xf32>
    %847 = arith.mulf %837, %837 : vector<8x128xf32>
    %848 = arith.mulf %833, %833 : vector<8x128xf32>
    %cst_227 = arith.constant 4.000000e+00 : f32
    %849 = vector.broadcast %cst_227 : f32 to vector<8x128xf32>
    %850 = arith.mulf %849, %848 : vector<8x128xf32>
    %851 = arith.addf %847, %850 : vector<8x128xf32>
    %852 = math.sqrt %851 : vector<8x128xf32>
    %853 = arith.addf %846, %852 : vector<8x128xf32>
    %cst_228 = arith.constant 0.000000e+00 : f32
    %854 = vector.broadcast %cst_228 : f32 to vector<8x128xf32>
    %855 = arith.cmpf oeq, %853, %854 : vector<8x128xf32>
    %cst_229 = arith.constant 1.000000e+00 : f32
    %856 = vector.broadcast %cst_229 : f32 to vector<8x128xf32>
    %857 = arith.select %855, %856, %853 : vector<8x128xi1>, vector<8x128xf32>
    %858 = tpu.reciprocal %857 {approx = true} : vector<8x128xf32> -> vector<8x128xf32>
    %859 = arith.mulf %845, %858 : vector<8x128xf32>
    %860 = arith.mulf %859, %859 : vector<8x128xf32>
    %cst_230 = arith.constant 1.000000e+00 : f32
    %861 = vector.broadcast %cst_230 : f32 to vector<8x128xf32>
    %862 = arith.addf %861, %860 : vector<8x128xf32>
    %863 = math.rsqrt %862 : vector<8x128xf32>
    %864 = arith.mulf %859, %863 : vector<8x128xf32>
    %865 = arith.mulf %859, %833 : vector<8x128xf32>
    %866 = arith.subf %790, %865 : vector<8x128xf32>
    %867 = arith.addf %828, %865 : vector<8x128xf32>
    %cst_231 = arith.constant 0.000000e+00 : f32
    %868 = vector.broadcast %cst_231 : f32 to vector<8x128xf32>
    %869 = arith.mulf %863, %836 : vector<8x128xf32>
    %870 = arith.mulf %864, %830 : vector<8x128xf32>
    %871 = arith.subf %869, %870 : vector<8x128xf32>
    %872 = arith.mulf %864, %836 : vector<8x128xf32>
    %873 = arith.mulf %863, %830 : vector<8x128xf32>
    %874 = arith.addf %872, %873 : vector<8x128xf32>
    %875 = arith.subf %829, %866 : vector<8x128xf32>
    %cst_232 = arith.constant 2.000000e+00 : f32
    %876 = vector.broadcast %cst_232 : f32 to vector<8x128xf32>
    %877 = arith.mulf %876, %871 : vector<8x128xf32>
    %cst_233 = arith.constant 0.000000e+00 : f32
    %878 = vector.broadcast %cst_233 : f32 to vector<8x128xf32>
    %879 = arith.cmpf oge, %875, %878 : vector<8x128xf32>
    %cst_234 = arith.constant 1.000000e+00 : f32
    %cst_235 = arith.constant -1.000000e+00 : f32
    %880 = vector.broadcast %cst_234 : f32 to vector<8x128xf32>
    %881 = vector.broadcast %cst_235 : f32 to vector<8x128xf32>
    %882 = arith.select %879, %880, %881 : vector<8x128xi1>, vector<8x128xf32>
    %883 = arith.mulf %877, %882 : vector<8x128xf32>
    %884 = math.absf %875 : vector<8x128xf32>
    %885 = arith.mulf %875, %875 : vector<8x128xf32>
    %886 = arith.mulf %871, %871 : vector<8x128xf32>
    %cst_236 = arith.constant 4.000000e+00 : f32
    %887 = vector.broadcast %cst_236 : f32 to vector<8x128xf32>
    %888 = arith.mulf %887, %886 : vector<8x128xf32>
    %889 = arith.addf %885, %888 : vector<8x128xf32>
    %890 = math.sqrt %889 : vector<8x128xf32>
    %891 = arith.addf %884, %890 : vector<8x128xf32>
    %cst_237 = arith.constant 0.000000e+00 : f32
    %892 = vector.broadcast %cst_237 : f32 to vector<8x128xf32>
    %893 = arith.cmpf oeq, %891, %892 : vector<8x128xf32>
    %cst_238 = arith.constant 1.000000e+00 : f32
    %894 = vector.broadcast %cst_238 : f32 to vector<8x128xf32>
    %895 = arith.select %893, %894, %891 : vector<8x128xi1>, vector<8x128xf32>
    %896 = tpu.reciprocal %895 {approx = true} : vector<8x128xf32> -> vector<8x128xf32>
    %897 = arith.mulf %883, %896 : vector<8x128xf32>
    %898 = arith.mulf %897, %897 : vector<8x128xf32>
    %cst_239 = arith.constant 1.000000e+00 : f32
    %899 = vector.broadcast %cst_239 : f32 to vector<8x128xf32>
    %900 = arith.addf %899, %898 : vector<8x128xf32>
    %901 = math.rsqrt %900 : vector<8x128xf32>
    %902 = arith.mulf %897, %901 : vector<8x128xf32>
    %903 = arith.mulf %897, %871 : vector<8x128xf32>
    %904 = arith.subf %866, %903 : vector<8x128xf32>
    %905 = arith.addf %829, %903 : vector<8x128xf32>
    %cst_240 = arith.constant 0.000000e+00 : f32
    %906 = vector.broadcast %cst_240 : f32 to vector<8x128xf32>
    %907 = arith.mulf %901, %868 : vector<8x128xf32>
    %908 = arith.mulf %902, %874 : vector<8x128xf32>
    %909 = arith.subf %907, %908 : vector<8x128xf32>
    %910 = arith.mulf %902, %868 : vector<8x128xf32>
    %911 = arith.mulf %901, %874 : vector<8x128xf32>
    %912 = arith.addf %910, %911 : vector<8x128xf32>
    %913 = arith.subf %905, %867 : vector<8x128xf32>
    %cst_241 = arith.constant 2.000000e+00 : f32
    %914 = vector.broadcast %cst_241 : f32 to vector<8x128xf32>
    %915 = arith.mulf %914, %912 : vector<8x128xf32>
    %cst_242 = arith.constant 0.000000e+00 : f32
    %916 = vector.broadcast %cst_242 : f32 to vector<8x128xf32>
    %917 = arith.cmpf oge, %913, %916 : vector<8x128xf32>
    %cst_243 = arith.constant 1.000000e+00 : f32
    %cst_244 = arith.constant -1.000000e+00 : f32
    %918 = vector.broadcast %cst_243 : f32 to vector<8x128xf32>
    %919 = vector.broadcast %cst_244 : f32 to vector<8x128xf32>
    %920 = arith.select %917, %918, %919 : vector<8x128xi1>, vector<8x128xf32>
    %921 = arith.mulf %915, %920 : vector<8x128xf32>
    %922 = math.absf %913 : vector<8x128xf32>
    %923 = arith.mulf %913, %913 : vector<8x128xf32>
    %924 = arith.mulf %912, %912 : vector<8x128xf32>
    %cst_245 = arith.constant 4.000000e+00 : f32
    %925 = vector.broadcast %cst_245 : f32 to vector<8x128xf32>
    %926 = arith.mulf %925, %924 : vector<8x128xf32>
    %927 = arith.addf %923, %926 : vector<8x128xf32>
    %928 = math.sqrt %927 : vector<8x128xf32>
    %929 = arith.addf %922, %928 : vector<8x128xf32>
    %cst_246 = arith.constant 0.000000e+00 : f32
    %930 = vector.broadcast %cst_246 : f32 to vector<8x128xf32>
    %931 = arith.cmpf oeq, %929, %930 : vector<8x128xf32>
    %cst_247 = arith.constant 1.000000e+00 : f32
    %932 = vector.broadcast %cst_247 : f32 to vector<8x128xf32>
    %933 = arith.select %931, %932, %929 : vector<8x128xi1>, vector<8x128xf32>
    %934 = tpu.reciprocal %933 {approx = true} : vector<8x128xf32> -> vector<8x128xf32>
    %935 = arith.mulf %921, %934 : vector<8x128xf32>
    %936 = arith.mulf %935, %935 : vector<8x128xf32>
    %cst_248 = arith.constant 1.000000e+00 : f32
    %937 = vector.broadcast %cst_248 : f32 to vector<8x128xf32>
    %938 = arith.addf %937, %936 : vector<8x128xf32>
    %939 = math.rsqrt %938 : vector<8x128xf32>
    %940 = arith.mulf %935, %939 : vector<8x128xf32>
    %941 = arith.mulf %935, %912 : vector<8x128xf32>
    %942 = arith.subf %867, %941 : vector<8x128xf32>
    %943 = arith.addf %905, %941 : vector<8x128xf32>
    %cst_249 = arith.constant 0.000000e+00 : f32
    %944 = vector.broadcast %cst_249 : f32 to vector<8x128xf32>
    %945 = arith.mulf %939, %909 : vector<8x128xf32>
    %946 = arith.mulf %940, %906 : vector<8x128xf32>
    %947 = arith.subf %945, %946 : vector<8x128xf32>
    %948 = arith.mulf %940, %909 : vector<8x128xf32>
    %949 = arith.mulf %939, %906 : vector<8x128xf32>
    %950 = arith.addf %948, %949 : vector<8x128xf32>
    %951 = arith.subf %942, %904 : vector<8x128xf32>
    %cst_250 = arith.constant 2.000000e+00 : f32
    %952 = vector.broadcast %cst_250 : f32 to vector<8x128xf32>
    %953 = arith.mulf %952, %947 : vector<8x128xf32>
    %cst_251 = arith.constant 0.000000e+00 : f32
    %954 = vector.broadcast %cst_251 : f32 to vector<8x128xf32>
    %955 = arith.cmpf oge, %951, %954 : vector<8x128xf32>
    %cst_252 = arith.constant 1.000000e+00 : f32
    %cst_253 = arith.constant -1.000000e+00 : f32
    %956 = vector.broadcast %cst_252 : f32 to vector<8x128xf32>
    %957 = vector.broadcast %cst_253 : f32 to vector<8x128xf32>
    %958 = arith.select %955, %956, %957 : vector<8x128xi1>, vector<8x128xf32>
    %959 = arith.mulf %953, %958 : vector<8x128xf32>
    %960 = math.absf %951 : vector<8x128xf32>
    %961 = arith.mulf %951, %951 : vector<8x128xf32>
    %962 = arith.mulf %947, %947 : vector<8x128xf32>
    %cst_254 = arith.constant 4.000000e+00 : f32
    %963 = vector.broadcast %cst_254 : f32 to vector<8x128xf32>
    %964 = arith.mulf %963, %962 : vector<8x128xf32>
    %965 = arith.addf %961, %964 : vector<8x128xf32>
    %966 = math.sqrt %965 : vector<8x128xf32>
    %967 = arith.addf %960, %966 : vector<8x128xf32>
    %cst_255 = arith.constant 0.000000e+00 : f32
    %968 = vector.broadcast %cst_255 : f32 to vector<8x128xf32>
    %969 = arith.cmpf oeq, %967, %968 : vector<8x128xf32>
    %cst_256 = arith.constant 1.000000e+00 : f32
    %970 = vector.broadcast %cst_256 : f32 to vector<8x128xf32>
    %971 = arith.select %969, %970, %967 : vector<8x128xi1>, vector<8x128xf32>
    %972 = tpu.reciprocal %971 {approx = true} : vector<8x128xf32> -> vector<8x128xf32>
    %973 = arith.mulf %959, %972 : vector<8x128xf32>
    %974 = arith.mulf %973, %973 : vector<8x128xf32>
    %cst_257 = arith.constant 1.000000e+00 : f32
    %975 = vector.broadcast %cst_257 : f32 to vector<8x128xf32>
    %976 = arith.addf %975, %974 : vector<8x128xf32>
    %977 = math.rsqrt %976 : vector<8x128xf32>
    %978 = arith.mulf %973, %977 : vector<8x128xf32>
    %979 = arith.mulf %973, %947 : vector<8x128xf32>
    %980 = arith.subf %904, %979 : vector<8x128xf32>
    %981 = arith.addf %942, %979 : vector<8x128xf32>
    %cst_258 = arith.constant 0.000000e+00 : f32
    %982 = vector.broadcast %cst_258 : f32 to vector<8x128xf32>
    %983 = arith.mulf %977, %950 : vector<8x128xf32>
    %984 = arith.mulf %978, %944 : vector<8x128xf32>
    %985 = arith.subf %983, %984 : vector<8x128xf32>
    %986 = arith.mulf %978, %950 : vector<8x128xf32>
    %987 = arith.mulf %977, %944 : vector<8x128xf32>
    %988 = arith.addf %986, %987 : vector<8x128xf32>
    %989 = arith.subf %943, %980 : vector<8x128xf32>
    %cst_259 = arith.constant 2.000000e+00 : f32
    %990 = vector.broadcast %cst_259 : f32 to vector<8x128xf32>
    %991 = arith.mulf %990, %985 : vector<8x128xf32>
    %cst_260 = arith.constant 0.000000e+00 : f32
    %992 = vector.broadcast %cst_260 : f32 to vector<8x128xf32>
    %993 = arith.cmpf oge, %989, %992 : vector<8x128xf32>
    %cst_261 = arith.constant 1.000000e+00 : f32
    %cst_262 = arith.constant -1.000000e+00 : f32
    %994 = vector.broadcast %cst_261 : f32 to vector<8x128xf32>
    %995 = vector.broadcast %cst_262 : f32 to vector<8x128xf32>
    %996 = arith.select %993, %994, %995 : vector<8x128xi1>, vector<8x128xf32>
    %997 = arith.mulf %991, %996 : vector<8x128xf32>
    %998 = math.absf %989 : vector<8x128xf32>
    %999 = arith.mulf %989, %989 : vector<8x128xf32>
    %1000 = arith.mulf %985, %985 : vector<8x128xf32>
    %cst_263 = arith.constant 4.000000e+00 : f32
    %1001 = vector.broadcast %cst_263 : f32 to vector<8x128xf32>
    %1002 = arith.mulf %1001, %1000 : vector<8x128xf32>
    %1003 = arith.addf %999, %1002 : vector<8x128xf32>
    %1004 = math.sqrt %1003 : vector<8x128xf32>
    %1005 = arith.addf %998, %1004 : vector<8x128xf32>
    %cst_264 = arith.constant 0.000000e+00 : f32
    %1006 = vector.broadcast %cst_264 : f32 to vector<8x128xf32>
    %1007 = arith.cmpf oeq, %1005, %1006 : vector<8x128xf32>
    %cst_265 = arith.constant 1.000000e+00 : f32
    %1008 = vector.broadcast %cst_265 : f32 to vector<8x128xf32>
    %1009 = arith.select %1007, %1008, %1005 : vector<8x128xi1>, vector<8x128xf32>
    %1010 = tpu.reciprocal %1009 {approx = true} : vector<8x128xf32> -> vector<8x128xf32>
    %1011 = arith.mulf %997, %1010 : vector<8x128xf32>
    %1012 = arith.mulf %1011, %1011 : vector<8x128xf32>
    %cst_266 = arith.constant 1.000000e+00 : f32
    %1013 = vector.broadcast %cst_266 : f32 to vector<8x128xf32>
    %1014 = arith.addf %1013, %1012 : vector<8x128xf32>
    %1015 = math.rsqrt %1014 : vector<8x128xf32>
    %1016 = arith.mulf %1011, %1015 : vector<8x128xf32>
    %1017 = arith.mulf %1011, %985 : vector<8x128xf32>
    %1018 = arith.subf %980, %1017 : vector<8x128xf32>
    %1019 = arith.addf %943, %1017 : vector<8x128xf32>
    %cst_267 = arith.constant 0.000000e+00 : f32
    %1020 = vector.broadcast %cst_267 : f32 to vector<8x128xf32>
    %1021 = arith.mulf %1015, %982 : vector<8x128xf32>
    %1022 = arith.mulf %1016, %988 : vector<8x128xf32>
    %1023 = arith.subf %1021, %1022 : vector<8x128xf32>
    %1024 = arith.mulf %1016, %982 : vector<8x128xf32>
    %1025 = arith.mulf %1015, %988 : vector<8x128xf32>
    %1026 = arith.addf %1024, %1025 : vector<8x128xf32>
    %1027 = arith.subf %1019, %981 : vector<8x128xf32>
    %cst_268 = arith.constant 2.000000e+00 : f32
    %1028 = vector.broadcast %cst_268 : f32 to vector<8x128xf32>
    %1029 = arith.mulf %1028, %1026 : vector<8x128xf32>
    %cst_269 = arith.constant 0.000000e+00 : f32
    %1030 = vector.broadcast %cst_269 : f32 to vector<8x128xf32>
    %1031 = arith.cmpf oge, %1027, %1030 : vector<8x128xf32>
    %cst_270 = arith.constant 1.000000e+00 : f32
    %cst_271 = arith.constant -1.000000e+00 : f32
    %1032 = vector.broadcast %cst_270 : f32 to vector<8x128xf32>
    %1033 = vector.broadcast %cst_271 : f32 to vector<8x128xf32>
    %1034 = arith.select %1031, %1032, %1033 : vector<8x128xi1>, vector<8x128xf32>
    %1035 = arith.mulf %1029, %1034 : vector<8x128xf32>
    %1036 = math.absf %1027 : vector<8x128xf32>
    %1037 = arith.mulf %1027, %1027 : vector<8x128xf32>
    %1038 = arith.mulf %1026, %1026 : vector<8x128xf32>
    %cst_272 = arith.constant 4.000000e+00 : f32
    %1039 = vector.broadcast %cst_272 : f32 to vector<8x128xf32>
    %1040 = arith.mulf %1039, %1038 : vector<8x128xf32>
    %1041 = arith.addf %1037, %1040 : vector<8x128xf32>
    %1042 = math.sqrt %1041 : vector<8x128xf32>
    %1043 = arith.addf %1036, %1042 : vector<8x128xf32>
    %cst_273 = arith.constant 0.000000e+00 : f32
    %1044 = vector.broadcast %cst_273 : f32 to vector<8x128xf32>
    %1045 = arith.cmpf oeq, %1043, %1044 : vector<8x128xf32>
    %cst_274 = arith.constant 1.000000e+00 : f32
    %1046 = vector.broadcast %cst_274 : f32 to vector<8x128xf32>
    %1047 = arith.select %1045, %1046, %1043 : vector<8x128xi1>, vector<8x128xf32>
    %1048 = tpu.reciprocal %1047 {approx = true} : vector<8x128xf32> -> vector<8x128xf32>
    %1049 = arith.mulf %1035, %1048 : vector<8x128xf32>
    %1050 = arith.mulf %1049, %1049 : vector<8x128xf32>
    %cst_275 = arith.constant 1.000000e+00 : f32
    %1051 = vector.broadcast %cst_275 : f32 to vector<8x128xf32>
    %1052 = arith.addf %1051, %1050 : vector<8x128xf32>
    %1053 = math.rsqrt %1052 : vector<8x128xf32>
    %1054 = arith.mulf %1049, %1053 : vector<8x128xf32>
    %1055 = arith.mulf %1049, %1026 : vector<8x128xf32>
    %1056 = arith.subf %981, %1055 : vector<8x128xf32>
    %1057 = arith.addf %1019, %1055 : vector<8x128xf32>
    %cst_276 = arith.constant 0.000000e+00 : f32
    %1058 = vector.broadcast %cst_276 : f32 to vector<8x128xf32>
    %1059 = arith.mulf %1053, %1023 : vector<8x128xf32>
    %1060 = arith.mulf %1054, %1020 : vector<8x128xf32>
    %1061 = arith.subf %1059, %1060 : vector<8x128xf32>
    %1062 = arith.mulf %1054, %1023 : vector<8x128xf32>
    %1063 = arith.mulf %1053, %1020 : vector<8x128xf32>
    %1064 = arith.addf %1062, %1063 : vector<8x128xf32>
    %1065 = arith.subf %1056, %1018 : vector<8x128xf32>
    %cst_277 = arith.constant 2.000000e+00 : f32
    %1066 = vector.broadcast %cst_277 : f32 to vector<8x128xf32>
    %1067 = arith.mulf %1066, %1061 : vector<8x128xf32>
    %cst_278 = arith.constant 0.000000e+00 : f32
    %1068 = vector.broadcast %cst_278 : f32 to vector<8x128xf32>
    %1069 = arith.cmpf oge, %1065, %1068 : vector<8x128xf32>
    %cst_279 = arith.constant 1.000000e+00 : f32
    %cst_280 = arith.constant -1.000000e+00 : f32
    %1070 = vector.broadcast %cst_279 : f32 to vector<8x128xf32>
    %1071 = vector.broadcast %cst_280 : f32 to vector<8x128xf32>
    %1072 = arith.select %1069, %1070, %1071 : vector<8x128xi1>, vector<8x128xf32>
    %1073 = arith.mulf %1067, %1072 : vector<8x128xf32>
    %1074 = math.absf %1065 : vector<8x128xf32>
    %1075 = arith.mulf %1065, %1065 : vector<8x128xf32>
    %1076 = arith.mulf %1061, %1061 : vector<8x128xf32>
    %cst_281 = arith.constant 4.000000e+00 : f32
    %1077 = vector.broadcast %cst_281 : f32 to vector<8x128xf32>
    %1078 = arith.mulf %1077, %1076 : vector<8x128xf32>
    %1079 = arith.addf %1075, %1078 : vector<8x128xf32>
    %1080 = math.sqrt %1079 : vector<8x128xf32>
    %1081 = arith.addf %1074, %1080 : vector<8x128xf32>
    %cst_282 = arith.constant 0.000000e+00 : f32
    %1082 = vector.broadcast %cst_282 : f32 to vector<8x128xf32>
    %1083 = arith.cmpf oeq, %1081, %1082 : vector<8x128xf32>
    %cst_283 = arith.constant 1.000000e+00 : f32
    %1084 = vector.broadcast %cst_283 : f32 to vector<8x128xf32>
    %1085 = arith.select %1083, %1084, %1081 : vector<8x128xi1>, vector<8x128xf32>
    %1086 = tpu.reciprocal %1085 {approx = true} : vector<8x128xf32> -> vector<8x128xf32>
    %1087 = arith.mulf %1073, %1086 : vector<8x128xf32>
    %1088 = arith.mulf %1087, %1087 : vector<8x128xf32>
    %cst_284 = arith.constant 1.000000e+00 : f32
    %1089 = vector.broadcast %cst_284 : f32 to vector<8x128xf32>
    %1090 = arith.addf %1089, %1088 : vector<8x128xf32>
    %1091 = math.rsqrt %1090 : vector<8x128xf32>
    %1092 = arith.mulf %1087, %1091 : vector<8x128xf32>
    %1093 = arith.mulf %1087, %1061 : vector<8x128xf32>
    %1094 = arith.subf %1018, %1093 : vector<8x128xf32>
    %1095 = arith.addf %1056, %1093 : vector<8x128xf32>
    %cst_285 = arith.constant 0.000000e+00 : f32
    %1096 = vector.broadcast %cst_285 : f32 to vector<8x128xf32>
    %1097 = arith.mulf %1091, %1064 : vector<8x128xf32>
    %1098 = arith.mulf %1092, %1058 : vector<8x128xf32>
    %1099 = arith.subf %1097, %1098 : vector<8x128xf32>
    %1100 = arith.mulf %1092, %1064 : vector<8x128xf32>
    %1101 = arith.mulf %1091, %1058 : vector<8x128xf32>
    %1102 = arith.addf %1100, %1101 : vector<8x128xf32>
    %1103 = arith.subf %1057, %1094 : vector<8x128xf32>
    %cst_286 = arith.constant 2.000000e+00 : f32
    %1104 = vector.broadcast %cst_286 : f32 to vector<8x128xf32>
    %1105 = arith.mulf %1104, %1099 : vector<8x128xf32>
    %cst_287 = arith.constant 0.000000e+00 : f32
    %1106 = vector.broadcast %cst_287 : f32 to vector<8x128xf32>
    %1107 = arith.cmpf oge, %1103, %1106 : vector<8x128xf32>
    %cst_288 = arith.constant 1.000000e+00 : f32
    %cst_289 = arith.constant -1.000000e+00 : f32
    %1108 = vector.broadcast %cst_288 : f32 to vector<8x128xf32>
    %1109 = vector.broadcast %cst_289 : f32 to vector<8x128xf32>
    %1110 = arith.select %1107, %1108, %1109 : vector<8x128xi1>, vector<8x128xf32>
    %1111 = arith.mulf %1105, %1110 : vector<8x128xf32>
    %1112 = math.absf %1103 : vector<8x128xf32>
    %1113 = arith.mulf %1103, %1103 : vector<8x128xf32>
    %1114 = arith.mulf %1099, %1099 : vector<8x128xf32>
    %cst_290 = arith.constant 4.000000e+00 : f32
    %1115 = vector.broadcast %cst_290 : f32 to vector<8x128xf32>
    %1116 = arith.mulf %1115, %1114 : vector<8x128xf32>
    %1117 = arith.addf %1113, %1116 : vector<8x128xf32>
    %1118 = math.sqrt %1117 : vector<8x128xf32>
    %1119 = arith.addf %1112, %1118 : vector<8x128xf32>
    %cst_291 = arith.constant 0.000000e+00 : f32
    %1120 = vector.broadcast %cst_291 : f32 to vector<8x128xf32>
    %1121 = arith.cmpf oeq, %1119, %1120 : vector<8x128xf32>
    %cst_292 = arith.constant 1.000000e+00 : f32
    %1122 = vector.broadcast %cst_292 : f32 to vector<8x128xf32>
    %1123 = arith.select %1121, %1122, %1119 : vector<8x128xi1>, vector<8x128xf32>
    %1124 = tpu.reciprocal %1123 {approx = true} : vector<8x128xf32> -> vector<8x128xf32>
    %1125 = arith.mulf %1111, %1124 : vector<8x128xf32>
    %1126 = arith.mulf %1125, %1125 : vector<8x128xf32>
    %cst_293 = arith.constant 1.000000e+00 : f32
    %1127 = vector.broadcast %cst_293 : f32 to vector<8x128xf32>
    %1128 = arith.addf %1127, %1126 : vector<8x128xf32>
    %1129 = math.rsqrt %1128 : vector<8x128xf32>
    %1130 = arith.mulf %1125, %1129 : vector<8x128xf32>
    %1131 = arith.mulf %1125, %1099 : vector<8x128xf32>
    %1132 = arith.subf %1094, %1131 : vector<8x128xf32>
    %1133 = arith.addf %1057, %1131 : vector<8x128xf32>
    %1134 = arith.mulf %1130, %1096 : vector<8x128xf32>
    %1135 = arith.mulf %1129, %1102 : vector<8x128xf32>
    %1136 = arith.addf %1134, %1135 : vector<8x128xf32>
    %1137 = arith.subf %1133, %1095 : vector<8x128xf32>
    %cst_294 = arith.constant 2.000000e+00 : f32
    %1138 = vector.broadcast %cst_294 : f32 to vector<8x128xf32>
    %1139 = arith.mulf %1138, %1136 : vector<8x128xf32>
    %cst_295 = arith.constant 0.000000e+00 : f32
    %1140 = vector.broadcast %cst_295 : f32 to vector<8x128xf32>
    %1141 = arith.cmpf oge, %1137, %1140 : vector<8x128xf32>
    %cst_296 = arith.constant 1.000000e+00 : f32
    %cst_297 = arith.constant -1.000000e+00 : f32
    %1142 = vector.broadcast %cst_296 : f32 to vector<8x128xf32>
    %1143 = vector.broadcast %cst_297 : f32 to vector<8x128xf32>
    %1144 = arith.select %1141, %1142, %1143 : vector<8x128xi1>, vector<8x128xf32>
    %1145 = arith.mulf %1139, %1144 : vector<8x128xf32>
    %1146 = math.absf %1137 : vector<8x128xf32>
    %1147 = arith.mulf %1137, %1137 : vector<8x128xf32>
    %1148 = arith.mulf %1136, %1136 : vector<8x128xf32>
    %cst_298 = arith.constant 4.000000e+00 : f32
    %1149 = vector.broadcast %cst_298 : f32 to vector<8x128xf32>
    %1150 = arith.mulf %1149, %1148 : vector<8x128xf32>
    %1151 = arith.addf %1147, %1150 : vector<8x128xf32>
    %1152 = math.sqrt %1151 : vector<8x128xf32>
    %1153 = arith.addf %1146, %1152 : vector<8x128xf32>
    %cst_299 = arith.constant 0.000000e+00 : f32
    %1154 = vector.broadcast %cst_299 : f32 to vector<8x128xf32>
    %1155 = arith.cmpf oeq, %1153, %1154 : vector<8x128xf32>
    %cst_300 = arith.constant 1.000000e+00 : f32
    %1156 = vector.broadcast %cst_300 : f32 to vector<8x128xf32>
    %1157 = arith.select %1155, %1156, %1153 : vector<8x128xi1>, vector<8x128xf32>
    %1158 = tpu.reciprocal %1157 {approx = true} : vector<8x128xf32> -> vector<8x128xf32>
    %1159 = arith.mulf %1145, %1158 : vector<8x128xf32>
    %1160 = arith.mulf %1159, %1136 : vector<8x128xf32>
    %1161 = arith.subf %1095, %1160 : vector<8x128xf32>
    %1162 = arith.addf %1133, %1160 : vector<8x128xf32>
    %1163 = arith.minimumf %1132, %1161 : vector<8x128xf32>
    %1164 = arith.minimumf %1163, %1162 : vector<8x128xf32>
    %1165 = arith.maximumf %1132, %1161 : vector<8x128xf32>
    %1166 = arith.maximumf %1165, %1162 : vector<8x128xf32>
    %1167 = arith.addf %1132, %1161 : vector<8x128xf32>
    %1168 = arith.addf %1167, %1162 : vector<8x128xf32>
    %1169 = arith.subf %1168, %1164 : vector<8x128xf32>
    %1170 = arith.subf %1169, %1166 : vector<8x128xf32>
    %1171 = arith.subf %13, %602 : vector<8x128xf32>
    %1172 = arith.subf %22, %602 : vector<8x128xf32>
    %1173 = arith.subf %28, %602 : vector<8x128xf32>
    %1174 = arith.subf %13, %608 : vector<8x128xf32>
    %1175 = arith.subf %22, %608 : vector<8x128xf32>
    %1176 = arith.subf %28, %608 : vector<8x128xf32>
    %1177 = arith.mulf %16, %16 : vector<8x128xf32>
    %1178 = arith.mulf %19, %19 : vector<8x128xf32>
    %1179 = arith.mulf %25, %25 : vector<8x128xf32>
    %1180 = arith.mulf %1171, %1174 : vector<8x128xf32>
    %1181 = arith.addf %1180, %1177 : vector<8x128xf32>
    %1182 = arith.addf %1181, %1178 : vector<8x128xf32>
    %1183 = arith.mulf %1172, %1175 : vector<8x128xf32>
    %1184 = arith.addf %1177, %1183 : vector<8x128xf32>
    %1185 = arith.addf %1184, %1179 : vector<8x128xf32>
    %1186 = arith.addf %1178, %1179 : vector<8x128xf32>
    %1187 = arith.mulf %1173, %1176 : vector<8x128xf32>
    %1188 = arith.addf %1186, %1187 : vector<8x128xf32>
    %1189 = arith.mulf %1171, %16 : vector<8x128xf32>
    %1190 = arith.mulf %16, %1175 : vector<8x128xf32>
    %1191 = arith.addf %1189, %1190 : vector<8x128xf32>
    %1192 = arith.mulf %19, %25 : vector<8x128xf32>
    %1193 = arith.addf %1191, %1192 : vector<8x128xf32>
    %1194 = arith.mulf %1171, %19 : vector<8x128xf32>
    %1195 = arith.mulf %16, %25 : vector<8x128xf32>
    %1196 = arith.addf %1194, %1195 : vector<8x128xf32>
    %1197 = arith.mulf %19, %1176 : vector<8x128xf32>
    %1198 = arith.addf %1196, %1197 : vector<8x128xf32>
    %1199 = arith.mulf %16, %19 : vector<8x128xf32>
    %1200 = arith.mulf %1172, %25 : vector<8x128xf32>
    %1201 = arith.addf %1199, %1200 : vector<8x128xf32>
    %1202 = arith.mulf %25, %1176 : vector<8x128xf32>
    %1203 = arith.addf %1201, %1202 : vector<8x128xf32>
    %1204 = arith.mulf %1182, %1182 : vector<8x128xf32>
    %1205 = arith.mulf %1185, %1185 : vector<8x128xf32>
    %1206 = arith.mulf %1188, %1188 : vector<8x128xf32>
    %1207 = arith.mulf %1193, %1193 : vector<8x128xf32>
    %1208 = arith.mulf %1198, %1198 : vector<8x128xf32>
    %1209 = arith.mulf %1203, %1203 : vector<8x128xf32>
    %1210 = arith.addf %1204, %1207 : vector<8x128xf32>
    %1211 = arith.addf %1210, %1208 : vector<8x128xf32>
    %1212 = arith.addf %1207, %1205 : vector<8x128xf32>
    %1213 = arith.addf %1212, %1209 : vector<8x128xf32>
    %1214 = arith.addf %1208, %1209 : vector<8x128xf32>
    %1215 = arith.addf %1214, %1206 : vector<8x128xf32>
    %1216 = arith.cmpf oge, %1211, %1213 : vector<8x128xf32>
    %1217 = arith.select %1216, %1182, %1193 : vector<8x128xi1>, vector<8x128xf32>
    %1218 = arith.select %1216, %1193, %1185 : vector<8x128xi1>, vector<8x128xf32>
    %1219 = arith.select %1216, %1198, %1203 : vector<8x128xi1>, vector<8x128xf32>
    %1220 = arith.select %1216, %1211, %1213 : vector<8x128xi1>, vector<8x128xf32>
    %1221 = arith.cmpf ogt, %1215, %1220 : vector<8x128xf32>
    %1222 = arith.select %1221, %1198, %1217 : vector<8x128xi1>, vector<8x128xf32>
    %1223 = arith.select %1221, %1203, %1218 : vector<8x128xi1>, vector<8x128xf32>
    %1224 = arith.select %1221, %1188, %1219 : vector<8x128xi1>, vector<8x128xf32>
    %1225 = arith.select %1221, %1215, %1220 : vector<8x128xi1>, vector<8x128xf32>
    %1226 = arith.subf %31, %1164 : vector<8x128xf32>
    %1227 = arith.subf %40, %1164 : vector<8x128xf32>
    %1228 = arith.subf %46, %1164 : vector<8x128xf32>
    %1229 = arith.subf %31, %1170 : vector<8x128xf32>
    %1230 = arith.subf %40, %1170 : vector<8x128xf32>
    %1231 = arith.subf %46, %1170 : vector<8x128xf32>
    %1232 = arith.mulf %34, %34 : vector<8x128xf32>
    %1233 = arith.mulf %37, %37 : vector<8x128xf32>
    %1234 = arith.mulf %43, %43 : vector<8x128xf32>
    %1235 = arith.mulf %1226, %1229 : vector<8x128xf32>
    %1236 = arith.addf %1235, %1232 : vector<8x128xf32>
    %1237 = arith.addf %1236, %1233 : vector<8x128xf32>
    %1238 = arith.mulf %1227, %1230 : vector<8x128xf32>
    %1239 = arith.addf %1232, %1238 : vector<8x128xf32>
    %1240 = arith.addf %1239, %1234 : vector<8x128xf32>
    %1241 = arith.addf %1233, %1234 : vector<8x128xf32>
    %1242 = arith.mulf %1228, %1231 : vector<8x128xf32>
    %1243 = arith.addf %1241, %1242 : vector<8x128xf32>
    %1244 = arith.mulf %1226, %34 : vector<8x128xf32>
    %1245 = arith.mulf %34, %1230 : vector<8x128xf32>
    %1246 = arith.addf %1244, %1245 : vector<8x128xf32>
    %1247 = arith.mulf %37, %43 : vector<8x128xf32>
    %1248 = arith.addf %1246, %1247 : vector<8x128xf32>
    %1249 = arith.mulf %1226, %37 : vector<8x128xf32>
    %1250 = arith.mulf %34, %43 : vector<8x128xf32>
    %1251 = arith.addf %1249, %1250 : vector<8x128xf32>
    %1252 = arith.mulf %37, %1231 : vector<8x128xf32>
    %1253 = arith.addf %1251, %1252 : vector<8x128xf32>
    %1254 = arith.mulf %34, %37 : vector<8x128xf32>
    %1255 = arith.mulf %1227, %43 : vector<8x128xf32>
    %1256 = arith.addf %1254, %1255 : vector<8x128xf32>
    %1257 = arith.mulf %43, %1231 : vector<8x128xf32>
    %1258 = arith.addf %1256, %1257 : vector<8x128xf32>
    %1259 = arith.mulf %1237, %1237 : vector<8x128xf32>
    %1260 = arith.mulf %1240, %1240 : vector<8x128xf32>
    %1261 = arith.mulf %1243, %1243 : vector<8x128xf32>
    %1262 = arith.mulf %1248, %1248 : vector<8x128xf32>
    %1263 = arith.mulf %1253, %1253 : vector<8x128xf32>
    %1264 = arith.mulf %1258, %1258 : vector<8x128xf32>
    %1265 = arith.addf %1259, %1262 : vector<8x128xf32>
    %1266 = arith.addf %1265, %1263 : vector<8x128xf32>
    %1267 = arith.addf %1262, %1260 : vector<8x128xf32>
    %1268 = arith.addf %1267, %1264 : vector<8x128xf32>
    %1269 = arith.addf %1263, %1264 : vector<8x128xf32>
    %1270 = arith.addf %1269, %1261 : vector<8x128xf32>
    %1271 = arith.cmpf oge, %1266, %1268 : vector<8x128xf32>
    %1272 = arith.select %1271, %1237, %1248 : vector<8x128xi1>, vector<8x128xf32>
    %1273 = arith.select %1271, %1248, %1240 : vector<8x128xi1>, vector<8x128xf32>
    %1274 = arith.select %1271, %1253, %1258 : vector<8x128xi1>, vector<8x128xf32>
    %1275 = arith.select %1271, %1266, %1268 : vector<8x128xi1>, vector<8x128xf32>
    %1276 = arith.cmpf ogt, %1270, %1275 : vector<8x128xf32>
    %1277 = arith.select %1276, %1253, %1272 : vector<8x128xi1>, vector<8x128xf32>
    %1278 = arith.select %1276, %1258, %1273 : vector<8x128xi1>, vector<8x128xf32>
    %1279 = arith.select %1276, %1243, %1274 : vector<8x128xi1>, vector<8x128xf32>
    %1280 = arith.select %1276, %1270, %1275 : vector<8x128xi1>, vector<8x128xf32>
    %1281 = arith.subf %602, %1164 : vector<8x128xf32>
    %1282 = math.absf %1281 : vector<8x128xf32>
    %1283 = arith.subf %608, %1170 : vector<8x128xf32>
    %1284 = math.absf %1283 : vector<8x128xf32>
    %1285 = arith.addf %1282, %1284 : vector<8x128xf32>
    %1286 = arith.subf %604, %1166 : vector<8x128xf32>
    %1287 = math.absf %1286 : vector<8x128xf32>
    %1288 = arith.addf %1285, %1287 : vector<8x128xf32>
    %1289 = arith.mulf %1222, %1277 : vector<8x128xf32>
    %1290 = arith.mulf %1223, %1278 : vector<8x128xf32>
    %1291 = arith.addf %1289, %1290 : vector<8x128xf32>
    %1292 = arith.mulf %1224, %1279 : vector<8x128xf32>
    %1293 = arith.addf %1291, %1292 : vector<8x128xf32>
    %cst_301 = arith.constant 1.000000e-30 : f32
    %1294 = vector.broadcast %cst_301 : f32 to vector<8x128xf32>
    %1295 = arith.maximumf %1225, %1294 : vector<8x128xf32>
    %1296 = math.rsqrt %1295 : vector<8x128xf32>
    %cst_302 = arith.constant 1.000000e-30 : f32
    %1297 = vector.broadcast %cst_302 : f32 to vector<8x128xf32>
    %1298 = arith.maximumf %1280, %1297 : vector<8x128xf32>
    %1299 = math.rsqrt %1298 : vector<8x128xf32>
    %1300 = arith.mulf %1296, %1299 : vector<8x128xf32>
    %1301 = math.absf %1293 : vector<8x128xf32>
    %1302 = arith.mulf %1301, %1300 : vector<8x128xf32>
    %cst_303 = arith.constant 0.000000e+00 : f32
    %1303 = vector.broadcast %cst_303 : f32 to vector<8x128xf32>
    %1304 = arith.select %10, %1288, %1303 : vector<8x128xi1>, vector<8x128xf32>
    %1305 = arith.addf %5, %1304 : vector<8x128xf32>
    %cst_304 = arith.constant 0.000000e+00 : f32
    %1306 = vector.broadcast %cst_304 : f32 to vector<8x128xf32>
    %1307 = arith.select %10, %1302, %1306 : vector<8x128xi1>, vector<8x128xf32>
    %1308 = arith.addf %5, %1307 : vector<8x128xf32>
    %cst_305 = arith.constant 1.000000e+00 : f32
    %cst_306 = arith.constant 0.000000e+00 : f32
    %1309 = vector.broadcast %cst_305 : f32 to vector<8x128xf32>
    %1310 = vector.broadcast %cst_306 : f32 to vector<8x128xf32>
    %1311 = arith.select %10, %1309, %1310 : vector<8x128xi1>, vector<8x128xf32>
    %1312 = arith.addf %5, %1311 : vector<8x128xf32>
    %c1_i32 = arith.constant 1 : i32
    %c0_307 = arith.constant 0 : index
    %c0_308 = arith.constant 0 : index
    %c0_309 = arith.constant 0 : index
    %1313 = vector.load %arg6[%c0_307, %c0_308, %c0_309] : memref<1x8x128xf32, #tpu.memory_space<vmem>>, vector<1x8x128xf32>
    %1314 = vector.shape_cast %1313 : vector<1x8x128xf32> to vector<8x128xf32>
    %1315 = arith.addf %1314, %1305 : vector<8x128xf32>
    %c0_310 = arith.constant 0 : index
    %c0_311 = arith.constant 0 : index
    %c0_312 = arith.constant 0 : index
    %1316 = vector.load %arg6[%c0_310, %c0_311, %c0_312] : memref<1x8x128xf32, #tpu.memory_space<vmem>>, vector<1x8x128xf32>
    %1317 = vector.shape_cast %1316 : vector<1x8x128xf32> to vector<8x128xf32>
    %1318 = vector.shape_cast %1315 : vector<8x128xf32> to vector<1x8x128xf32>
    tpu.vector_store %arg6[%c0_310, %c0_311, %c0_312], %1318 {strides = array<i32>} : memref<1x8x128xf32, #tpu.memory_space<vmem>>, vector<1x8x128xf32>,
    %c0_313 = arith.constant 0 : index
    %c0_314 = arith.constant 0 : index
    %c0_315 = arith.constant 0 : index
    %1319 = vector.load %arg7[%c0_313, %c0_314, %c0_315] : memref<1x8x128xf32, #tpu.memory_space<vmem>>, vector<1x8x128xf32>
    %1320 = vector.shape_cast %1319 : vector<1x8x128xf32> to vector<8x128xf32>
    %1321 = arith.addf %1320, %1308 : vector<8x128xf32>
    %c0_316 = arith.constant 0 : index
    %c0_317 = arith.constant 0 : index
    %c0_318 = arith.constant 0 : index
    %1322 = vector.load %arg7[%c0_316, %c0_317, %c0_318] : memref<1x8x128xf32, #tpu.memory_space<vmem>>, vector<1x8x128xf32>
    %1323 = vector.shape_cast %1322 : vector<1x8x128xf32> to vector<8x128xf32>
    %1324 = vector.shape_cast %1321 : vector<8x128xf32> to vector<1x8x128xf32>
    tpu.vector_store %arg7[%c0_316, %c0_317, %c0_318], %1324 {strides = array<i32>} : memref<1x8x128xf32, #tpu.memory_space<vmem>>, vector<1x8x128xf32>,
    %c0_319 = arith.constant 0 : index
    %c0_320 = arith.constant 0 : index
    %c0_321 = arith.constant 0 : index
    %1325 = vector.load %arg8[%c0_319, %c0_320, %c0_321] : memref<1x8x128xf32, #tpu.memory_space<vmem>>, vector<1x8x128xf32>
    %1326 = vector.shape_cast %1325 : vector<1x8x128xf32> to vector<8x128xf32>
    %1327 = arith.addf %1326, %1312 : vector<8x128xf32>
    %c0_322 = arith.constant 0 : index
    %c0_323 = arith.constant 0 : index
    %c0_324 = arith.constant 0 : index
    %1328 = vector.load %arg8[%c0_322, %c0_323, %c0_324] : memref<1x8x128xf32, #tpu.memory_space<vmem>>, vector<1x8x128xf32>
    %1329 = vector.shape_cast %1328 : vector<1x8x128xf32> to vector<8x128xf32>
    %1330 = vector.shape_cast %1327 : vector<8x128xf32> to vector<1x8x128xf32>
    tpu.vector_store %arg8[%c0_322, %c0_323, %c0_324], %1330 {strides = array<i32>} : memref<1x8x128xf32, #tpu.memory_space<vmem>>, vector<1x8x128xf32>,
    return
  }
  func.func @transform_0(%arg0: i32, %arg1: i32, %arg2: i32) -> (i32, i32, i32, i32) {
    %c1_i32 = arith.constant 1 : i32
    %0 = arith.muli %arg0, %c1_i32 : i32
    %1 = arith.addi %0, %arg2 : i32
    %c0_i32 = arith.constant 0 : i32
    %c0_i32_0 = arith.constant 0 : i32
    %c0_i32_1 = arith.constant 0 : i32
    return %arg1, %1, %c0_i32, %c0_i32_0 : i32, i32, i32, i32
  }
  func.func @transform_1(%arg0: i32, %arg1: i32, %arg2: i32) -> (i32, i32, i32, i32) {
    %c1_i32 = arith.constant 1 : i32
    %0 = arith.muli %arg0, %c1_i32 : i32
    %1 = arith.addi %0, %arg2 : i32
    %c0_i32 = arith.constant 0 : i32
    %c0_i32_0 = arith.constant 0 : i32
    %c0_i32_1 = arith.constant 0 : i32
    return %arg1, %1, %c0_i32, %c0_i32_0 : i32, i32, i32, i32
  }
  func.func @transform_2(%arg0: i32, %arg1: i32, %arg2: i32) -> (i32, i32, i32, i32) {
    %c1_i32 = arith.constant 1 : i32
    %0 = arith.muli %arg0, %c1_i32 : i32
    %1 = arith.addi %0, %arg2 : i32
    %c0_i32 = arith.constant 0 : i32
    %c0_i32_0 = arith.constant 0 : i32
    %c0_i32_1 = arith.constant 0 : i32
    return %arg1, %1, %c0_i32, %c0_i32_0 : i32, i32, i32, i32
  }
  func.func @transform_3(%arg0: i32, %arg1: i32, %arg2: i32) -> (i32, i32, i32) {
    %c0_i32 = arith.constant 0 : i32
    %c0_i32_0 = arith.constant 0 : i32
    %c0_i32_1 = arith.constant 0 : i32
    return %arg0, %c0_i32, %c0_i32_0 : i32, i32, i32
  }
  func.func @transform_4(%arg0: i32, %arg1: i32, %arg2: i32) -> (i32, i32, i32) {
    %c0_i32 = arith.constant 0 : i32
    %c0_i32_0 = arith.constant 0 : i32
    %c0_i32_1 = arith.constant 0 : i32
    return %arg0, %c0_i32, %c0_i32_0 : i32, i32, i32
  }
  func.func @transform_5(%arg0: i32, %arg1: i32, %arg2: i32) -> (i32, i32, i32) {
    %c0_i32 = arith.constant 0 : i32
    %c0_i32_0 = arith.constant 0 : i32
    %c0_i32_1 = arith.constant 0 : i32
    return %arg0, %c0_i32, %c0_i32_0 : i32, i32, i32
  }
}

</mosaic_0001>

<llo_original>
// kernel: av_loss.1
$region0: #{av_loss.1}
  #allocation0 [shape = 'u32[]', space=smem, size = 0x4, offset = 0x4, fixed_abs, tag = 'smem constant byte address 0x4 - core index']
  #allocation1 [shape = 'u32[144,128]{1,0:T(1,128)}', space=vmem, size = 0x12000, scoped, tag = 'internal scratch']
  %s0 = inlined_call_operand.vmem [shape: f32[12,1,8,128], index: 0, kind: input, shape index: {}]
  %s1 = inlined_call_operand.vmem [shape: f32[12,1,8,128], index: 1, kind: input, shape index: {}]
  %s2 = inlined_call_operand.vmem [shape: f32[2,1,8,128], index: 2, kind: input, shape index: {}]
  %s3 = inlined_call_operand.vmem [shape: f32[1,8,128], index: 3, kind: output, shape index: {0}]
  %s4 = inlined_call_operand.vmem [shape: f32[1,8,128], index: 4, kind: output, shape index: {1}]
  %s5 = inlined_call_operand.vmem [shape: f32[1,8,128], index: 5, kind: output, shape index: {2}]
  %6 = xla_tuple %s3, %s4, %s5
  %s7 = sld [smem:[#allocation0]]
  $region65: #{av_loss.1} parent=0
    _
  %s9 = ssub.s32 1, %s7
  %s10 = scalar_select 0, %s9, %s7
  loop: start=0, step=1, limit=4
  $region2: #{av_loss.1} parent=0 // loop_pre_header
    _
  $region3: #{av_loss.1} parent=0 // loop_header
    %s12 = sphi 0, %s16
    %p13 = scmp.ge.s32.totalorder %s12, 4
    %s19 = sphi 0, %s38
    %s20 = sphi 0, %s34
    %s21 = sphi 0, %s30
    %s22 = sphi 0, %s19
    %s23 = sphi 0, %s20
    %s24 = sphi 0, %s21
    %s25 = sphi 0, %s22
    %s26 = sphi 0, %s23
    %s27 = sphi 0, %s24
    %s45 = sphi 0, %s47
    %s48 = sphi 0, %s45
    %s49 = sphi 0, %s48
    %s65 = sphi 0, %s49
    %s75 = sphi 0, %s77
    %s78 = sphi 0, %s75
    %s79 = sphi 0, %s78
    %s95 = sphi 0, %s79
    %s105 = sphi 0, %s107
    %s108 = sphi 0, %s105
    %s109 = sphi 0, %s108
    %s125 = sphi 0, %s109
    %s131 = sphi 0, %s133
    %s134 = sphi 0, %s131
    %s135 = sphi 0, %s134
    %s151 = sphi 0, %s135
    %s157 = sphi 0, %s159
    %s160 = sphi 0, %s157
    %s161 = sphi 0, %s160
    %s177 = sphi 0, %s161
    %s183 = sphi 0, %s185
    %s186 = sphi 0, %s183
    %s187 = sphi 0, %s186
    %s203 = sphi 0, %s187
  $region4: #{av_loss.1} parent=0 // loop_header_branch
    %15 = sbr.rel (%p13) target = $region8
  $region5: #{av_loss.1} parent=0 // loop_body
    %s17 = ssub.s32 %s12, 1
    %s18 = ssub.s32 %s12, 2
    %s28 = sadd.s32 1, %s21
    %p29 = scmp.ge.s32.totalorder %s28, 1
    %s30 = scalar_select %p29, 0, %s28
    %s31 = sadd.s32 1, %s20
    %s32 = scalar_select %p29, %s31, %s20
    %p33 = scmp.ge.s32.totalorder %s32, 2
    %s34 = scalar_select %p33, 0, %s32
    %s35 = sadd.s32 1, %s19
    %s36 = scalar_select %p33, %s35, %s19
    %p37 = scmp.ge.s32.totalorder %s36, 1
    %s38 = scalar_select %p37, 0, %s36
    %s39 = sadd.s32 %s19, %s21
    %s40 = sadd.s32 %s38, %s30
    %s41 = ssub.s32 %s20, %s34
    %s42 = ssub.s32 %s39, %s40
    %s43 = sor.u32 %s41, %s42
    %p44 = scmp.eq.s32.totalorder %s43, 0
    %s46 = sadd.s32 %s45, 1
    %s47 = scalar_select %p44, %s45, %s46
    %p50 = pneg %p44
    %p51 = scmp.eq.s32.totalorder %s12, 1
    %p52 = por %p50, %p51
    %p53 = scmp.ne.s32.totalorder %s45, %s48
    %p54 = scmp.eq.s32.totalorder %s12, 0
    %p55 = por %p53, %p54
    %p56 = scmp.ne.s32.totalorder %s45, %s48
    %p57 = scmp.eq.s32.totalorder %s17, 1
    %p58 = por %p56, %p57
    %p59 = scmp.ne.s32.totalorder %s48, %s49
    %p60 = scmp.eq.s32.totalorder %s17, 0
    %p61 = por %p59, %p60
    %p62 = scmp.ne.s32.totalorder %s48, %s49
    %p63 = scmp.eq.s32.totalorder %s18, 1
    %p64 = por %p62, %p63
    %p66 = scmp.ne.s32.totalorder %s49, %s65
    %p67 = scmp.eq.s32.totalorder %s18, 0
    %p68 = por %p66, %p67
    %s69 = sadd.s32 %s19, %s21
    %s70 = sadd.s32 %s38, %s30
    %s71 = ssub.s32 %s20, %s34
    %s72 = ssub.s32 %s69, %s70
    %s73 = sor.u32 %s71, %s72
    %p74 = scmp.eq.s32.totalorder %s73, 0
    %s76 = sadd.s32 %s75, 1
    %s77 = scalar_select %p74, %s75, %s76
    %p80 = pneg %p74
    %p81 = scmp.eq.s32.totalorder %s12, 1
    %p82 = por %p80, %p81
    %p83 = scmp.ne.s32.totalorder %s75, %s78
    %p84 = scmp.eq.s32.totalorder %s12, 0
    %p85 = por %p83, %p84
    %p86 = scmp.ne.s32.totalorder %s75, %s78
    %p87 = scmp.eq.s32.totalorder %s17, 1
    %p88 = por %p86, %p87
    %p89 = scmp.ne.s32.totalorder %s78, %s79
    %p90 = scmp.eq.s32.totalorder %s17, 0
    %p91 = por %p89, %p90
    %p92 = scmp.ne.s32.totalorder %s78, %s79
    %p93 = scmp.eq.s32.totalorder %s18, 1
    %p94 = por %p92, %p93
    %p96 = scmp.ne.s32.totalorder %s79, %s95
    %p97 = scmp.eq.s32.totalorder %s18, 0
    %p98 = por %p96, %p97
    %s99 = sadd.s32 %s19, %s21
    %s100 = sadd.s32 %s38, %s30
    %s101 = ssub.s32 %s20, %s34
    %s102 = ssub.s32 %s99, %s100
    %s103 = sor.u32 %s101, %s102
    %p104 = scmp.eq.s32.totalorder %s103, 0
    %s106 = sadd.s32 %s105, 1
    %s107 = scalar_select %p104, %s105, %s106
    %p110 = pneg %p104
    %p111 = scmp.eq.s32.totalorder %s12, 1
    %p112 = por %p110, %p111
    %p113 = scmp.ne.s32.totalorder %s105, %s108
    %p114 = scmp.eq.s32.totalorder %s12, 0
    %p115 = por %p113, %p114
    %p116 = scmp.ne.s32.totalorder %s105, %s108
    %p117 = scmp.eq.s32.totalorder %s17, 1
    %p118 = por %p116, %p117
    %p119 = scmp.ne.s32.totalorder %s108, %s109
    %p120 = scmp.eq.s32.totalorder %s17, 0
    %p121 = por %p119, %p120
    %p122 = scmp.ne.s32.totalorder %s108, %s109
    %p123 = scmp.eq.s32.totalorder %s18, 1
    %p124 = por %p122, %p123
    %p126 = scmp.ne.s32.totalorder %s109, %s125
    %p127 = scmp.eq.s32.totalorder %s18, 0
    %p128 = por %p126, %p127
    %s129 = ssub.s32 %s19, %s38
    %p130 = scmp.eq.s32.totalorder %s129, 0
    %s132 = sadd.s32 %s131, 1
    %s133 = scalar_select %p130, %s131, %s132
    %p136 = pneg %p130
    %p137 = scmp.eq.s32.totalorder %s12, 1
    %p138 = por %p136, %p137
    %p139 = scmp.ne.s32.totalorder %s131, %s134
    %p140 = scmp.eq.s32.totalorder %s12, 0
    %p141 = por %p139, %p140
    %p142 = scmp.ne.s32.totalorder %s131, %s134
    %p143 = scmp.eq.s32.totalorder %s17, 1
    %p144 = por %p142, %p143
    %p145 = scmp.ne.s32.totalorder %s134, %s135
    %p146 = scmp.eq.s32.totalorder %s17, 0
    %p147 = por %p145, %p146
    %p148 = scmp.ne.s32.totalorder %s134, %s135
    %p149 = scmp.eq.s32.totalorder %s18, 1
    %p150 = por %p148, %p149
    %p152 = scmp.ne.s32.totalorder %s135, %s151
    %p153 = scmp.eq.s32.totalorder %s18, 0
    %p154 = por %p152, %p153
    %s155 = ssub.s32 %s19, %s38
    %p156 = scmp.eq.s32.totalorder %s155, 0
    %s158 = sadd.s32 %s157, 1
    %s159 = scalar_select %p156, %s157, %s158
    %p162 = pneg %p156
    %p163 = scmp.eq.s32.totalorder %s12, 1
    %p164 = por %p162, %p163
    %p165 = scmp.ne.s32.totalorder %s157, %s160
    %p166 = scmp.eq.s32.totalorder %s12, 0
    %p167 = por %p165, %p166
    %p168 = scmp.ne.s32.totalorder %s157, %s160
    %p169 = scmp.eq.s32.totalorder %s17, 1
    %p170 = por %p168, %p169
    %p171 = scmp.ne.s32.totalorder %s160, %s161
    %p172 = scmp.eq.s32.totalorder %s17, 0
    %p173 = por %p171, %p172
    %p174 = scmp.ne.s32.totalorder %s160, %s161
    %p175 = scmp.eq.s32.totalorder %s18, 1
    %p176 = por %p174, %p175
    %p178 = scmp.ne.s32.totalorder %s161, %s177
    %p179 = scmp.eq.s32.totalorder %s18, 0
    %p180 = por %p178, %p179
    %s181 = ssub.s32 %s19, %s38
    %p182 = scmp.eq.s32.totalorder %s181, 0
    %s184 = sadd.s32 %s183, 1
    %s185 = scalar_select %p182, %s183, %s184
    %p188 = pneg %p182
    %p189 = scmp.eq.s32.totalorder %s12, 1
    %p190 = por %p188, %p189
    %p191 = scmp.ne.s32.totalorder %s183, %s186
    %p192 = scmp.eq.s32.totalorder %s12, 0
    %p193 = por %p191, %p192
    %p194 = scmp.ne.s32.totalorder %s183, %s186
    %p195 = scmp.eq.s32.totalorder %s17, 1
    %p196 = por %p194, %p195
    %p197 = scmp.ne.s32.totalorder %s186, %s187
    %p198 = scmp.eq.s32.totalorder %s17, 0
    %p199 = por %p197, %p198
    %p200 = scmp.ne.s32.totalorder %s186, %s187
    %p201 = scmp.eq.s32.totalorder %s18, 1
    %p202 = por %p200, %p201
    %p204 = scmp.ne.s32.totalorder %s187, %s203
    %p205 = scmp.eq.s32.totalorder %s18, 0
    %p206 = por %p204, %p205
    %p207 = scmp.le.s32.totalorder 1, %s12
    %p208 = scmp.lt.s32.totalorder %s12, 3
    %p209 = pnand %p207, %p208
    %p210 = pneg %p209
    // Predicated region
    $region9: #{av_loss.1} parent=5 // pred_check
      _
    $region10: #{av_loss.1} parent=5 // pred_check_branch
      %212 = sbr.rel (%p209) target = $region12
    $region11: #{av_loss.1} parent=5 // pred_region
      %s213 = ssub.s32 %s12, 1
    $region12: #{av_loss.1} parent=5 // pred_fallthru
      _
    %p214 = scmp.lt.s32.totalorder %s12, 2
    // Predicated region
    $region13: #{av_loss.1} parent=5 // pred_check
      %p215 = pneg %p214
    $region14: #{av_loss.1} parent=5 // pred_check_branch
      %217 = sbr.rel (%p215) target = $region16
    $region15: #{av_loss.1} parent=5 // pred_region
      // Predicated region
      $region17: #{av_loss.1} parent=15 // pred_check
        %p218 = pneg %p55
      $region18: #{av_loss.1} parent=15 // pred_check_branch
        %220 = sbr.rel (%p218) target = $region20
      $region19: #{av_loss.1} parent=15 // pred_region
        %s221 = sadd.s32 %s19, %s21
        %s222 = smul.u32 6, %s20
        %p223 = scmp.lt.s32.totalorder %s222, 11
        %s224 = scalar_select %p223, %s222, 11
        %p225 = scmp.lt.s32.totalorder %s221, 0
        %s226 = scalar_select %p225, %s221, 0
        %s227 = sadd.s32 %s226, %s224
        %s228 = smul.addr %s227, 8
        %s229 = scalar_lea.vmem %s0, %s228
        %s230 = sadd.s32 %s19, %s21
        %s231 = smul.u32 6, %s20
      $region20: #{av_loss.1} parent=15 // pred_fallthru
        _
      // Predicated region
      $region21: #{av_loss.1} parent=15 // pred_check
        %p232 = pneg %p85
      $region22: #{av_loss.1} parent=15 // pred_check_branch
        %234 = sbr.rel (%p232) target = $region24
      $region23: #{av_loss.1} parent=15 // pred_region
        %s235 = sadd.s32 %s19, %s21
        %s236 = smul.u32 6, %s20
        %p237 = scmp.lt.s32.totalorder %s236, 11
        %s238 = scalar_select %p237, %s236, 11
        %p239 = scmp.lt.s32.totalorder %s235, 0
        %s240 = scalar_select %p239, %s235, 0
        %s241 = sadd.s32 %s240, %s238
        %s242 = smul.addr %s241, 8
        %s243 = scalar_lea.vmem %s1, %s242
        %s244 = sadd.s32 %s19, %s21
        %s245 = smul.u32 6, %s20
      $region24: #{av_loss.1} parent=15 // pred_fallthru
        _
      // Predicated region
      $region25: #{av_loss.1} parent=15 // pred_check
        %p246 = pneg %p115
      $region26: #{av_loss.1} parent=15 // pred_check_branch
        %248 = sbr.rel (%p246) target = $region28
      $region27: #{av_loss.1} parent=15 // pred_region
        %s249 = sadd.s32 %s19, %s21
        %p250 = scmp.lt.s32.totalorder %s20, 1
        %s251 = scalar_select %p250, %s20, 1
        %p252 = scmp.lt.s32.totalorder %s249, 0
        %s253 = scalar_select %p252, %s249, 0
        %s254 = sadd.s32 %s253, %s251
        %s255 = smul.addr %s254, 8
        %s256 = scalar_lea.vmem %s2, %s255
        %s257 = sadd.s32 %s19, %s21
      $region28: #{av_loss.1} parent=15 // pred_fallthru
        _
    $region16: #{av_loss.1} parent=5 // pred_fallthru
      _
    %p258 = scmp.le.s32.totalorder 1, %s12
    %p259 = scmp.lt.s32.totalorder %s12, 3
    %p260 = pnand %p258, %p259
    %p261 = pneg %p260
    // Predicated region
    $region29: #{av_loss.1} parent=5 // pred_check
      _
    $region30: #{av_loss.1} parent=5 // pred_check_branch
      %263 = sbr.rel (%p260) target = $region32
    $region31: #{av_loss.1} parent=5 // pred_region
      %s264 = ssub.s32 %s12, 1
      %s265 = sadd.s32 %s22, %s24
      %s266 = smul.u32 6, %s23
      %p267 = scmp.lt.s32.totalorder %s266, 11
      %s268 = scalar_select %p267, %s266, 11
      %p269 = scmp.lt.s32.totalorder %s265, 0
      %s270 = scalar_select %p269, %s265, 0
      %s271 = sadd.s32 %s270, %s268
      %s272 = smul.addr %s271, 8
      %s273 = scalar_lea.vmem %s0, %s272
      %p274 = pneg %p61
      %p275 = pneg %p58
      %s276 = sadd.s32 %s22, %s24
      %s277 = smul.u32 6, %s23
      %p278 = scmp.lt.s32.totalorder %s277, 11
      %s279 = scalar_select %p278, %s277, 11
      %p280 = scmp.lt.s32.totalorder %s276, 0
      %s281 = scalar_select %p280, %s276, 0
      %s282 = sadd.s32 %s281, %s279
      %s283 = smul.addr %s282, 8
      %s284 = scalar_lea.vmem %s1, %s283
      %p285 = pneg %p91
      %p286 = pneg %p88
      %s287 = sadd.s32 %s22, %s24
      %p288 = scmp.lt.s32.totalorder %s23, 1
      %s289 = scalar_select %p288, %s23, 1
      %p290 = scmp.lt.s32.totalorder %s287, 0
      %s291 = scalar_select %p290, %s287, 0
      %s292 = sadd.s32 %s291, %s289
      %s293 = smul.addr %s292, 8
      %s294 = scalar_lea.vmem %s2, %s293
      %p295 = pneg %p121
      %p296 = pneg %p118
      %p297 = pneg %p147
      %p298 = pneg %p144
      %p299 = scmp.lt.s32.totalorder %s22, 0
      %s300 = scalar_select %p299, %s22, 0
      %s301 = smul.addr %s300, 8
      %s302 = scalar_lea.vmem %s3, %s301
      %p303 = pneg %p173
      %p304 = pneg %p170
      %p305 = scmp.lt.s32.totalorder %s22, 0
      %s306 = scalar_select %p305, %s22, 0
      %s307 = smul.addr %s306, 8
      %s308 = scalar_lea.vmem %s4, %s307
      %p309 = pneg %p199
      %p310 = pneg %p196
      %p311 = scmp.lt.s32.totalorder %s22, 0
      %s312 = scalar_select %p311, %s22, 0
      %s313 = smul.addr %s312, 8
      %s314 = scalar_lea.vmem %s5, %s313
      %s315 = sadd.s32 %s22, %s24
      %s316 = smul.u32 6, %s23
      %p317 = scmp.lt.s32.totalorder %s316, 11
      %s318 = scalar_select %p317, %s316, 11
      %p319 = scmp.lt.s32.totalorder %s315, 0
      %s320 = scalar_select %p319, %s315, 0
      %s321 = sadd.s32 %s320, %s318
      %s322 = smul.addr %s321, 8
      %s323 = scalar_lea.vmem %s0, %s322
      %s324 = sadd.s32 %s22, %s24
      %s325 = smul.u32 6, %s23
      %s326 = sadd.s32 %s22, %s24
      %s327 = smul.u32 6, %s23
      %p328 = scmp.lt.s32.totalorder %s327, 11
      %s329 = scalar_select %p328, %s327, 11
      %p330 = scmp.lt.s32.totalorder %s326, 0
      %s331 = scalar_select %p330, %s326, 0
      %s332 = sadd.s32 %s331, %s329
      %s333 = smul.addr %s332, 8
      %s334 = scalar_lea.vmem %s1, %s333
      %s335 = sadd.s32 %s22, %s24
      %s336 = smul.u32 6, %s23
      %s337 = sadd.s32 %s22, %s24
      %p338 = scmp.lt.s32.totalorder %s23, 1
      %s339 = scalar_select %p338, %s23, 1
      %p340 = scmp.lt.s32.totalorder %s337, 0
      %s341 = scalar_select %p340, %s337, 0
      %s342 = sadd.s32 %s341, %s339
      %s343 = smul.addr %s342, 8
      %s344 = scalar_lea.vmem %s2, %s343
      %s345 = sadd.s32 %s22, %s24
      %p346 = scmp.lt.s32.totalorder %s22, 0
      %s347 = scalar_select %p346, %s22, 0
      %s348 = smul.addr %s347, 8
      %s349 = scalar_lea.vmem %s3, %s348
      %p350 = scmp.lt.s32.totalorder %s22, 0
      %s351 = scalar_select %p350, %s22, 0
      %s352 = smul.addr %s351, 8
      %s353 = scalar_lea.vmem %s4, %s352
      %p354 = scmp.lt.s32.totalorder %s22, 0
      %s355 = scalar_select %p354, %s22, 0
      %s356 = smul.addr %s355, 8
      %s357 = scalar_lea.vmem %s5, %s356
      %p358 = scmp.eq.s32.totalorder %s23, 0
      %p359 = scmp.eq.s32.totalorder %s24, 0
      %p360 = pnand %p358, %p359
      %p361 = pneg %p360
      // Predicated region
      $region33: #{av_loss.1} parent=31 // pred_check
        _
      $region34: #{av_loss.1} parent=31 // pred_check_branch
        %363 = sbr.rel (%p360) target = $region36
      $region35: #{av_loss.1} parent=31 // pred_region
        %364 = vst [vmem:[%s349] sm:$0xff] 0.0
        %365 = vst [vmem:[%s353] sm:$0xff] 0.0
        %366 = vst [vmem:[%s357] sm:$0xff] 0.0
      $region36: #{av_loss.1} parent=31 // pred_fallthru
        _
      %v367 = vld [vmem:[%s344] sm:$0xff]
      %vm368 = vcmp.gt.f32.partialorder %v367, 0.0
      %v369 = vld [vmem:[%s323] sm:$0xff]
      %s370 = scalar_lea.vmem %s323, 8
      %v371 = vld [vmem:[%s370] sm:$0xff]
      %s372 = scalar_lea.vmem %s323, 16
      %v373 = vld [vmem:[%s372] sm:$0xff]
      %s374 = scalar_lea.vmem %s323, 24
      %v375 = vld [vmem:[%s374] sm:$0xff]
      %s376 = scalar_lea.vmem %s323, 32
      %v377 = vld [vmem:[%s376] sm:$0xff]
      %s378 = scalar_lea.vmem %s323, 40
      %v379 = vld [vmem:[%s378] sm:$0xff]
      %v380 = vld [vmem:[%s334] sm:$0xff]
      %s381 = scalar_lea.vmem %s334, 8
      %v382 = vld [vmem:[%s381] sm:$0xff]
      %s383 = scalar_lea.vmem %s334, 16
      %v384 = vld [vmem:[%s383] sm:$0xff]
      %s385 = scalar_lea.vmem %s334, 24
      %v386 = vld [vmem:[%s385] sm:$0xff]
      %s387 = scalar_lea.vmem %s334, 32
      %v388 = vld [vmem:[%s387] sm:$0xff]
      %s389 = scalar_lea.vmem %s334, 40
      %v390 = vld [vmem:[%s389] sm:$0xff]
      %v391 = vsub.f32 %v375, %v369
      %v392 = vmul.f32 %v371, 2.0
      %vm393 = vcmp.ge.f32.partialorder %v391, 0.0
      %v394 = vsel %vm393, 1.0, -1.0
      %v395 = vmul.f32 %v392, %v394
      %v396 = vand.u32 2147483647, %v391
      %v397 = vmul.f32 %v391, %v391
      %v398 = vmul.f32 %v371, %v371
      %v399 = vmul.f32 %v398, 4.0
      %v400 = vadd.f32 %v397, %v399
      %v401 = vrsqrt.pop %v400
      %v402 = vmul.f32 %v400, %v401
      %vm403 = vcmp.eq.f32.partialorder %v400, inf
      %v404 = vsel %vm403, %v400, %v402
      %vm405 = vcmp.eq.f32.partialorder %v400, 0.0
      %v406 = vand.u32 %v400, 2147483648
      %v407 = vsel %vm405, %v406, %v404
      %v408 = vadd.f32 %v396, %v407
      %vm409 = vcmp.eq.f32.partialorder %v408, 0.0
      %v410 = vsel %vm409, 1.0, %v408
      %v411 = vrcp.pop %v410
      %v412 = vmul.f32 %v395, %v411
      %v413 = vmul.f32 %v412, %v412
      %v414 = vadd.f32 %v413, 1.0
      %v415 = vrsqrt.pop %v414
      %v416 = vmul.f32 %v412, %v415
      %v417 = vmul.f32 %v412, %v371
      %v418 = vsub.f32 %v369, %v417
      %v419 = vadd.f32 %v375, %v417
      %v420 = vmul.f32 %v415, %v373
      %v421 = vmul.f32 %v416, %v377
      %v422 = vsub.f32 %v420, %v421
      %v423 = vmul.f32 %v416, %v373
      %v424 = vmul.f32 %v415, %v377
      %v425 = vadd.f32 %v423, %v424
      %v426 = vsub.f32 %v379, %v418
      %v427 = vmul.f32 %v422, 2.0
      %vm428 = vcmp.ge.f32.partialorder %v426, 0.0
      %v429 = vsel %vm428, 1.0, -1.0
      %v430 = vmul.f32 %v427, %v429
      %v431 = vand.u32 2147483647, %v426
      %v432 = vmul.f32 %v426, %v426
      %v433 = vmul.f32 %v422, %v422
      %v434 = vmul.f32 %v433, 4.0
      %v435 = vadd.f32 %v432, %v434
      %v436 = vrsqrt.pop %v435
      %v437 = vmul.f32 %v435, %v436
      %vm438 = vcmp.eq.f32.partialorder %v435, inf
      %v439 = vsel %vm438, %v435, %v437
      %vm440 = vcmp.eq.f32.partialorder %v435, 0.0
      %v441 = vand.u32 %v435, 2147483648
      %v442 = vsel %vm440, %v441, %v439
      %v443 = vadd.f32 %v431, %v442
      %vm444 = vcmp.eq.f32.partialorder %v443, 0.0
      %v445 = vsel %vm444, 1.0, %v443
      %v446 = vrcp.pop %v445
      %v447 = vmul.f32 %v430, %v446
      %v448 = vmul.f32 %v447, %v447
      %v449 = vadd.f32 %v448, 1.0
      %v450 = vrsqrt.pop %v449
      %v451 = vmul.f32 %v447, %v450
      %v452 = vmul.f32 %v447, %v422
      %v453 = vsub.f32 %v418, %v452
      %v454 = vadd.f32 %v379, %v452
      %v455 = vmul.f32 %v450, 0.0
      %v456 = vmul.f32 %v451, %v425
      %v457 = vsub.f32 %v455, %v456
      %v458 = vmul.f32 %v451, 0.0
      %v459 = vmul.f32 %v450, %v425
      %v460 = vadd.f32 %v458, %v459
      %v461 = vsub.f32 %v454, %v419
      %v462 = vmul.f32 %v460, 2.0
      %vm463 = vcmp.ge.f32.partialorder %v461, 0.0
      %v464 = vsel %vm463, 1.0, -1.0
      %v465 = vmul.f32 %v462, %v464
      %v466 = vand.u32 2147483647, %v461
      %v467 = vmul.f32 %v461, %v461
      %v468 = vmul.f32 %v460, %v460
      %v469 = vmul.f32 %v468, 4.0
      %v470 = vadd.f32 %v467, %v469
      %v471 = vrsqrt.pop %v470
      %v472 = vmul.f32 %v470, %v471
      %vm473 = vcmp.eq.f32.partialorder %v470, inf
      %v474 = vsel %vm473, %v470, %v472
      %vm475 = vcmp.eq.f32.partialorder %v470, 0.0
      %v476 = vand.u32 %v470, 2147483648
      %v477 = vsel %vm475, %v476, %v474
      %v478 = vadd.f32 %v466, %v477
      %vm479 = vcmp.eq.f32.partialorder %v478, 0.0
      %v480 = vsel %vm479, 1.0, %v478
      %v481 = vrcp.pop %v480
      %v482 = vmul.f32 %v465, %v481
      %v483 = vmul.f32 %v482, %v482
      %v484 = vadd.f32 %v483, 1.0
      %v485 = vrsqrt.pop %v484
      %v486 = vmul.f32 %v482, %v485
      %v487 = vmul.f32 %v482, %v460
      %v488 = vsub.f32 %v419, %v487
      %v489 = vadd.f32 %v454, %v487
      %v490 = vmul.f32 %v485, %v457
      %v491 = vmul.f32 %v486, 0.0
      %v492 = vsub.f32 %v490, %v491
      %v493 = vmul.f32 %v486, %v457
      %v494 = vmul.f32 %v485, 0.0
      %v495 = vadd.f32 %v493, %v494
      %v496 = vsub.f32 %v488, %v453
      %v497 = vmul.f32 %v492, 2.0
      %vm498 = vcmp.ge.f32.partialorder %v496, 0.0
      %v499 = vsel %vm498, 1.0, -1.0
      %v500 = vmul.f32 %v497, %v499
      %v501 = vand.u32 2147483647, %v496
      %v502 = vmul.f32 %v496, %v496
      %v503 = vmul.f32 %v492, %v492
      %v504 = vmul.f32 %v503, 4.0
      %v505 = vadd.f32 %v502, %v504
      %v506 = vrsqrt.pop %v505
      %v507 = vmul.f32 %v505, %v506
      %vm508 = vcmp.eq.f32.partialorder %v505, inf
      %v509 = vsel %vm508, %v505, %v507
      %vm510 = vcmp.eq.f32.partialorder %v505, 0.0
      %v511 = vand.u32 %v505, 2147483648
      %v512 = vsel %vm510, %v511, %v509
      %v513 = vadd.f32 %v501, %v512
      %vm514 = vcmp.eq.f32.partialorder %v513, 0.0
      %v515 = vsel %vm514, 1.0, %v513
      %v516 = vrcp.pop %v515
      %v517 = vmul.f32 %v500, %v516
      %v518 = vmul.f32 %v517, %v517
      %v519 = vadd.f32 %v518, 1.0
      %v520 = vrsqrt.pop %v519
      %v521 = vmul.f32 %v517, %v520
      %v522 = vmul.f32 %v517, %v492
      %v523 = vsub.f32 %v453, %v522
      %v524 = vadd.f32 %v488, %v522
      %v525 = vmul.f32 %v520, %v495
      %v526 = vmul.f32 %v521, 0.0
      %v527 = vsub.f32 %v525, %v526
      %v528 = vmul.f32 %v521, %v495
      %v529 = vmul.f32 %v520, 0.0
      %v530 = vadd.f32 %v528, %v529
      %v531 = vsub.f32 %v489, %v523
      %v532 = vmul.f32 %v527, 2.0
      %vm533 = vcmp.ge.f32.partialorder %v531, 0.0
      %v534 = vsel %vm533, 1.0, -1.0
      %v535 = vmul.f32 %v532, %v534
      %v536 = vand.u32 2147483647, %v531
      %v537 = vmul.f32 %v531, %v531
      %v538 = vmul.f32 %v527, %v527
      %v539 = vmul.f32 %v538, 4.0
      %v540 = vadd.f32 %v537, %v539
      %v541 = vrsqrt.pop %v540
      %v542 = vmul.f32 %v540, %v541
      %vm543 = vcmp.eq.f32.partialorder %v540, inf
      %v544 = vsel %vm543, %v540, %v542
      %vm545 = vcmp.eq.f32.partialorder %v540, 0.0
      %v546 = vand.u32 %v540, 2147483648
      %v547 = vsel %vm545, %v546, %v544
      %v548 = vadd.f32 %v536, %v547
      %vm549 = vcmp.eq.f32.partialorder %v548, 0.0
      %v550 = vsel %vm549, 1.0, %v548
      %v551 = vrcp.pop %v550
      %v552 = vmul.f32 %v535, %v551
      %v553 = vmul.f32 %v552, %v552
      %v554 = vadd.f32 %v553, 1.0
      %v555 = vrsqrt.pop %v554
      %v556 = vmul.f32 %v552, %v555
      %v557 = vmul.f32 %v552, %v527
      %v558 = vsub.f32 %v523, %v557
      %v559 = vadd.f32 %v489, %v557
      %v560 = vmul.f32 %v555, 0.0
      %v561 = vmul.f32 %v556, %v530
      %v562 = vsub.f32 %v560, %v561
      %v563 = vmul.f32 %v556, 0.0
      %v564 = vmul.f32 %v555, %v530
      %v565 = vadd.f32 %v563, %v564
      %v566 = vsub.f32 %v559, %v524
      %v567 = vmul.f32 %v565, 2.0
      %vm568 = vcmp.ge.f32.partialorder %v566, 0.0
      %v569 = vsel %vm568, 1.0, -1.0
      %v570 = vmul.f32 %v567, %v569
      %v571 = vand.u32 2147483647, %v566
      %v572 = vmul.f32 %v566, %v566
      %v573 = vmul.f32 %v565, %v565
      %v574 = vmul.f32 %v573, 4.0
      %v575 = vadd.f32 %v572, %v574
      %v576 = vrsqrt.pop %v575
      %v577 = vmul.f32 %v575, %v576
      %vm578 = vcmp.eq.f32.partialorder %v575, inf
      %v579 = vsel %vm578, %v575, %v577
      %vm580 = vcmp.eq.f32.partialorder %v575, 0.0
      %v581 = vand.u32 %v575, 2147483648
      %v582 = vsel %vm580, %v581, %v579
      %v583 = vadd.f32 %v571, %v582
      %vm584 = vcmp.eq.f32.partialorder %v583, 0.0
      %v585 = vsel %vm584, 1.0, %v583
      %v586 = vrcp.pop %v585
      %v587 = vmul.f32 %v570, %v586
      %v588 = vmul.f32 %v587, %v587
      %v589 = vadd.f32 %v588, 1.0
      %v590 = vrsqrt.pop %v589
      %v591 = vmul.f32 %v587, %v590
      %v592 = vmul.f32 %v587, %v565
      %v593 = vsub.f32 %v524, %v592
      %v594 = vadd.f32 %v559, %v592
      %v595 = vmul.f32 %v590, %v562
      %v596 = vmul.f32 %v591, 0.0
      %v597 = vsub.f32 %v595, %v596
      %v598 = vmul.f32 %v591, %v562
      %v599 = vmul.f32 %v590, 0.0
      %v600 = vadd.f32 %v598, %v599
      %v601 = vsub.f32 %v593, %v558
      %v602 = vmul.f32 %v597, 2.0
      %vm603 = vcmp.ge.f32.partialorder %v601, 0.0
      %v604 = vsel %vm603, 1.0, -1.0
      %v605 = vmul.f32 %v602, %v604
      %v606 = vand.u32 2147483647, %v601
      %v607 = vmul.f32 %v601, %v601
      %v608 = vmul.f32 %v597, %v597
      %v609 = vmul.f32 %v608, 4.0
      %v610 = vadd.f32 %v607, %v609
      %v611 = vrsqrt.pop %v610
      %v612 = vmul.f32 %v610, %v611
      %vm613 = vcmp.eq.f32.partialorder %v610, inf
      %v614 = vsel %vm613, %v610, %v612
      %vm615 = vcmp.eq.f32.partialorder %v610, 0.0
      %v616 = vand.u32 %v610, 2147483648
      %v617 = vsel %vm615, %v616, %v614
      %v618 = vadd.f32 %v606, %v617
      %vm619 = vcmp.eq.f32.partialorder %v618, 0.0
      %v620 = vsel %vm619, 1.0, %v618
      %v621 = vrcp.pop %v620
      %v622 = vmul.f32 %v605, %v621
      %v623 = vmul.f32 %v622, %v622
      %v624 = vadd.f32 %v623, 1.0
      %v625 = vrsqrt.pop %v624
      %v626 = vmul.f32 %v622, %v625
      %v627 = vmul.f32 %v622, %v597
      %v628 = vsub.f32 %v558, %v627
      %v629 = vadd.f32 %v593, %v627
      %v630 = vmul.f32 %v625, %v600
      %v631 = vmul.f32 %v626, 0.0
      %v632 = vsub.f32 %v630, %v631
      %v633 = vmul.f32 %v626, %v600
      %v634 = vmul.f32 %v625, 0.0
      %v635 = vadd.f32 %v633, %v634
      %v636 = vsub.f32 %v594, %v628
      %v637 = vmul.f32 %v632, 2.0
      %vm638 = vcmp.ge.f32.partialorder %v636, 0.0
      %v639 = vsel %vm638, 1.0, -1.0
      %v640 = vmul.f32 %v637, %v639
      %v641 = vand.u32 2147483647, %v636
      %v642 = vmul.f32 %v636, %v636
      %v643 = vmul.f32 %v632, %v632
      %v644 = vmul.f32 %v643, 4.0
      %v645 = vadd.f32 %v642, %v644
      %v646 = vrsqrt.pop %v645
      %v647 = vmul.f32 %v645, %v646
      %vm648 = vcmp.eq.f32.partialorder %v645, inf
      %v649 = vsel %vm648, %v645, %v647
      %vm650 = vcmp.eq.f32.partialorder %v645, 0.0
      %v651 = vand.u32 %v645, 2147483648
      %v652 = vsel %vm650, %v651, %v649
      %v653 = vadd.f32 %v641, %v652
      %vm654 = vcmp.eq.f32.partialorder %v653, 0.0
      %v655 = vsel %vm654, 1.0, %v653
      %v656 = vrcp.pop %v655
      %v657 = vmul.f32 %v640, %v656
      %v658 = vmul.f32 %v657, %v657
      %v659 = vadd.f32 %v658, 1.0
      %v660 = vrsqrt.pop %v659
      %v661 = vmul.f32 %v657, %v660
      %v662 = vmul.f32 %v657, %v632
      %v663 = vsub.f32 %v628, %v662
      %v664 = vadd.f32 %v594, %v662
      %v665 = vmul.f32 %v660, 0.0
      %v666 = vmul.f32 %v661, %v635
      %v667 = vsub.f32 %v665, %v666
      %v668 = vmul.f32 %v661, 0.0
      %v669 = vmul.f32 %v660, %v635
      %v670 = vadd.f32 %v668, %v669
      %v671 = vsub.f32 %v664, %v629
      %v672 = vmul.f32 %v670, 2.0
      %vm673 = vcmp.ge.f32.partialorder %v671, 0.0
      %v674 = vsel %vm673, 1.0, -1.0
      %v675 = vmul.f32 %v672, %v674
      %v676 = vand.u32 2147483647, %v671
      %v677 = vmul.f32 %v671, %v671
      %v678 = vmul.f32 %v670, %v670
      %v679 = vmul.f32 %v678, 4.0
      %v680 = vadd.f32 %v677, %v679
      %v681 = vrsqrt.pop %v680
      %v682 = vmul.f32 %v680, %v681
      %vm683 = vcmp.eq.f32.partialorder %v680, inf
      %v684 = vsel %vm683, %v680, %v682
      %vm685 = vcmp.eq.f32.partialorder %v680, 0.0
      %v686 = vand.u32 %v680, 2147483648
      %v687 = vsel %vm685, %v686, %v684
      %v688 = vadd.f32 %v676, %v687
      %vm689 = vcmp.eq.f32.partialorder %v688, 0.0
      %v690 = vsel %vm689, 1.0, %v688
      %v691 = vrcp.pop %v690
      %v692 = vmul.f32 %v675, %v691
      %v693 = vmul.f32 %v692, %v692
      %v694 = vadd.f32 %v693, 1.0
      %v695 = vrsqrt.pop %v694
      %v696 = vmul.f32 %v692, %v695
      %v697 = vmul.f32 %v692, %v670
      %v698 = vsub.f32 %v629, %v697
      %v699 = vadd.f32 %v664, %v697
      %v700 = vmul.f32 %v695, %v667
      %v701 = vmul.f32 %v696, 0.0
      %v702 = vsub.f32 %v700, %v701
      %v703 = vmul.f32 %v696, %v667
      %v704 = vmul.f32 %v695, 0.0
      %v705 = vadd.f32 %v703, %v704
      %v706 = vsub.f32 %v698, %v663
      %v707 = vmul.f32 %v702, 2.0
      %vm708 = vcmp.ge.f32.partialorder %v706, 0.0
      %v709 = vsel %vm708, 1.0, -1.0
      %v710 = vmul.f32 %v707, %v709
      %v711 = vand.u32 2147483647, %v706
      %v712 = vmul.f32 %v706, %v706
      %v713 = vmul.f32 %v702, %v702
      %v714 = vmul.f32 %v713, 4.0
      %v715 = vadd.f32 %v712, %v714
      %v716 = vrsqrt.pop %v715
      %v717 = vmul.f32 %v715, %v716
      %vm718 = vcmp.eq.f32.partialorder %v715, inf
      %v719 = vsel %vm718, %v715, %v717
      %vm720 = vcmp.eq.f32.partialorder %v715, 0.0
      %v721 = vand.u32 %v715, 2147483648
      %v722 = vsel %vm720, %v721, %v719
      %v723 = vadd.f32 %v711, %v722
      %vm724 = vcmp.eq.f32.partialorder %v723, 0.0
      %v725 = vsel %vm724, 1.0, %v723
      %v726 = vrcp.pop %v725
      %v727 = vmul.f32 %v710, %v726
      %v728 = vmul.f32 %v727, %v727
      %v729 = vadd.f32 %v728, 1.0
      %v730 = vrsqrt.pop %v729
      %v731 = vmul.f32 %v727, %v730
      %v732 = vmul.f32 %v727, %v702
      %v733 = vsub.f32 %v663, %v732
      %v734 = vadd.f32 %v698, %v732
      %v735 = vmul.f32 %v730, %v705
      %v736 = vmul.f32 %v731, 0.0
      %v737 = vsub.f32 %v735, %v736
      %v738 = vmul.f32 %v731, %v705
      %v739 = vmul.f32 %v730, 0.0
      %v740 = vadd.f32 %v738, %v739
      %v741 = vsub.f32 %v699, %v733
      %v742 = vmul.f32 %v737, 2.0
      %vm743 = vcmp.ge.f32.partialorder %v741, 0.0
      %v744 = vsel %vm743, 1.0, -1.0
      %v745 = vmul.f32 %v742, %v744
      %v746 = vand.u32 2147483647, %v741
      %v747 = vmul.f32 %v741, %v741
      %v748 = vmul.f32 %v737, %v737
      %v749 = vmul.f32 %v748, 4.0
      %v750 = vadd.f32 %v747, %v749
      %v751 = vrsqrt.pop %v750
      %v752 = vmul.f32 %v750, %v751
      %vm753 = vcmp.eq.f32.partialorder %v750, inf
      %v754 = vsel %vm753, %v750, %v752
      %vm755 = vcmp.eq.f32.partialorder %v750, 0.0
      %v756 = vand.u32 %v750, 2147483648
      %v757 = vsel %vm755, %v756, %v754
      %v758 = vadd.f32 %v746, %v757
      %vm759 = vcmp.eq.f32.partialorder %v758, 0.0
      %v760 = vsel %vm759, 1.0, %v758
      %v761 = vrcp.pop %v760
      %v762 = vmul.f32 %v745, %v761
      %v763 = vmul.f32 %v762, %v762
      %v764 = vadd.f32 %v763, 1.0
      %v765 = vrsqrt.pop %v764
      %v766 = vmul.f32 %v762, %v765
      %v767 = vmul.f32 %v762, %v737
      %v768 = vsub.f32 %v733, %v767
      %v769 = vadd.f32 %v699, %v767
      %v770 = vmul.f32 %v765, 0.0
      %v771 = vmul.f32 %v766, %v740
      %v772 = vsub.f32 %v770, %v771
      %v773 = vmul.f32 %v766, 0.0
      %v774 = vmul.f32 %v765, %v740
      %v775 = vadd.f32 %v773, %v774
      %v776 = vsub.f32 %v769, %v734
      %v777 = vmul.f32 %v775, 2.0
      %vm778 = vcmp.ge.f32.partialorder %v776, 0.0
      %v779 = vsel %vm778, 1.0, -1.0
      %v780 = vmul.f32 %v777, %v779
      %v781 = vand.u32 2147483647, %v776
      %v782 = vmul.f32 %v776, %v776
      %v783 = vmul.f32 %v775, %v775
      %v784 = vmul.f32 %v783, 4.0
      %v785 = vadd.f32 %v782, %v784
      %v786 = vrsqrt.pop %v785
      %v787 = vmul.f32 %v785, %v786
      %vm788 = vcmp.eq.f32.partialorder %v785, inf
      %v789 = vsel %vm788, %v785, %v787
      %vm790 = vcmp.eq.f32.partialorder %v785, 0.0
      %v791 = vand.u32 %v785, 2147483648
      %v792 = vsel %vm790, %v791, %v789
      %v793 = vadd.f32 %v781, %v792
      %vm794 = vcmp.eq.f32.partialorder %v793, 0.0
      %v795 = vsel %vm794, 1.0, %v793
      %v796 = vrcp.pop %v795
      %v797 = vmul.f32 %v780, %v796
      %v798 = vmul.f32 %v797, %v797
      %v799 = vadd.f32 %v798, 1.0
      %v800 = vrsqrt.pop %v799
      %v801 = vmul.f32 %v797, %v800
      %v802 = vmul.f32 %v797, %v775
      %v803 = vsub.f32 %v734, %v802
      %v804 = vadd.f32 %v769, %v802
      %v805 = vmul.f32 %v800, %v772
      %v806 = vmul.f32 %v801, 0.0
      %v807 = vsub.f32 %v805, %v806
      %v808 = vmul.f32 %v801, %v772
      %v809 = vmul.f32 %v800, 0.0
      %v810 = vadd.f32 %v808, %v809
      %v811 = vsub.f32 %v803, %v768
      %v812 = vmul.f32 %v807, 2.0
      %vm813 = vcmp.ge.f32.partialorder %v811, 0.0
      %v814 = vsel %vm813, 1.0, -1.0
      %v815 = vmul.f32 %v812, %v814
      %v816 = vand.u32 2147483647, %v811
      %v817 = vmul.f32 %v811, %v811
      %v818 = vmul.f32 %v807, %v807
      %v819 = vmul.f32 %v818, 4.0
      %v820 = vadd.f32 %v817, %v819
      %v821 = vrsqrt.pop %v820
      %v822 = vmul.f32 %v820, %v821
      %vm823 = vcmp.eq.f32.partialorder %v820, inf
      %v824 = vsel %vm823, %v820, %v822
      %vm825 = vcmp.eq.f32.partialorder %v820, 0.0
      %v826 = vand.u32 %v820, 2147483648
      %v827 = vsel %vm825, %v826, %v824
      %v828 = vadd.f32 %v816, %v827
      %vm829 = vcmp.eq.f32.partialorder %v828, 0.0
      %v830 = vsel %vm829, 1.0, %v828
      %v831 = vrcp.pop %v830
      %v832 = vmul.f32 %v815, %v831
      %v833 = vmul.f32 %v832, %v832
      %v834 = vadd.f32 %v833, 1.0
      %v835 = vrsqrt.pop %v834
      %v836 = vmul.f32 %v832, %v835
      %v837 = vmul.f32 %v832, %v807
      %v838 = vsub.f32 %v768, %v837
      %v839 = vadd.f32 %v803, %v837
      %v840 = vmul.f32 %v835, %v810
      %v841 = vmul.f32 %v836, 0.0
      %v842 = vsub.f32 %v840, %v841
      %v843 = vmul.f32 %v836, %v810
      %v844 = vmul.f32 %v835, 0.0
      %v845 = vadd.f32 %v843, %v844
      %v846 = vsub.f32 %v804, %v838
      %v847 = vmul.f32 %v842, 2.0
      %vm848 = vcmp.ge.f32.partialorder %v846, 0.0
      %v849 = vsel %vm848, 1.0, -1.0
      %v850 = vmul.f32 %v847, %v849
      %v851 = vand.u32 2147483647, %v846
      %v852 = vmul.f32 %v846, %v846
      %v853 = vmul.f32 %v842, %v842
      %v854 = vmul.f32 %v853, 4.0
      %v855 = vadd.f32 %v852, %v854
      %v856 = vrsqrt.pop %v855
      %v857 = vmul.f32 %v855, %v856
      %vm858 = vcmp.eq.f32.partialorder %v855, inf
      %v859 = vsel %vm858, %v855, %v857
      %vm860 = vcmp.eq.f32.partialorder %v855, 0.0
      %v861 = vand.u32 %v855, 2147483648
      %v862 = vsel %vm860, %v861, %v859
      %v863 = vadd.f32 %v851, %v862
      %vm864 = vcmp.eq.f32.partialorder %v863, 0.0
      %v865 = vsel %vm864, 1.0, %v863
      %v866 = vrcp.pop %v865
      %v867 = vmul.f32 %v850, %v866
      %v868 = vmul.f32 %v867, %v867
      %v869 = vadd.f32 %v868, 1.0
      %v870 = vrsqrt.pop %v869
      %v871 = vmul.f32 %v867, %v870
      %v872 = vmul.f32 %v867, %v842
      %v873 = vsub.f32 %v838, %v872
      %v874 = vadd.f32 %v804, %v872
      %v875 = vmul.f32 %v871, 0.0
      %v876 = vmul.f32 %v870, %v845
      %v877 = vadd.f32 %v875, %v876
      %v878 = vsub.f32 %v874, %v839
      %v879 = vmul.f32 %v877, 2.0
      %vm880 = vcmp.ge.f32.partialorder %v878, 0.0
      %v881 = vsel %vm880, 1.0, -1.0
      %v882 = vmul.f32 %v879, %v881
      %v883 = vand.u32 2147483647, %v878
      %v884 = vmul.f32 %v878, %v878
      %v885 = vmul.f32 %v877, %v877
      %v886 = vmul.f32 %v885, 4.0
      %v887 = vadd.f32 %v884, %v886
      %v888 = vrsqrt.pop %v887
      %v889 = vmul.f32 %v887, %v888
      %vm890 = vcmp.eq.f32.partialorder %v887, inf
      %v891 = vsel %vm890, %v887, %v889
      %vm892 = vcmp.eq.f32.partialorder %v887, 0.0
      %v893 = vand.u32 %v887, 2147483648
      %v894 = vsel %vm892, %v893, %v891
      %v895 = vadd.f32 %v883, %v894
      %vm896 = vcmp.eq.f32.partialorder %v895, 0.0
      %v897 = vsel %vm896, 1.0, %v895
      %v898 = vrcp.pop %v897
      %v899 = vmul.f32 %v882, %v898
      %v900 = vmul.f32 %v899, %v877
      %v901 = vsub.f32 %v839, %v900
      %v902 = vadd.f32 %v874, %v900
      %v903 = vmin.f32 %v873, %v901
      %v904 = vmin.f32 %v903, %v902
      %v905 = vmax.f32 %v873, %v901
      %v906 = vmax.f32 %v905, %v902
      %v907 = vadd.f32 %v873, %v901
      %v908 = vadd.f32 %v907, %v902
      %v909 = vsub.f32 %v908, %v904
      %v910 = vsub.f32 %v909, %v906
      %v911 = vsub.f32 %v386, %v380
      %v912 = vmul.f32 %v382, 2.0
      %vm913 = vcmp.ge.f32.partialorder %v911, 0.0
      %v914 = vsel %vm913, 1.0, -1.0
      %v915 = vmul.f32 %v912, %v914
      %v916 = vand.u32 2147483647, %v911
      %v917 = vmul.f32 %v911, %v911
      %v918 = vmul.f32 %v382, %v382
      %v919 = vmul.f32 %v918, 4.0
      %v920 = vadd.f32 %v917, %v919
      %v921 = vrsqrt.pop %v920
      %v922 = vmul.f32 %v920, %v921
      %vm923 = vcmp.eq.f32.partialorder %v920, inf
      %v924 = vsel %vm923, %v920, %v922
      %vm925 = vcmp.eq.f32.partialorder %v920, 0.0
      %v926 = vand.u32 %v920, 2147483648
      %v927 = vsel %vm925, %v926, %v924
      %v928 = vadd.f32 %v916, %v927
      %vm929 = vcmp.eq.f32.partialorder %v928, 0.0
      %v930 = vsel %vm929, 1.0, %v928
      %v931 = vrcp.pop %v930
      %v932 = vmul.f32 %v915, %v931
      %v933 = vmul.f32 %v932, %v932
      %v934 = vadd.f32 %v933, 1.0
      %v935 = vrsqrt.pop %v934
      %v936 = vmul.f32 %v932, %v935
      %v937 = vmul.f32 %v932, %v382
      %v938 = vsub.f32 %v380, %v937
      %v939 = vadd.f32 %v386, %v937
      %v940 = vmul.f32 %v935, %v384
      %v941 = vmul.f32 %v936, %v388
      %v942 = vsub.f32 %v940, %v941
      %v943 = vmul.f32 %v936, %v384
      %v944 = vmul.f32 %v935, %v388
      %v945 = vadd.f32 %v943, %v944
      %v946 = vsub.f32 %v390, %v938
      %v947 = vmul.f32 %v942, 2.0
      %vm948 = vcmp.ge.f32.partialorder %v946, 0.0
      %v949 = vsel %vm948, 1.0, -1.0
      %v950 = vmul.f32 %v947, %v949
      %v951 = vand.u32 2147483647, %v946
      %v952 = vmul.f32 %v946, %v946
      %v953 = vmul.f32 %v942, %v942
      %v954 = vmul.f32 %v953, 4.0
      %v955 = vadd.f32 %v952, %v954
      %v956 = vrsqrt.pop %v955
      %v957 = vmul.f32 %v955, %v956
      %vm958 = vcmp.eq.f32.partialorder %v955, inf
      %v959 = vsel %vm958, %v955, %v957
      %vm960 = vcmp.eq.f32.partialorder %v955, 0.0
      %v961 = vand.u32 %v955, 2147483648
      %v962 = vsel %vm960, %v961, %v959
      %v963 = vadd.f32 %v951, %v962
      %vm964 = vcmp.eq.f32.partialorder %v963, 0.0
      %v965 = vsel %vm964, 1.0, %v963
      %v966 = vrcp.pop %v965
      %v967 = vmul.f32 %v950, %v966
      %v968 = vmul.f32 %v967, %v967
      %v969 = vadd.f32 %v968, 1.0
      %v970 = vrsqrt.pop %v969
      %v971 = vmul.f32 %v967, %v970
      %v972 = vmul.f32 %v967, %v942
      %v973 = vsub.f32 %v938, %v972
      %v974 = vadd.f32 %v390, %v972
      %v975 = vmul.f32 %v970, 0.0
      %v976 = vmul.f32 %v971, %v945
      %v977 = vsub.f32 %v975, %v976
      %v978 = vmul.f32 %v971, 0.0
      %v979 = vmul.f32 %v970, %v945
      %v980 = vadd.f32 %v978, %v979
      %v981 = vsub.f32 %v974, %v939
      %v982 = vmul.f32 %v980, 2.0
      %vm983 = vcmp.ge.f32.partialorder %v981, 0.0
      %v984 = vsel %vm983, 1.0, -1.0
      %v985 = vmul.f32 %v982, %v984
      %v986 = vand.u32 2147483647, %v981
      %v987 = vmul.f32 %v981, %v981
      %v988 = vmul.f32 %v980, %v980
      %v989 = vmul.f32 %v988, 4.0
      %v990 = vadd.f32 %v987, %v989
      %v991 = vrsqrt.pop %v990
      %v992 = vmul.f32 %v990, %v991
      %vm993 = vcmp.eq.f32.partialorder %v990, inf
      %v994 = vsel %vm993, %v990, %v992
      %vm995 = vcmp.eq.f32.partialorder %v990, 0.0
      %v996 = vand.u32 %v990, 2147483648
      %v997 = vsel %vm995, %v996, %v994
      %v998 = vadd.f32 %v986, %v997
      %vm999 = vcmp.eq.f32.partialorder %v998, 0.0
      %v1000 = vsel %vm999, 1.0, %v998
      %v1001 = vrcp.pop %v1000
      %v1002 = vmul.f32 %v985, %v1001
      %v1003 = vmul.f32 %v1002, %v1002
      %v1004 = vadd.f32 %v1003, 1.0
      %v1005 = vrsqrt.pop %v1004
      %v1006 = vmul.f32 %v1002, %v1005
      %v1007 = vmul.f32 %v1002, %v980
      %v1008 = vsub.f32 %v939, %v1007
      %v1009 = vadd.f32 %v974, %v1007
      %v1010 = vmul.f32 %v1005, %v977
      %v1011 = vmul.f32 %v1006, 0.0
      %v1012 = vsub.f32 %v1010, %v1011
      %v1013 = vmul.f32 %v1006, %v977
      %v1014 = vmul.f32 %v1005, 0.0
      %v1015 = vadd.f32 %v1013, %v1014
      %v1016 = vsub.f32 %v1008, %v973
      %v1017 = vmul.f32 %v1012, 2.0
      %vm1018 = vcmp.ge.f32.partialorder %v1016, 0.0
      %v1019 = vsel %vm1018, 1.0, -1.0
      %v1020 = vmul.f32 %v1017, %v1019
      %v1021 = vand.u32 2147483647, %v1016
      %v1022 = vmul.f32 %v1016, %v1016
      %v1023 = vmul.f32 %v1012, %v1012
      %v1024 = vmul.f32 %v1023, 4.0
      %v1025 = vadd.f32 %v1022, %v1024
      %v1026 = vrsqrt.pop %v1025
      %v1027 = vmul.f32 %v1025, %v1026
      %vm1028 = vcmp.eq.f32.partialorder %v1025, inf
      %v1029 = vsel %vm1028, %v1025, %v1027
      %vm1030 = vcmp.eq.f32.partialorder %v1025, 0.0
      %v1031 = vand.u32 %v1025, 2147483648
      %v1032 = vsel %vm1030, %v1031, %v1029
      %v1033 = vadd.f32 %v1021, %v1032
      %vm1034 = vcmp.eq.f32.partialorder %v1033, 0.0
      %v1035 = vsel %vm1034, 1.0, %v1033
      %v1036 = vrcp.pop %v1035
      %v1037 = vmul.f32 %v1020, %v1036
      %v1038 = vmul.f32 %v1037, %v1037
      %v1039 = vadd.f32 %v1038, 1.0
      %v1040 = vrsqrt.pop %v1039
      %v1041 = vmul.f32 %v1037, %v1040
      %v1042 = vmul.f32 %v1037, %v1012
      %v1043 = vsub.f32 %v973, %v1042
      %v1044 = vadd.f32 %v1008, %v1042
      %v1045 = vmul.f32 %v1040, %v1015
      %v1046 = vmul.f32 %v1041, 0.0
      %v1047 = vsub.f32 %v1045, %v1046
      %v1048 = vmul.f32 %v1041, %v1015
      %v1049 = vmul.f32 %v1040, 0.0
      %v1050 = vadd.f32 %v1048, %v1049
      %v1051 = vsub.f32 %v1009, %v1043
      %v1052 = vmul.f32 %v1047, 2.0
      %vm1053 = vcmp.ge.f32.partialorder %v1051, 0.0
      %v1054 = vsel %vm1053, 1.0, -1.0
      %v1055 = vmul.f32 %v1052, %v1054
      %v1056 = vand.u32 2147483647, %v1051
      %v1057 = vmul.f32 %v1051, %v1051
      %v1058 = vmul.f32 %v1047, %v1047
      %v1059 = vmul.f32 %v1058, 4.0
      %v1060 = vadd.f32 %v1057, %v1059
      %v1061 = vrsqrt.pop %v1060
      %v1062 = vmul.f32 %v1060, %v1061
      %vm1063 = vcmp.eq.f32.partialorder %v1060, inf
      %v1064 = vsel %vm1063, %v1060, %v1062
      %vm1065 = vcmp.eq.f32.partialorder %v1060, 0.0
      %v1066 = vand.u32 %v1060, 2147483648
      %v1067 = vsel %vm1065, %v1066, %v1064
      %v1068 = vadd.f32 %v1056, %v1067
      %vm1069 = vcmp.eq.f32.partialorder %v1068, 0.0
      %v1070 = vsel %vm1069, 1.0, %v1068
      %v1071 = vrcp.pop %v1070
      %v1072 = vmul.f32 %v1055, %v1071
      %v1073 = vmul.f32 %v1072, %v1072
      %v1074 = vadd.f32 %v1073, 1.0
      %v1075 = vrsqrt.pop %v1074
      %v1076 = vmul.f32 %v1072, %v1075
      %v1077 = vmul.f32 %v1072, %v1047
      %v1078 = vsub.f32 %v1043, %v1077
      %v1079 = vadd.f32 %v1009, %v1077
      %v1080 = vmul.f32 %v1075, 0.0
      %v1081 = vmul.f32 %v1076, %v1050
      %v1082 = vsub.f32 %v1080, %v1081
      %v1083 = vmul.f32 %v1076, 0.0
      %v1084 = vmul.f32 %v1075, %v1050
      %v1085 = vadd.f32 %v1083, %v1084
      %v1086 = vsub.f32 %v1079, %v1044
      %v1087 = vmul.f32 %v1085, 2.0
      %vm1088 = vcmp.ge.f32.partialorder %v1086, 0.0
      %v1089 = vsel %vm1088, 1.0, -1.0
      %v1090 = vmul.f32 %v1087, %v1089
      %v1091 = vand.u32 2147483647, %v1086
      %v1092 = vmul.f32 %v1086, %v1086
      %v1093 = vmul.f32 %v1085, %v1085
      %v1094 = vmul.f32 %v1093, 4.0
      %v1095 = vadd.f32 %v1092, %v1094
      %v1096 = vrsqrt.pop %v1095
      %v1097 = vmul.f32 %v1095, %v1096
      %vm1098 = vcmp.eq.f32.partialorder %v1095, inf
      %v1099 = vsel %vm1098, %v1095, %v1097
      %vm1100 = vcmp.eq.f32.partialorder %v1095, 0.0
      %v1101 = vand.u32 %v1095, 2147483648
      %v1102 = vsel %vm1100, %v1101, %v1099
      %v1103 = vadd.f32 %v1091, %v1102
      %vm1104 = vcmp.eq.f32.partialorder %v1103, 0.0
      %v1105 = vsel %vm1104, 1.0, %v1103
      %v1106 = vrcp.pop %v1105
      %v1107 = vmul.f32 %v1090, %v1106
      %v1108 = vmul.f32 %v1107, %v1107
      %v1109 = vadd.f32 %v1108, 1.0
      %v1110 = vrsqrt.pop %v1109
      %v1111 = vmul.f32 %v1107, %v1110
      %v1112 = vmul.f32 %v1107, %v1085
      %v1113 = vsub.f32 %v1044, %v1112
      %v1114 = vadd.f32 %v1079, %v1112
      %v1115 = vmul.f32 %v1110, %v1082
      %v1116 = vmul.f32 %v1111, 0.0
      %v1117 = vsub.f32 %v1115, %v1116
      %v1118 = vmul.f32 %v1111, %v1082
      %v1119 = vmul.f32 %v1110, 0.0
      %v1120 = vadd.f32 %v1118, %v1119
      %v1121 = vsub.f32 %v1113, %v1078
      %v1122 = vmul.f32 %v1117, 2.0
      %vm1123 = vcmp.ge.f32.partialorder %v1121, 0.0
      %v1124 = vsel %vm1123, 1.0, -1.0
      %v1125 = vmul.f32 %v1122, %v1124
      %v1126 = vand.u32 2147483647, %v1121
      %v1127 = vmul.f32 %v1121, %v1121
      %v1128 = vmul.f32 %v1117, %v1117
      %v1129 = vmul.f32 %v1128, 4.0
      %v1130 = vadd.f32 %v1127, %v1129
      %v1131 = vrsqrt.pop %v1130
      %v1132 = vmul.f32 %v1130, %v1131
      %vm1133 = vcmp.eq.f32.partialorder %v1130, inf
      %v1134 = vsel %vm1133, %v1130, %v1132
      %vm1135 = vcmp.eq.f32.partialorder %v1130, 0.0
      %v1136 = vand.u32 %v1130, 2147483648
      %v1137 = vsel %vm1135, %v1136, %v1134
      %v1138 = vadd.f32 %v1126, %v1137
      %vm1139 = vcmp.eq.f32.partialorder %v1138, 0.0
      %v1140 = vsel %vm1139, 1.0, %v1138
      %v1141 = vrcp.pop %v1140
      %v1142 = vmul.f32 %v1125, %v1141
      %v1143 = vmul.f32 %v1142, %v1142
      %v1144 = vadd.f32 %v1143, 1.0
      %v1145 = vrsqrt.pop %v1144
      %v1146 = vmul.f32 %v1142, %v1145
      %v1147 = vmul.f32 %v1142, %v1117
      %v1148 = vsub.f32 %v1078, %v1147
      %v1149 = vadd.f32 %v1113, %v1147
      %v1150 = vmul.f32 %v1145, %v1120
      %v1151 = vmul.f32 %v1146, 0.0
      %v1152 = vsub.f32 %v1150, %v1151
      %v1153 = vmul.f32 %v1146, %v1120
      %v1154 = vmul.f32 %v1145, 0.0
      %v1155 = vadd.f32 %v1153, %v1154
      %v1156 = vsub.f32 %v1114, %v1148
      %v1157 = vmul.f32 %v1152, 2.0
      %vm1158 = vcmp.ge.f32.partialorder %v1156, 0.0
      %v1159 = vsel %vm1158, 1.0, -1.0
      %v1160 = vmul.f32 %v1157, %v1159
      %v1161 = vand.u32 2147483647, %v1156
      %v1162 = vmul.f32 %v1156, %v1156
      %v1163 = vmul.f32 %v1152, %v1152
      %v1164 = vmul.f32 %v1163, 4.0
      %v1165 = vadd.f32 %v1162, %v1164
      %v1166 = vrsqrt.pop %v1165
      %v1167 = vmul.f32 %v1165, %v1166
      %vm1168 = vcmp.eq.f32.partialorder %v1165, inf
      %v1169 = vsel %vm1168, %v1165, %v1167
      %vm1170 = vcmp.eq.f32.partialorder %v1165, 0.0
      %v1171 = vand.u32 %v1165, 2147483648
      %v1172 = vsel %vm1170, %v1171, %v1169
      %v1173 = vadd.f32 %v1161, %v1172
      %vm1174 = vcmp.eq.f32.partialorder %v1173, 0.0
      %v1175 = vsel %vm1174, 1.0, %v1173
      %v1176 = vrcp.pop %v1175
      %v1177 = vmul.f32 %v1160, %v1176
      %v1178 = vmul.f32 %v1177, %v1177
      %v1179 = vadd.f32 %v1178, 1.0
      %v1180 = vrsqrt.pop %v1179
      %v1181 = vmul.f32 %v1177, %v1180
      %v1182 = vmul.f32 %v1177, %v1152
      %v1183 = vsub.f32 %v1148, %v1182
      %v1184 = vadd.f32 %v1114, %v1182
      %v1185 = vmul.f32 %v1180, 0.0
      %v1186 = vmul.f32 %v1181, %v1155
      %v1187 = vsub.f32 %v1185, %v1186
      %v1188 = vmul.f32 %v1181, 0.0
      %v1189 = vmul.f32 %v1180, %v1155
      %v1190 = vadd.f32 %v1188, %v1189
      %v1191 = vsub.f32 %v1184, %v1149
      %v1192 = vmul.f32 %v1190, 2.0
      %vm1193 = vcmp.ge.f32.partialorder %v1191, 0.0
      %v1194 = vsel %vm1193, 1.0, -1.0
      %v1195 = vmul.f32 %v1192, %v1194
      %v1196 = vand.u32 2147483647, %v1191
      %v1197 = vmul.f32 %v1191, %v1191
      %v1198 = vmul.f32 %v1190, %v1190
      %v1199 = vmul.f32 %v1198, 4.0
      %v1200 = vadd.f32 %v1197, %v1199
      %v1201 = vrsqrt.pop %v1200
      %v1202 = vmul.f32 %v1200, %v1201
      %vm1203 = vcmp.eq.f32.partialorder %v1200, inf
      %v1204 = vsel %vm1203, %v1200, %v1202
      %vm1205 = vcmp.eq.f32.partialorder %v1200, 0.0
      %v1206 = vand.u32 %v1200, 2147483648
      %v1207 = vsel %vm1205, %v1206, %v1204
      %v1208 = vadd.f32 %v1196, %v1207
      %vm1209 = vcmp.eq.f32.partialorder %v1208, 0.0
      %v1210 = vsel %vm1209, 1.0, %v1208
      %v1211 = vrcp.pop %v1210
      %v1212 = vmul.f32 %v1195, %v1211
      %v1213 = vmul.f32 %v1212, %v1212
      %v1214 = vadd.f32 %v1213, 1.0
      %v1215 = vrsqrt.pop %v1214
      %v1216 = vmul.f32 %v1212, %v1215
      %v1217 = vmul.f32 %v1212, %v1190
      %v1218 = vsub.f32 %v1149, %v1217
      %v1219 = vadd.f32 %v1184, %v1217
      %v1220 = vmul.f32 %v1215, %v1187
      %v1221 = vmul.f32 %v1216, 0.0
      %v1222 = vsub.f32 %v1220, %v1221
      %v1223 = vmul.f32 %v1216, %v1187
      %v1224 = vmul.f32 %v1215, 0.0
      %v1225 = vadd.f32 %v1223, %v1224
      %v1226 = vsub.f32 %v1218, %v1183
      %v1227 = vmul.f32 %v1222, 2.0
      %vm1228 = vcmp.ge.f32.partialorder %v1226, 0.0
      %v1229 = vsel %vm1228, 1.0, -1.0
      %v1230 = vmul.f32 %v1227, %v1229
      %v1231 = vand.u32 2147483647, %v1226
      %v1232 = vmul.f32 %v1226, %v1226
      %v1233 = vmul.f32 %v1222, %v1222
      %v1234 = vmul.f32 %v1233, 4.0
      %v1235 = vadd.f32 %v1232, %v1234
      %v1236 = vrsqrt.pop %v1235
      %v1237 = vmul.f32 %v1235, %v1236
      %vm1238 = vcmp.eq.f32.partialorder %v1235, inf
      %v1239 = vsel %vm1238, %v1235, %v1237
      %vm1240 = vcmp.eq.f32.partialorder %v1235, 0.0
      %v1241 = vand.u32 %v1235, 2147483648
      %v1242 = vsel %vm1240, %v1241, %v1239
      %v1243 = vadd.f32 %v1231, %v1242
      %vm1244 = vcmp.eq.f32.partialorder %v1243, 0.0
      %v1245 = vsel %vm1244, 1.0, %v1243
      %v1246 = vrcp.pop %v1245
      %v1247 = vmul.f32 %v1230, %v1246
      %v1248 = vmul.f32 %v1247, %v1247
      %v1249 = vadd.f32 %v1248, 1.0
      %v1250 = vrsqrt.pop %v1249
      %v1251 = vmul.f32 %v1247, %v1250
      %v1252 = vmul.f32 %v1247, %v1222
      %v1253 = vsub.f32 %v1183, %v1252
      %v1254 = vadd.f32 %v1218, %v1252
      %v1255 = vmul.f32 %v1250, %v1225
      %v1256 = vmul.f32 %v1251, 0.0
      %v1257 = vsub.f32 %v1255, %v1256
      %v1258 = vmul.f32 %v1251, %v1225
      %v1259 = vmul.f32 %v1250, 0.0
      %v1260 = vadd.f32 %v1258, %v1259
      %v1261 = vsub.f32 %v1219, %v1253
      %v1262 = vmul.f32 %v1257, 2.0
      %vm1263 = vcmp.ge.f32.partialorder %v1261, 0.0
      %v1264 = vsel %vm1263, 1.0, -1.0
      %v1265 = vmul.f32 %v1262, %v1264
      %v1266 = vand.u32 2147483647, %v1261
      %v1267 = vmul.f32 %v1261, %v1261
      %v1268 = vmul.f32 %v1257, %v1257
      %v1269 = vmul.f32 %v1268, 4.0
      %v1270 = vadd.f32 %v1267, %v1269
      %v1271 = vrsqrt.pop %v1270
      %v1272 = vmul.f32 %v1270, %v1271
      %vm1273 = vcmp.eq.f32.partialorder %v1270, inf
      %v1274 = vsel %vm1273, %v1270, %v1272
      %vm1275 = vcmp.eq.f32.partialorder %v1270, 0.0
      %v1276 = vand.u32 %v1270, 2147483648
      %v1277 = vsel %vm1275, %v1276, %v1274
      %v1278 = vadd.f32 %v1266, %v1277
      %vm1279 = vcmp.eq.f32.partialorder %v1278, 0.0
      %v1280 = vsel %vm1279, 1.0, %v1278
      %v1281 = vrcp.pop %v1280
      %v1282 = vmul.f32 %v1265, %v1281
      %v1283 = vmul.f32 %v1282, %v1282
      %v1284 = vadd.f32 %v1283, 1.0
      %v1285 = vrsqrt.pop %v1284
      %v1286 = vmul.f32 %v1282, %v1285
      %v1287 = vmul.f32 %v1282, %v1257
      %v1288 = vsub.f32 %v1253, %v1287
      %v1289 = vadd.f32 %v1219, %v1287
      %v1290 = vmul.f32 %v1285, 0.0
      %v1291 = vmul.f32 %v1286, %v1260
      %v1292 = vsub.f32 %v1290, %v1291
      %v1293 = vmul.f32 %v1286, 0.0
      %v1294 = vmul.f32 %v1285, %v1260
      %v1295 = vadd.f32 %v1293, %v1294
      %v1296 = vsub.f32 %v1289, %v1254
      %v1297 = vmul.f32 %v1295, 2.0
      %vm1298 = vcmp.ge.f32.partialorder %v1296, 0.0
      %v1299 = vsel %vm1298, 1.0, -1.0
      %v1300 = vmul.f32 %v1297, %v1299
      %v1301 = vand.u32 2147483647, %v1296
      %v1302 = vmul.f32 %v1296, %v1296
      %v1303 = vmul.f32 %v1295, %v1295
      %v1304 = vmul.f32 %v1303, 4.0
      %v1305 = vadd.f32 %v1302, %v1304
      %v1306 = vrsqrt.pop %v1305
      %v1307 = vmul.f32 %v1305, %v1306
      %vm1308 = vcmp.eq.f32.partialorder %v1305, inf
      %v1309 = vsel %vm1308, %v1305, %v1307
      %vm1310 = vcmp.eq.f32.partialorder %v1305, 0.0
      %v1311 = vand.u32 %v1305, 2147483648
      %v1312 = vsel %vm1310, %v1311, %v1309
      %v1313 = vadd.f32 %v1301, %v1312
      %vm1314 = vcmp.eq.f32.partialorder %v1313, 0.0
      %v1315 = vsel %vm1314, 1.0, %v1313
      %v1316 = vrcp.pop %v1315
      %v1317 = vmul.f32 %v1300, %v1316
      %v1318 = vmul.f32 %v1317, %v1317
      %v1319 = vadd.f32 %v1318, 1.0
      %v1320 = vrsqrt.pop %v1319
      %v1321 = vmul.f32 %v1317, %v1320
      %v1322 = vmul.f32 %v1317, %v1295
      %v1323 = vsub.f32 %v1254, %v1322
      %v1324 = vadd.f32 %v1289, %v1322
      %v1325 = vmul.f32 %v1320, %v1292
      %v1326 = vmul.f32 %v1321, 0.0
      %v1327 = vsub.f32 %v1325, %v1326
      %v1328 = vmul.f32 %v1321, %v1292
      %v1329 = vmul.f32 %v1320, 0.0
      %v1330 = vadd.f32 %v1328, %v1329
      %v1331 = vsub.f32 %v1323, %v1288
      %v1332 = vmul.f32 %v1327, 2.0
      %vm1333 = vcmp.ge.f32.partialorder %v1331, 0.0
      %v1334 = vsel %vm1333, 1.0, -1.0
      %v1335 = vmul.f32 %v1332, %v1334
      %v1336 = vand.u32 2147483647, %v1331
      %v1337 = vmul.f32 %v1331, %v1331
      %v1338 = vmul.f32 %v1327, %v1327
      %v1339 = vmul.f32 %v1338, 4.0
      %v1340 = vadd.f32 %v1337, %v1339
      %v1341 = vrsqrt.pop %v1340
      %v1342 = vmul.f32 %v1340, %v1341
      %vm1343 = vcmp.eq.f32.partialorder %v1340, inf
      %v1344 = vsel %vm1343, %v1340, %v1342
      %vm1345 = vcmp.eq.f32.partialorder %v1340, 0.0
      %v1346 = vand.u32 %v1340, 2147483648
      %v1347 = vsel %vm1345, %v1346, %v1344
      %v1348 = vadd.f32 %v1336, %v1347
      %vm1349 = vcmp.eq.f32.partialorder %v1348, 0.0
      %v1350 = vsel %vm1349, 1.0, %v1348
      %v1351 = vrcp.pop %v1350
      %v1352 = vmul.f32 %v1335, %v1351
      %v1353 = vmul.f32 %v1352, %v1352
      %v1354 = vadd.f32 %v1353, 1.0
      %v1355 = vrsqrt.pop %v1354
      %v1356 = vmul.f32 %v1352, %v1355
      %v1357 = vmul.f32 %v1352, %v1327
      %v1358 = vsub.f32 %v1288, %v1357
      %v1359 = vadd.f32 %v1323, %v1357
      %v1360 = vmul.f32 %v1355, %v1330
      %v1361 = vmul.f32 %v1356, 0.0
      %v1362 = vsub.f32 %v1360, %v1361
      %v1363 = vmul.f32 %v1356, %v1330
      %v1364 = vmul.f32 %v1355, 0.0
      %v1365 = vadd.f32 %v1363, %v1364
      %v1366 = vsub.f32 %v1324, %v1358
      %v1367 = vmul.f32 %v1362, 2.0
      %vm1368 = vcmp.ge.f32.partialorder %v1366, 0.0
      %v1369 = vsel %vm1368, 1.0, -1.0
      %v1370 = vmul.f32 %v1367, %v1369
      %v1371 = vand.u32 2147483647, %v1366
      %v1372 = vmul.f32 %v1366, %v1366
      %v1373 = vmul.f32 %v1362, %v1362
      %v1374 = vmul.f32 %v1373, 4.0
      %v1375 = vadd.f32 %v1372, %v1374
      %v1376 = vrsqrt.pop %v1375
      %v1377 = vmul.f32 %v1375, %v1376
      %vm1378 = vcmp.eq.f32.partialorder %v1375, inf
      %v1379 = vsel %vm1378, %v1375, %v1377
      %vm1380 = vcmp.eq.f32.partialorder %v1375, 0.0
      %v1381 = vand.u32 %v1375, 2147483648
      %v1382 = vsel %vm1380, %v1381, %v1379
      %v1383 = vadd.f32 %v1371, %v1382
      %vm1384 = vcmp.eq.f32.partialorder %v1383, 0.0
      %v1385 = vsel %vm1384, 1.0, %v1383
      %v1386 = vrcp.pop %v1385
      %v1387 = vmul.f32 %v1370, %v1386
      %v1388 = vmul.f32 %v1387, %v1387
      %v1389 = vadd.f32 %v1388, 1.0
      %v1390 = vrsqrt.pop %v1389
      %v1391 = vmul.f32 %v1387, %v1390
      %v1392 = vmul.f32 %v1387, %v1362
      %v1393 = vsub.f32 %v1358, %v1392
      %v1394 = vadd.f32 %v1324, %v1392
      %v1395 = vmul.f32 %v1391, 0.0
      %v1396 = vmul.f32 %v1390, %v1365
      %v1397 = vadd.f32 %v1395, %v1396
      %v1398 = vsub.f32 %v1394, %v1359
      %v1399 = vmul.f32 %v1397, 2.0
      %vm1400 = vcmp.ge.f32.partialorder %v1398, 0.0
      %v1401 = vsel %vm1400, 1.0, -1.0
      %v1402 = vmul.f32 %v1399, %v1401
      %v1403 = vand.u32 2147483647, %v1398
      %v1404 = vmul.f32 %v1398, %v1398
      %v1405 = vmul.f32 %v1397, %v1397
      %v1406 = vmul.f32 %v1405, 4.0
      %v1407 = vadd.f32 %v1404, %v1406
      %v1408 = vrsqrt.pop %v1407
      %v1409 = vmul.f32 %v1407, %v1408
      %vm1410 = vcmp.eq.f32.partialorder %v1407, inf
      %v1411 = vsel %vm1410, %v1407, %v1409
      %vm1412 = vcmp.eq.f32.partialorder %v1407, 0.0
      %v1413 = vand.u32 %v1407, 2147483648
      %v1414 = vsel %vm1412, %v1413, %v1411
      %v1415 = vadd.f32 %v1403, %v1414
      %vm1416 = vcmp.eq.f32.partialorder %v1415, 0.0
      %v1417 = vsel %vm1416, 1.0, %v1415
      %v1418 = vrcp.pop %v1417
      %v1419 = vmul.f32 %v1402, %v1418
      %v1420 = vmul.f32 %v1419, %v1397
      %v1421 = vsub.f32 %v1359, %v1420
      %v1422 = vadd.f32 %v1394, %v1420
      %v1423 = vmin.f32 %v1393, %v1421
      %v1424 = vmin.f32 %v1423, %v1422
      %v1425 = vmax.f32 %v1393, %v1421
      %v1426 = vmax.f32 %v1425, %v1422
      %v1427 = vadd.f32 %v1393, %v1421
      %v1428 = vadd.f32 %v1427, %v1422
      %v1429 = vsub.f32 %v1428, %v1424
      %v1430 = vsub.f32 %v1429, %v1426
      %v1431 = vsub.f32 %v369, %v904
      %v1432 = vsub.f32 %v375, %v904
      %v1433 = vsub.f32 %v379, %v904
      %v1434 = vsub.f32 %v369, %v910
      %v1435 = vsub.f32 %v375, %v910
      %v1436 = vsub.f32 %v379, %v910
      %v1437 = vmul.f32 %v373, %v373
      %v1438 = vmul.f32 %v377, %v377
      %v1439 = vmul.f32 %v1431, %v1434
      %v1440 = vadd.f32 %v1439, %v398
      %v1441 = vadd.f32 %v1440, %v1437
      %v1442 = vmul.f32 %v1432, %v1435
      %v1443 = vadd.f32 %v398, %v1442
      %v1444 = vadd.f32 %v1443, %v1438
      %v1445 = vadd.f32 %v1437, %v1438
      %v1446 = vmul.f32 %v1433, %v1436
      %v1447 = vadd.f32 %v1445, %v1446
      %v1448 = vmul.f32 %v1431, %v371
      %v1449 = vmul.f32 %v371, %v1435
      %v1450 = vadd.f32 %v1448, %v1449
      %v1451 = vmul.f32 %v373, %v377
      %v1452 = vadd.f32 %v1450, %v1451
      %v1453 = vmul.f32 %v1431, %v373
      %v1454 = vmul.f32 %v371, %v377
      %v1455 = vadd.f32 %v1453, %v1454
      %v1456 = vmul.f32 %v373, %v1436
      %v1457 = vadd.f32 %v1455, %v1456
      %v1458 = vmul.f32 %v371, %v373
      %v1459 = vmul.f32 %v1432, %v377
      %v1460 = vadd.f32 %v1458, %v1459
      %v1461 = vmul.f32 %v377, %v1436
      %v1462 = vadd.f32 %v1460, %v1461
      %v1463 = vmul.f32 %v1441, %v1441
      %v1464 = vmul.f32 %v1444, %v1444
      %v1465 = vmul.f32 %v1447, %v1447
      %v1466 = vmul.f32 %v1452, %v1452
      %v1467 = vmul.f32 %v1457, %v1457
      %v1468 = vmul.f32 %v1462, %v1462
      %v1469 = vadd.f32 %v1463, %v1466
      %v1470 = vadd.f32 %v1469, %v1467
      %v1471 = vadd.f32 %v1466, %v1464
      %v1472 = vadd.f32 %v1471, %v1468
      %v1473 = vadd.f32 %v1467, %v1468
      %v1474 = vadd.f32 %v1473, %v1465
      %vm1475 = vcmp.ge.f32.partialorder %v1470, %v1472
      %v1476 = vsel %vm1475, %v1441, %v1452
      %v1477 = vsel %vm1475, %v1452, %v1444
      %v1478 = vsel %vm1475, %v1457, %v1462
      %v1479 = vsel %vm1475, %v1470, %v1472
      %vm1480 = vcmp.gt.f32.partialorder %v1474, %v1479
      %v1481 = vsel %vm1480, %v1457, %v1476
      %v1482 = vsel %vm1480, %v1462, %v1477
      %v1483 = vsel %vm1480, %v1447, %v1478
      %v1484 = vsel %vm1480, %v1474, %v1479
      %v1485 = vsub.f32 %v380, %v1424
      %v1486 = vsub.f32 %v386, %v1424
      %v1487 = vsub.f32 %v390, %v1424
      %v1488 = vsub.f32 %v380, %v1430
      %v1489 = vsub.f32 %v386, %v1430
      %v1490 = vsub.f32 %v390, %v1430
      %v1491 = vmul.f32 %v384, %v384
      %v1492 = vmul.f32 %v388, %v388
      %v1493 = vmul.f32 %v1485, %v1488
      %v1494 = vadd.f32 %v1493, %v918
      %v1495 = vadd.f32 %v1494, %v1491
      %v1496 = vmul.f32 %v1486, %v1489
      %v1497 = vadd.f32 %v918, %v1496
      %v1498 = vadd.f32 %v1497, %v1492
      %v1499 = vadd.f32 %v1491, %v1492
      %v1500 = vmul.f32 %v1487, %v1490
      %v1501 = vadd.f32 %v1499, %v1500
      %v1502 = vmul.f32 %v1485, %v382
      %v1503 = vmul.f32 %v382, %v1489
      %v1504 = vadd.f32 %v1502, %v1503
      %v1505 = vmul.f32 %v384, %v388
      %v1506 = vadd.f32 %v1504, %v1505
      %v1507 = vmul.f32 %v1485, %v384
      %v1508 = vmul.f32 %v382, %v388
      %v1509 = vadd.f32 %v1507, %v1508
      %v1510 = vmul.f32 %v384, %v1490
      %v1511 = vadd.f32 %v1509, %v1510
      %v1512 = vmul.f32 %v382, %v384
      %v1513 = vmul.f32 %v1486, %v388
      %v1514 = vadd.f32 %v1512, %v1513
      %v1515 = vmul.f32 %v388, %v1490
      %v1516 = vadd.f32 %v1514, %v1515
      %v1517 = vmul.f32 %v1495, %v1495
      %v1518 = vmul.f32 %v1498, %v1498
      %v1519 = vmul.f32 %v1501, %v1501
      %v1520 = vmul.f32 %v1506, %v1506
      %v1521 = vmul.f32 %v1511, %v1511
      %v1522 = vmul.f32 %v1516, %v1516
      %v1523 = vadd.f32 %v1517, %v1520
      %v1524 = vadd.f32 %v1523, %v1521
      %v1525 = vadd.f32 %v1520, %v1518
      %v1526 = vadd.f32 %v1525, %v1522
      %v1527 = vadd.f32 %v1521, %v1522
      %v1528 = vadd.f32 %v1527, %v1519
      %vm1529 = vcmp.ge.f32.partialorder %v1524, %v1526
      %v1530 = vsel %vm1529, %v1495, %v1506
      %v1531 = vsel %vm1529, %v1506, %v1498
      %v1532 = vsel %vm1529, %v1511, %v1516
      %v1533 = vsel %vm1529, %v1524, %v1526
      %vm1534 = vcmp.gt.f32.partialorder %v1528, %v1533
      %v1535 = vsel %vm1534, %v1511, %v1530
      %v1536 = vsel %vm1534, %v1516, %v1531
      %v1537 = vsel %vm1534, %v1501, %v1532
      %v1538 = vsel %vm1534, %v1528, %v1533
      %v1539 = vsub.f32 %v904, %v1424
      %v1540 = vand.u32 2147483647, %v1539
      %v1541 = vsub.f32 %v910, %v1430
      %v1542 = vand.u32 2147483647, %v1541
      %v1543 = vadd.f32 %v1540, %v1542
      %v1544 = vsub.f32 %v906, %v1426
      %v1545 = vand.u32 2147483647, %v1544
      %v1546 = vadd.f32 %v1543, %v1545
      %v1547 = vmul.f32 %v1481, %v1535
      %v1548 = vmul.f32 %v1482, %v1536
      %v1549 = vadd.f32 %v1547, %v1548
      %v1550 = vmul.f32 %v1483, %v1537
      %v1551 = vadd.f32 %v1549, %v1550
      %v1552 = vmax.f32 %v1484, 1e-30
      %v1553 = vrsqrt.pop %v1552
      %v1554 = vmax.f32 %v1538, 1e-30
      %v1555 = vrsqrt.pop %v1554
      %v1556 = vmul.f32 %v1553, %v1555
      %v1557 = vand.u32 2147483647, %v1551
      %v1558 = vmul.f32 %v1557, %v1556
      %v1559 = vsel %vm368, %v1546, 0.0
      %v1560 = vadd.f32 %v1559, 0.0
      %v1561 = vsel %vm368, %v1558, 0.0
      %v1562 = vadd.f32 %v1561, 0.0
      %v1563 = vsel %vm368, 1.0, 0.0
      %v1564 = vadd.f32 %v1563, 0.0
      %v1565 = vld [vmem:[%s349] sm:$0xff]
      %v1566 = vadd.f32 %v1565, %v1560
      %1567 = vst [vmem:[%s349] sm:$0xff] %v1566
      %v1568 = vld [vmem:[%s353] sm:$0xff]
      %v1569 = vadd.f32 %v1568, %v1562
      %1570 = vst [vmem:[%s353] sm:$0xff] %v1569
      %v1571 = vld [vmem:[%s357] sm:$0xff]
      %v1572 = vadd.f32 %v1571, %v1564
      %1573 = vst [vmem:[%s357] sm:$0xff] %v1572
      %p1574 = scmp.lt.s32.totalorder %s22, 0
      %s1575 = scalar_select %p1574, %s22, 0
      %s1576 = smul.addr %s1575, 8
      %s1577 = scalar_lea.vmem %s3, %s1576
      %p1578 = scmp.lt.s32.totalorder %s22, 0
      %s1579 = scalar_select %p1578, %s22, 0
      %s1580 = smul.addr %s1579, 8
      %s1581 = scalar_lea.vmem %s4, %s1580
      %p1582 = scmp.lt.s32.totalorder %s22, 0
      %s1583 = scalar_select %p1582, %s22, 0
      %s1584 = smul.addr %s1583, 8
      %s1585 = scalar_lea.vmem %s5, %s1584
      // Predicated region
      $region37: #{av_loss.1} parent=31 // pred_check
        %p1586 = pneg %p144
      $region38: #{av_loss.1} parent=31 // pred_check_branch
        %1588 = sbr.rel (%p1586) target = $region40
      $region39: #{av_loss.1} parent=31 // pred_region
        _
      $region40: #{av_loss.1} parent=31 // pred_fallthru
        _
      // Predicated region
      $region41: #{av_loss.1} parent=31 // pred_check
        %p1589 = pneg %p170
      $region42: #{av_loss.1} parent=31 // pred_check_branch
        %1591 = sbr.rel (%p1589) target = $region44
      $region43: #{av_loss.1} parent=31 // pred_region
        _
      $region44: #{av_loss.1} parent=31 // pred_fallthru
        _
      // Predicated region
      $region45: #{av_loss.1} parent=31 // pred_check
        %p1592 = pneg %p196
      $region46: #{av_loss.1} parent=31 // pred_check_branch
        %1594 = sbr.rel (%p1592) target = $region48
      $region47: #{av_loss.1} parent=31 // pred_region
        _
      $region48: #{av_loss.1} parent=31 // pred_fallthru
        _
      // Predicated region
      $region49: #{av_loss.1} parent=31 // pred_check
        %p1595 = pneg %p144
      $region50: #{av_loss.1} parent=31 // pred_check_branch
        %1597 = sbr.rel (%p1595) target = $region52
      $region51: #{av_loss.1} parent=31 // pred_region
        %p1598 = scmp.lt.s32.totalorder %s22, 0
        %s1599 = scalar_select %p1598, %s22, 0
        %s1600 = smul.addr %s1599, 8
        %s1601 = scalar_lea.vmem %s3, %s1600
      $region52: #{av_loss.1} parent=31 // pred_fallthru
        _
      // Predicated region
      $region53: #{av_loss.1} parent=31 // pred_check
        %p1602 = pneg %p170
      $region54: #{av_loss.1} parent=31 // pred_check_branch
        %1604 = sbr.rel (%p1602) target = $region56
      $region55: #{av_loss.1} parent=31 // pred_region
        %p1605 = scmp.lt.s32.totalorder %s22, 0
        %s1606 = scalar_select %p1605, %s22, 0
        %s1607 = smul.addr %s1606, 8
        %s1608 = scalar_lea.vmem %s4, %s1607
      $region56: #{av_loss.1} parent=31 // pred_fallthru
        _
      // Predicated region
      $region57: #{av_loss.1} parent=31 // pred_check
        %p1609 = pneg %p196
      $region58: #{av_loss.1} parent=31 // pred_check_branch
        %1611 = sbr.rel (%p1609) target = $region60
      $region59: #{av_loss.1} parent=31 // pred_region
        %p1612 = scmp.lt.s32.totalorder %s22, 0
        %s1613 = scalar_select %p1612, %s22, 0
        %s1614 = smul.addr %s1613, 8
        %s1615 = scalar_lea.vmem %s5, %s1614
      $region60: #{av_loss.1} parent=31 // pred_fallthru
        _
    $region32: #{av_loss.1} parent=5 // pred_fallthru
      _
    %p1616 = scmp.le.s32.totalorder 2, %s12
    // Predicated region
    $region61: #{av_loss.1} parent=5 // pred_check
      %p1617 = pneg %p1616
    $region62: #{av_loss.1} parent=5 // pred_check_branch
      %1619 = sbr.rel (%p1617) target = $region64
    $region63: #{av_loss.1} parent=5 // pred_region
      %s1620 = ssub.s32 %s12, 2
    $region64: #{av_loss.1} parent=5 // pred_fallthru
      _
  $region6: #{av_loss.1} parent=0 // loop_footer
    %s16 = sadd.s32 1, %s12
  $region7: #{av_loss.1} parent=0 // loop_footer_branch
    %11 = sbr.rel target = $region3
  $region8: #{av_loss.1} parent=0 // loop_exit
    _

</llo_original>
